<compile_context>
chip_gen: v7x
topology: tpu7x:2x2x1
jax: 0.10.0
libtpu: 0.0.40
codegen_flags: <defaults>
</compile_context>

<pallas_src>
import functools

import jax
import jax.numpy as jnp
from jax.experimental import pallas as pl
from jax.experimental.pallas import tpu as pltpu

K = 32 * 32 * 3          # = 3072, input feature dim (from x.view(-1, k))
CASE = 4                 # activation case: 4 -> ReLU (see `activate` in spec)


def _round_up(n, m):
    return ((n + m - 1) // m) * m


def _activate(h, case):
    # Mirrors the reference `activate` (static selection; `case` is Python int).
    if case == 2:
        return h
    if case in (3, 31):
        return jnp.tanh(h)
    if case in (4, 41):
        return jnp.maximum(h, 0.0)
    if case == 5:
        return jax.nn.softplus(h)
    if case == 6:
        return jax.nn.elu(h)
    if case == 7:
        return h * h
    raise ValueError(f"unsupported case {case}")


def mlp_kernel(x_ref, w1_ref, w3_ref, w4_ref, w5_ref, w2_ref, o_ref, *, case):
    # x_ref:  [TM, K]   bf16 (one batch tile)
    # w1_ref: [K, W]    bf16 (fc1.weight.T)
    # w3_ref, w4_ref, w5_ref: [W, W] bf16 (fc3/fc4/fc5 weight.T)
    # w2_ref: [1, W]    bf16 (fc2.weight row)
    # o_ref:  [1, 1, TM] f32 (lane-dense output tile)
    #
    # bf16 operands into the MXU with explicit f32 accumulation; activations in
    # f32, cast back to bf16 between layers so every matmul runs at bf16 rate.
    h = jnp.dot(x_ref[...], w1_ref[...], preferred_element_type=jnp.float32)
    h = _activate(h, case).astype(jnp.bfloat16)
    h = jnp.dot(h, w3_ref[...], preferred_element_type=jnp.float32)
    h = _activate(h, case).astype(jnp.bfloat16)
    h = jnp.dot(h, w4_ref[...], preferred_element_type=jnp.float32)
    h = _activate(h, case).astype(jnp.bfloat16)
    h = jnp.dot(h, w5_ref[...], preferred_element_type=jnp.float32)
    h = _activate(h, case)                                  # keep f32, [TM, W]

    # fc2 (width -> 1): an N=1 MXU matmul wastes a full systolic pass and uses
    # a lane-sparse [W, 1] operand.  Do it on the VPU (multiply) + XLU (lane
    # reduction) instead; those slots are otherwise idle here.
    y = jnp.sum(h * w2_ref[...].astype(jnp.float32), axis=-1)   # [TM] f32
    o_ref[...] = y.reshape(1, 1, -1)                            # lane-dense store


def net_forward(x_nchw, params, *, case=CASE, tm=None):
    """Forward pass of `Net`.  x_nchw: [B, 3, 32, 32]."""
    b = x_nchw.shape[0]
    w1t, w3t, w4t, w5t, w2r = params
    width = w1t.shape[1]

    # Batch tile: a full MXU tile (256 covers v6e/v7x; also fine on v5e's
    # 128-wide MXU).  For tiny batches fall back to 128 so we don't over-pad,
    # while keeping sublanes full and the output lane-dense.
    if tm is None:
        tm = min(256, _round_up(max(b, 1), 128))
    b_pad = _round_up(b, tm)
    g = b_pad // tm

    # Flatten (same as torch .view(-1, k)), cast to bf16, zero-pad the batch.
    x = x_nchw.reshape(b, K).astype(jnp.bfloat16)
    if b_pad != b:
        x = jnp.pad(x, ((0, b_pad - b), (0, 0)))

    kernel = functools.partial(mlp_kernel, case=case)

    flops = 2 * b_pad * (K * width + 3 * width * width + width)
    bytes_accessed = (
        b_pad * K * 2                                   # x (bf16)
        + (K * width + 3 * width * width + width) * 2   # weights (bf16)
        + b_pad * 4                                     # output (f32)
    )

    out = pl.pallas_call(
        kernel,
        out_shape=jax.ShapeDtypeStruct((g, 1, tm), jnp.float32),
        grid_spec=pltpu.PrefetchScalarGridSpec(
            num_scalar_prefetch=0,
            grid=(g,),
            in_specs=[
                # x tile marches over the batch; weights stay resident.
                pl.BlockSpec((tm, K), lambda i: (i, 0)),
                pl.BlockSpec((K, width), lambda i: (0, 0)),
                pl.BlockSpec((width, width), lambda i: (0, 0)),
                pl.BlockSpec((width, width), lambda i: (0, 0)),
                pl.BlockSpec((width, width), lambda i: (0, 0)),
                pl.BlockSpec((1, width), lambda i: (0, 0)),
            ],
            out_specs=pl.BlockSpec((1, 1, tm), lambda i: (i, 0, 0)),
        ),
        compiler_params=pltpu.CompilerParams(
            dimension_semantics=("parallel",),      # megacore sharding on v7x
            vmem_limit_bytes=32 * 1024 * 1024,
        ),
        cost_estimate=pl.CostEstimate(
            flops=flops, transcendentals=0, bytes_accessed=bytes_accessed),
    )(x, w1t, w3t, w4t, w5t, w2r)

    # [g, 1, tm] -> [b_pad] -> [b, 1]  (strip batch padding in the wrapper)
    return out.reshape(b_pad)[:b].reshape(b, 1)


def init_params(key, width):
    """Deterministic init matching nn.Linear(bias=False) default:
    U(-1/sqrt(fan_in), 1/sqrt(fan_in)).  Stored bf16, pre-transposed [in, out];
    fc2 is stored as a [1, width] row (used as a VPU reduction, not a matmul)."""
    k1, k3, k4, k5, k2 = jax.random.split(key, 5)

    def lin(k, fan_in, fan_out):
        bound = 1.0 / jnp.sqrt(jnp.float32(fan_in))
        # torch stores weight as [out, in]; sample that layout.
        return jax.random.uniform(k, (fan_out, fan_in), jnp.float32, -bound, bound)

    w1t = lin(k1, K, width).T.astype(jnp.bfloat16)        # [K, W]
    w3t = lin(k3, width, width).T.astype(jnp.bfloat16)    # [W, W]
    w4t = lin(k4, width, width).T.astype(jnp.bfloat16)    # [W, W]
    w5t = lin(k5, width, width).T.astype(jnp.bfloat16)    # [W, W]
    w2r = lin(k2, width, 1).astype(jnp.bfloat16)          # [1, W] (fc2 row)
    return (w1t, w3t, w4t, w5t, w2r)


def reference_forward(x_nchw, params, *, case=CASE):
    """Pure-JAX reference with the same dtypes as the kernel
    (bf16 matmul operands, f32 accumulation)."""
    b = x_nchw.shape[0]
    h = x_nchw.reshape(b, K).astype(jnp.bfloat16)
    w1t, w3t, w4t, w5t, w2r = params
    h = _activate(jnp.dot(h, w1t, preferred_element_type=jnp.float32), case)
    h = _activate(jnp.dot(h.astype(jnp.bfloat16), w3t,
                          preferred_element_type=jnp.float32), case)
    h = _activate(jnp.dot(h.astype(jnp.bfloat16), w4t,
                          preferred_element_type=jnp.float32), case)
    h = _activate(jnp.dot(h.astype(jnp.bfloat16), w5t,
                          preferred_element_type=jnp.float32), case)
    return jnp.sum(h * w2r.astype(jnp.float32), axis=-1, keepdims=True)


if __name__ == "__main__":
    key = jax.random.PRNGKey(0)
    k_x, k_p = jax.random.split(key)

    batch = 2
    width = 128  # `Net(width)` hidden width

    x = jax.random.normal(k_x, (batch, 3, 32, 32), jnp.float32)
    params = init_params(k_p, width)

    out = net_forward(x, params)
    out = jax.block_until_ready(out)

    ref = reference_forward(x, params)
    assert out.shape == (batch, 1), out.shape
    assert jnp.allclose(out, ref, atol=1e-2, rtol=1e-2), (out, ref)

    print("KERNEL_OK")
</pallas_src>

<mosaic_0001>
module attributes {stable_mosaic.version = 11 : i64} {
  func.func @mlp_kernel(%arg0: i32, %arg1: memref<128x3072xbf16, #tpu.memory_space<vmem>>, %arg2: memref<3072x128xbf16, #tpu.memory_space<vmem>>, %arg3: memref<128x128xbf16, #tpu.memory_space<vmem>>, %arg4: memref<128x128xbf16, #tpu.memory_space<vmem>>, %arg5: memref<128x128xbf16, #tpu.memory_space<vmem>>, %arg6: memref<1x128xbf16, #tpu.memory_space<vmem>>, %arg7: memref<1x1x128xf32, #tpu.memory_space<vmem>>) attributes {dimension_semantics = [#tpu.dimension_semantics<parallel>], iteration_bounds = array<i64: 1>, scalar_prefetch = 0 : i64, scratch_operands = 0 : i64, tpu.core_type = #tpu.core_type<tc>, window_params = [{transform_indices = @transform_0, window_bounds = array<i64: 128, 3072>}, {pipeline_mode = #tpu.pipeline_mode<synchronous>, transform_indices = @transform_1, window_bounds = array<i64: 3072, 128>}, {pipeline_mode = #tpu.pipeline_mode<synchronous>, transform_indices = @transform_2, window_bounds = array<i64: 128, 128>}, {pipeline_mode = #tpu.pipeline_mode<synchronous>, transform_indices = @transform_3, window_bounds = array<i64: 128, 128>}, {pipeline_mode = #tpu.pipeline_mode<synchronous>, transform_indices = @transform_4, window_bounds = array<i64: 128, 128>}, {pipeline_mode = #tpu.pipeline_mode<synchronous>, transform_indices = @transform_5, window_bounds = array<i64: 1, 128>}, {transform_indices = @transform_6, window_bounds = array<i64: 1, 1, 128>}]} {
    %c0 = arith.constant 0 : index
    %c0_0 = arith.constant 0 : index
    %0 = vector.load %arg1[%c0, %c0_0] : memref<128x3072xbf16, #tpu.memory_space<vmem>>, vector<128x3072xbf16>
    %c0_1 = arith.constant 0 : index
    %c0_2 = arith.constant 0 : index
    %1 = vector.load %arg2[%c0_1, %c0_2] : memref<3072x128xbf16, #tpu.memory_space<vmem>>, vector<3072x128xbf16>
    %cst = arith.constant dense<0.000000e+00> : vector<128x128xf32>
    %2 = tpu.matmul %0, %1, %cst {dimension_numbers = #tpu.dot_dimension_numbers<[1], [0], [0], [1], [0, 0, 1, 1], [], []>} : vector<128x3072xbf16>, vector<3072x128xbf16>, vector<128x128xf32> -> vector<128x128xf32>
    %cst_3 = arith.constant 0.000000e+00 : f32
    %3 = vector.broadcast %cst_3 : f32 to vector<128x128xf32>
    %4 = arith.maximumf %2, %3 : vector<128x128xf32>
    %5 = arith.truncf %4 : vector<128x128xf32> to vector<128x128xbf16>
    %c0_4 = arith.constant 0 : index
    %c0_5 = arith.constant 0 : index
    %6 = vector.load %arg3[%c0_4, %c0_5] : memref<128x128xbf16, #tpu.memory_space<vmem>>, vector<128x128xbf16>
    %cst_6 = arith.constant dense<0.000000e+00> : vector<128x128xf32>
    %7 = tpu.matmul %5, %6, %cst_6 {dimension_numbers = #tpu.dot_dimension_numbers<[1], [0], [0], [1], [0, 0, 1, 1], [], []>} : vector<128x128xbf16>, vector<128x128xbf16>, vector<128x128xf32> -> vector<128x128xf32>
    %cst_7 = arith.constant 0.000000e+00 : f32
    %8 = vector.broadcast %cst_7 : f32 to vector<128x128xf32>
    %9 = arith.maximumf %7, %8 : vector<128x128xf32>
    %10 = arith.truncf %9 : vector<128x128xf32> to vector<128x128xbf16>
    %c0_8 = arith.constant 0 : index
    %c0_9 = arith.constant 0 : index
    %11 = vector.load %arg4[%c0_8, %c0_9] : memref<128x128xbf16, #tpu.memory_space<vmem>>, vector<128x128xbf16>
    %cst_10 = arith.constant dense<0.000000e+00> : vector<128x128xf32>
    %12 = tpu.matmul %10, %11, %cst_10 {dimension_numbers = #tpu.dot_dimension_numbers<[1], [0], [0], [1], [0, 0, 1, 1], [], []>} : vector<128x128xbf16>, vector<128x128xbf16>, vector<128x128xf32> -> vector<128x128xf32>
    %cst_11 = arith.constant 0.000000e+00 : f32
    %13 = vector.broadcast %cst_11 : f32 to vector<128x128xf32>
    %14 = arith.maximumf %12, %13 : vector<128x128xf32>
    %15 = arith.truncf %14 : vector<128x128xf32> to vector<128x128xbf16>
    %c0_12 = arith.constant 0 : index
    %c0_13 = arith.constant 0 : index
    %16 = vector.load %arg5[%c0_12, %c0_13] : memref<128x128xbf16, #tpu.memory_space<vmem>>, vector<128x128xbf16>
    %cst_14 = arith.constant dense<0.000000e+00> : vector<128x128xf32>
    %17 = tpu.matmul %15, %16, %cst_14 {dimension_numbers = #tpu.dot_dimension_numbers<[1], [0], [0], [1], [0, 0, 1, 1], [], []>} : vector<128x128xbf16>, vector<128x128xbf16>, vector<128x128xf32> -> vector<128x128xf32>
    %cst_15 = arith.constant 0.000000e+00 : f32
    %18 = vector.broadcast %cst_15 : f32 to vector<128x128xf32>
    %19 = arith.maximumf %17, %18 : vector<128x128xf32>
    %c0_16 = arith.constant 0 : index
    %c0_17 = arith.constant 0 : index
    %20 = vector.load %arg6[%c0_16, %c0_17] : memref<1x128xbf16, #tpu.memory_space<vmem>>, vector<1x128xbf16>
    %21 = arith.extf %20 : vector<1x128xbf16> to vector<1x128xf32>
    %22 = vector.broadcast %21 : vector<1x128xf32> to vector<128x128xf32>
    %23 = arith.mulf %19, %22 : vector<128x128xf32>
    %cst_18 = arith.constant dense<0.000000e+00> : vector<128xf32>
    %24 = vector.multi_reduction <add>, %23, %cst_18 [1] : vector<128x128xf32> to vector<128xf32>
    %25 = vector.shape_cast %24 : vector<128xf32> to vector<1x1x128xf32>
    %c0_19 = arith.constant 0 : index
    %c0_20 = arith.constant 0 : index
    %c0_21 = arith.constant 0 : index
    %26 = vector.load %arg7[%c0_19, %c0_20, %c0_21] : memref<1x1x128xf32, #tpu.memory_space<vmem>>, vector<1x1x128xf32>
    tpu.vector_store %arg7[%c0_19, %c0_20, %c0_21], %25 {strides = array<i32>} : memref<1x1x128xf32, #tpu.memory_space<vmem>>, vector<1x1x128xf32>,
    return
  }
  func.func @transform_0(%arg0: i32) -> (i32, i32) {
    %c0_i32 = arith.constant 0 : i32
    %c0_i32_0 = arith.constant 0 : i32
    return %arg0, %c0_i32 : i32, i32
  }
  func.func @transform_1(%arg0: i32) -> (i32, i32) {
    %c0_i32 = arith.constant 0 : i32
    %c0_i32_0 = arith.constant 0 : i32
    %c0_i32_1 = arith.constant 0 : i32
    return %c0_i32, %c0_i32_0 : i32, i32
  }
  func.func @transform_2(%arg0: i32) -> (i32, i32) {
    %c0_i32 = arith.constant 0 : i32
    %c0_i32_0 = arith.constant 0 : i32
    %c0_i32_1 = arith.constant 0 : i32
    return %c0_i32, %c0_i32_0 : i32, i32
  }
  func.func @transform_3(%arg0: i32) -> (i32, i32) {
    %c0_i32 = arith.constant 0 : i32
    %c0_i32_0 = arith.constant 0 : i32
    %c0_i32_1 = arith.constant 0 : i32
    return %c0_i32, %c0_i32_0 : i32, i32
  }
  func.func @transform_4(%arg0: i32) -> (i32, i32) {
    %c0_i32 = arith.constant 0 : i32
    %c0_i32_0 = arith.constant 0 : i32
    %c0_i32_1 = arith.constant 0 : i32
    return %c0_i32, %c0_i32_0 : i32, i32
  }
  func.func @transform_5(%arg0: i32) -> (i32, i32) {
    %c0_i32 = arith.constant 0 : i32
    %c0_i32_0 = arith.constant 0 : i32
    %c0_i32_1 = arith.constant 0 : i32
    return %c0_i32, %c0_i32_0 : i32, i32
  }
  func.func @transform_6(%arg0: i32) -> (i32, i32, i32) {
    %c0_i32 = arith.constant 0 : i32
    %c0_i32_0 = arith.constant 0 : i32
    %c0_i32_1 = arith.constant 0 : i32
    return %arg0, %c0_i32, %c0_i32_0 : i32, i32, i32
  }
}

</mosaic_0001>

<llo_original>
// kernel: tpu_custom_call.1
$region0: #{tpu_custom_call.1}
  #allocation0 [shape = 'u32[]', space=smem, size = 0x4, offset = 0x4, fixed_abs, tag = 'smem constant byte address 0x4 - core index']
  #allocation1 [shape = 'u32[144,128]{1,0:T(1,128)}', space=vmem, size = 0x12000, scoped, tag = 'internal scratch']
  %s0 = inlined_call_operand.hbm [shape: bf16[128,3072], index: 0, kind: input, shape index: {}]
  %s1 = inlined_call_operand.hbm [shape: bf16[3072,128], index: 1, kind: input, shape index: {}]
  %s2 = inlined_call_operand.hbm [shape: bf16[128,128], index: 2, kind: input, shape index: {}]
  %s3 = inlined_call_operand.hbm [shape: bf16[128,128], index: 3, kind: input, shape index: {}]
  %s4 = inlined_call_operand.hbm [shape: bf16[128,128], index: 4, kind: input, shape index: {}]
  %s5 = inlined_call_operand.vmem [shape: bf16[1,128], index: 5, kind: input, shape index: {}]
  %s6 = inlined_call_operand.hbm [shape: f32[1,1,128], index: 6, kind: output, shape index: {}]
  %s7 = sld [smem:[#allocation0]]
  $region54: #{tpu_custom_call.1} parent=0
    _
  %s9 = ssub.s32 1, %s7
  %s10 = scalar_select 0, %s9, %s7
  $region1: #{tpu_custom_call.1} parent=0
    #allocation2 [shape = 'u8[786432]{0}', space=vmem, size = 0xc0000, scoped, tag = 'input window, operand 0, single buffered']
    #allocation3 [shape = 's32[1]{0}', space=sflag, size = 0x4, scoped, tag = 'scoped memory for tpu_custom_call.1']
    #allocation4 [shape = 's32[1]{0}', space=sflag, size = 0x4, scoped, tag = 'scoped memory for tpu_custom_call.1']
    #allocation5 [shape = 'u8[786432]{0}', space=vmem, size = 0xc0000, scoped, tag = 'input window, operand 1, single buffered']
    #allocation6 [shape = 's32[1]{0}', space=sflag, size = 0x4, scoped, tag = 'scoped memory for tpu_custom_call.1']
    #allocation7 [shape = 'u8[32768]{0}', space=vmem, size = 0x8000, scoped, tag = 'input window, operand 2, single buffered']
    #allocation8 [shape = 'u8[32768]{0}', space=vmem, size = 0x8000, scoped, tag = 'input window, operand 3, single buffered']
    #allocation9 [shape = 's32[1]{0}', space=sflag, size = 0x4, scoped, tag = 'scoped memory for tpu_custom_call.1']
    #allocation10 [shape = 'u8[32768]{0}', space=vmem, size = 0x8000, scoped, tag = 'input window, operand 4, single buffered']
    #allocation11 [shape = 'u8[512]{0}', space=vmem, size = 0x400, scoped, tag = 'output window, operand 0, single buffered']
    %11 = vsyncpa [#allocation3], 0
    %12 = vsyncpa [#allocation6], 0
    %13 = vsyncpa [#allocation9], 0
    %14 = vsyncpa [#allocation4], 0
    // Predicated region
    $region2: #{tpu_custom_call.1} parent=1 // pred_check
      _
    $region3: #{tpu_custom_call.1} parent=1 // pred_check_branch
      %16 = sbr.rel (0) target = $region5
    $region4: #{tpu_custom_call.1} parent=1 // pred_region
      %s18 = ssub.s32 24576, 24576
      %19 = vsyncadd [#allocation3], %s18
      %s20 = sshll.u32 [#allocation2], 4
      %s21 = int_to_ptr.vmem [resolvable:$true] %s20
      %26 = dma.hbm_to_vmem [thread:$0]  %s0, 24576, %s21, [#allocation3], 1536, 1536, 96
    $region5: #{tpu_custom_call.1} parent=1 // pred_fallthru
      _
    // Predicated region
    $region6: #{tpu_custom_call.1} parent=1 // pred_check
      _
    $region7: #{tpu_custom_call.1} parent=1 // pred_check_branch
      %28 = sbr.rel (0) target = $region9
    $region8: #{tpu_custom_call.1} parent=1 // pred_region
      %s30 = ssub.s32 24576, 24576
      %31 = vsyncadd [#allocation6], %s30
      %s32 = sshll.u32 [#allocation5], 4
      %s33 = int_to_ptr.vmem [resolvable:$true] %s32
      %38 = dma.hbm_to_vmem [thread:$0]  %s1, 24576, %s33, [#allocation6], 64, 64, 4
    $region9: #{tpu_custom_call.1} parent=1 // pred_fallthru
      _
    // Predicated region
    $region10: #{tpu_custom_call.1} parent=1 // pred_check
      _
    $region11: #{tpu_custom_call.1} parent=1 // pred_check_branch
      %40 = sbr.rel (0) target = $region13
    $region12: #{tpu_custom_call.1} parent=1 // pred_region
      %s42 = ssub.s32 1024, 1024
      %43 = vsyncadd [#allocation6], %s42
      %s44 = sshll.u32 [#allocation7], 4
      %s45 = int_to_ptr.vmem [resolvable:$true] %s44
      %50 = dma.hbm_to_vmem [thread:$0]  %s2, 1024, %s45, [#allocation6], 64, 64, 4
    $region13: #{tpu_custom_call.1} parent=1 // pred_fallthru
      _
    // Predicated region
    $region14: #{tpu_custom_call.1} parent=1 // pred_check
      _
    $region15: #{tpu_custom_call.1} parent=1 // pred_check_branch
      %52 = sbr.rel (0) target = $region17
    $region16: #{tpu_custom_call.1} parent=1 // pred_region
      %s54 = ssub.s32 1024, 1024
      %55 = vsyncadd [#allocation9], %s54
      %s56 = sshll.u32 [#allocation8], 4
      %s57 = int_to_ptr.vmem [resolvable:$true] %s56
      %62 = dma.hbm_to_vmem [thread:$0]  %s3, 1024, %s57, [#allocation9], 64, 64, 4
    $region17: #{tpu_custom_call.1} parent=1 // pred_fallthru
      _
    // Predicated region
    $region18: #{tpu_custom_call.1} parent=1 // pred_check
      _
    $region19: #{tpu_custom_call.1} parent=1 // pred_check_branch
      %64 = sbr.rel (0) target = $region21
    $region20: #{tpu_custom_call.1} parent=1 // pred_region
      %s66 = ssub.s32 1024, 1024
      %67 = vsyncadd [#allocation9], %s66
      %s68 = sshll.u32 [#allocation10], 4
      %s69 = int_to_ptr.vmem [resolvable:$true] %s68
      %74 = dma.hbm_to_vmem [thread:$0]  %s4, 1024, %s69, [#allocation9], 64, 64, 4
    $region21: #{tpu_custom_call.1} parent=1 // pred_fallthru
      _
    // Predicated region
    $region22: #{tpu_custom_call.1} parent=1 // pred_check
      _
    $region23: #{tpu_custom_call.1} parent=1 // pred_check_branch
      %76 = sbr.rel (0) target = $region25
    $region24: #{tpu_custom_call.1} parent=1 // pred_region
      _
    $region25: #{tpu_custom_call.1} parent=1 // pred_fallthru
      _
    // Predicated region
    $region26: #{tpu_custom_call.1} parent=1 // pred_check
      _
    $region27: #{tpu_custom_call.1} parent=1 // pred_check_branch
      %78 = sbr.rel (0) target = $region29
    $region28: #{tpu_custom_call.1} parent=1 // pred_region
      %79 = dma.done [#allocation3], 24576
    $region29: #{tpu_custom_call.1} parent=1 // pred_fallthru
      _
    // Predicated region
    $region30: #{tpu_custom_call.1} parent=1 // pred_check
      _
    $region31: #{tpu_custom_call.1} parent=1 // pred_check_branch
      %81 = sbr.rel (0) target = $region33
    $region32: #{tpu_custom_call.1} parent=1 // pred_region
      %82 = dma.done [#allocation6], 24576
    $region33: #{tpu_custom_call.1} parent=1 // pred_fallthru
      _
    // Predicated region
    $region34: #{tpu_custom_call.1} parent=1 // pred_check
      _
    $region35: #{tpu_custom_call.1} parent=1 // pred_check_branch
      %84 = sbr.rel (0) target = $region37
    $region36: #{tpu_custom_call.1} parent=1 // pred_region
      %85 = dma.done [#allocation6], 1024
    $region37: #{tpu_custom_call.1} parent=1 // pred_fallthru
      _
    // Predicated region
    $region38: #{tpu_custom_call.1} parent=1 // pred_check
      _
    $region39: #{tpu_custom_call.1} parent=1 // pred_check_branch
      %87 = sbr.rel (0) target = $region41
    $region40: #{tpu_custom_call.1} parent=1 // pred_region
      %88 = dma.done [#allocation9], 1024
    $region41: #{tpu_custom_call.1} parent=1 // pred_fallthru
      _
    // Predicated region
    $region42: #{tpu_custom_call.1} parent=1 // pred_check
      _
    $region43: #{tpu_custom_call.1} parent=1 // pred_check_branch
      %90 = sbr.rel (0) target = $region45
    $region44: #{tpu_custom_call.1} parent=1 // pred_region
      %91 = dma.done [#allocation9], 1024
    $region45: #{tpu_custom_call.1} parent=1 // pred_fallthru
      _
    %v93 = vld [vmem:[#allocation2] sm:$0xff]
    %v94 = vld [vmem:[#allocation2 + $0x8] sm:$0xff]
    %v95 = vld [vmem:[#allocation2 + $0x10] sm:$0xff]
    %v96 = vld [vmem:[#allocation2 + $0x18] sm:$0xff]
    %v97 = vld [vmem:[#allocation2 + $0x20] sm:$0xff]
    %v98 = vld [vmem:[#allocation2 + $0x28] sm:$0xff]
    %v99 = vld [vmem:[#allocation2 + $0x30] sm:$0xff]
    %v100 = vld [vmem:[#allocation2 + $0x38] sm:$0xff]
    %v101 = vld [vmem:[#allocation2 + $0x40] sm:$0xff]
    %v102 = vld [vmem:[#allocation2 + $0x48] sm:$0xff]
    %v103 = vld [vmem:[#allocation2 + $0x50] sm:$0xff]
    %v104 = vld [vmem:[#allocation2 + $0x58] sm:$0xff]
    %v105 = vld [vmem:[#allocation2 + $0x60] sm:$0xff]
    %v106 = vld [vmem:[#allocation2 + $0x68] sm:$0xff]
    %v107 = vld [vmem:[#allocation2 + $0x70] sm:$0xff]
    %v108 = vld [vmem:[#allocation2 + $0x78] sm:$0xff]
    %v109 = vld [vmem:[#allocation2 + $0x80] sm:$0xff]
    %v110 = vld [vmem:[#allocation2 + $0x88] sm:$0xff]
    %v111 = vld [vmem:[#allocation2 + $0x90] sm:$0xff]
    %v112 = vld [vmem:[#allocation2 + $0x98] sm:$0xff]
    %v113 = vld [vmem:[#allocation2 + $0xa0] sm:$0xff]
    %v114 = vld [vmem:[#allocation2 + $0xa8] sm:$0xff]
    %v115 = vld [vmem:[#allocation2 + $0xb0] sm:$0xff]
    %v116 = vld [vmem:[#allocation2 + $0xb8] sm:$0xff]
    %v117 = vld [vmem:[#allocation2 + $0xc0] sm:$0xff]
    %v118 = vld [vmem:[#allocation2 + $0xc8] sm:$0xff]
    %v119 = vld [vmem:[#allocation2 + $0xd0] sm:$0xff]
    %v120 = vld [vmem:[#allocation2 + $0xd8] sm:$0xff]
    %v121 = vld [vmem:[#allocation2 + $0xe0] sm:$0xff]
    %v122 = vld [vmem:[#allocation2 + $0xe8] sm:$0xff]
    %v123 = vld [vmem:[#allocation2 + $0xf0] sm:$0xff]
    %v124 = vld [vmem:[#allocation2 + $0xf8] sm:$0xff]
    %v125 = vld [vmem:[#allocation2 + $0x100] sm:$0xff]
    %v126 = vld [vmem:[#allocation2 + $0x108] sm:$0xff]
    %v127 = vld [vmem:[#allocation2 + $0x110] sm:$0xff]
    %v128 = vld [vmem:[#allocation2 + $0x118] sm:$0xff]
    %v129 = vld [vmem:[#allocation2 + $0x120] sm:$0xff]
    %v130 = vld [vmem:[#allocation2 + $0x128] sm:$0xff]
    %v131 = vld [vmem:[#allocation2 + $0x130] sm:$0xff]
    %v132 = vld [vmem:[#allocation2 + $0x138] sm:$0xff]
    %v133 = vld [vmem:[#allocation2 + $0x140] sm:$0xff]
    %v134 = vld [vmem:[#allocation2 + $0x148] sm:$0xff]
    %v135 = vld [vmem:[#allocation2 + $0x150] sm:$0xff]
    %v136 = vld [vmem:[#allocation2 + $0x158] sm:$0xff]
    %v137 = vld [vmem:[#allocation2 + $0x160] sm:$0xff]
    %v138 = vld [vmem:[#allocation2 + $0x168] sm:$0xff]
    %v139 = vld [vmem:[#allocation2 + $0x170] sm:$0xff]
    %v140 = vld [vmem:[#allocation2 + $0x178] sm:$0xff]
    %v141 = vld [vmem:[#allocation2 + $0x180] sm:$0xff]
    %v142 = vld [vmem:[#allocation2 + $0x188] sm:$0xff]
    %v143 = vld [vmem:[#allocation2 + $0x190] sm:$0xff]
    %v144 = vld [vmem:[#allocation2 + $0x198] sm:$0xff]
    %v145 = vld [vmem:[#allocation2 + $0x1a0] sm:$0xff]
    %v146 = vld [vmem:[#allocation2 + $0x1a8] sm:$0xff]
    %v147 = vld [vmem:[#allocation2 + $0x1b0] sm:$0xff]
    %v148 = vld [vmem:[#allocation2 + $0x1b8] sm:$0xff]
    %v149 = vld [vmem:[#allocation2 + $0x1c0] sm:$0xff]
    %v150 = vld [vmem:[#allocation2 + $0x1c8] sm:$0xff]
    %v151 = vld [vmem:[#allocation2 + $0x1d0] sm:$0xff]
    %v152 = vld [vmem:[#allocation2 + $0x1d8] sm:$0xff]
    %v153 = vld [vmem:[#allocation2 + $0x1e0] sm:$0xff]
    %v154 = vld [vmem:[#allocation2 + $0x1e8] sm:$0xff]
    %v155 = vld [vmem:[#allocation2 + $0x1f0] sm:$0xff]
    %v156 = vld [vmem:[#allocation2 + $0x1f8] sm:$0xff]
    %v157 = vld [vmem:[#allocation2 + $0x200] sm:$0xff]
    %v158 = vld [vmem:[#allocation2 + $0x208] sm:$0xff]
    %v159 = vld [vmem:[#allocation2 + $0x210] sm:$0xff]
    %v160 = vld [vmem:[#allocation2 + $0x218] sm:$0xff]
    %v161 = vld [vmem:[#allocation2 + $0x220] sm:$0xff]
    %v162 = vld [vmem:[#allocation2 + $0x228] sm:$0xff]
    %v163 = vld [vmem:[#allocation2 + $0x230] sm:$0xff]
    %v164 = vld [vmem:[#allocation2 + $0x238] sm:$0xff]
    %v165 = vld [vmem:[#allocation2 + $0x240] sm:$0xff]
    %v166 = vld [vmem:[#allocation2 + $0x248] sm:$0xff]
    %v167 = vld [vmem:[#allocation2 + $0x250] sm:$0xff]
    %v168 = vld [vmem:[#allocation2 + $0x258] sm:$0xff]
    %v169 = vld [vmem:[#allocation2 + $0x260] sm:$0xff]
    %v170 = vld [vmem:[#allocation2 + $0x268] sm:$0xff]
    %v171 = vld [vmem:[#allocation2 + $0x270] sm:$0xff]
    %v172 = vld [vmem:[#allocation2 + $0x278] sm:$0xff]
    %v173 = vld [vmem:[#allocation2 + $0x280] sm:$0xff]
    %v174 = vld [vmem:[#allocation2 + $0x288] sm:$0xff]
    %v175 = vld [vmem:[#allocation2 + $0x290] sm:$0xff]
    %v176 = vld [vmem:[#allocation2 + $0x298] sm:$0xff]
    %v177 = vld [vmem:[#allocation2 + $0x2a0] sm:$0xff]
    %v178 = vld [vmem:[#allocation2 + $0x2a8] sm:$0xff]
    %v179 = vld [vmem:[#allocation2 + $0x2b0] sm:$0xff]
    %v180 = vld [vmem:[#allocation2 + $0x2b8] sm:$0xff]
    %v181 = vld [vmem:[#allocation2 + $0x2c0] sm:$0xff]
    %v182 = vld [vmem:[#allocation2 + $0x2c8] sm:$0xff]
    %v183 = vld [vmem:[#allocation2 + $0x2d0] sm:$0xff]
    %v184 = vld [vmem:[#allocation2 + $0x2d8] sm:$0xff]
    %v185 = vld [vmem:[#allocation2 + $0x2e0] sm:$0xff]
    %v186 = vld [vmem:[#allocation2 + $0x2e8] sm:$0xff]
    %v187 = vld [vmem:[#allocation2 + $0x2f0] sm:$0xff]
    %v188 = vld [vmem:[#allocation2 + $0x2f8] sm:$0xff]
    %v189 = vld [vmem:[#allocation2 + $0x300] sm:$0xff]
    %v190 = vld [vmem:[#allocation2 + $0x308] sm:$0xff]
    %v191 = vld [vmem:[#allocation2 + $0x310] sm:$0xff]
    %v192 = vld [vmem:[#allocation2 + $0x318] sm:$0xff]
    %v193 = vld [vmem:[#allocation2 + $0x320] sm:$0xff]
    %v194 = vld [vmem:[#allocation2 + $0x328] sm:$0xff]
    %v195 = vld [vmem:[#allocation2 + $0x330] sm:$0xff]
    %v196 = vld [vmem:[#allocation2 + $0x338] sm:$0xff]
    %v197 = vld [vmem:[#allocation2 + $0x340] sm:$0xff]
    %v198 = vld [vmem:[#allocation2 + $0x348] sm:$0xff]
    %v199 = vld [vmem:[#allocation2 + $0x350] sm:$0xff]
    %v200 = vld [vmem:[#allocation2 + $0x358] sm:$0xff]
    %v201 = vld [vmem:[#allocation2 + $0x360] sm:$0xff]
    %v202 = vld [vmem:[#allocation2 + $0x368] sm:$0xff]
    %v203 = vld [vmem:[#allocation2 + $0x370] sm:$0xff]
    %v204 = vld [vmem:[#allocation2 + $0x378] sm:$0xff]
    %v205 = vld [vmem:[#allocation2 + $0x380] sm:$0xff]
    %v206 = vld [vmem:[#allocation2 + $0x388] sm:$0xff]
    %v207 = vld [vmem:[#allocation2 + $0x390] sm:$0xff]
    %v208 = vld [vmem:[#allocation2 + $0x398] sm:$0xff]
    %v209 = vld [vmem:[#allocation2 + $0x3a0] sm:$0xff]
    %v210 = vld [vmem:[#allocation2 + $0x3a8] sm:$0xff]
    %v211 = vld [vmem:[#allocation2 + $0x3b0] sm:$0xff]
    %v212 = vld [vmem:[#allocation2 + $0x3b8] sm:$0xff]
    %v213 = vld [vmem:[#allocation2 + $0x3c0] sm:$0xff]
    %v214 = vld [vmem:[#allocation2 + $0x3c8] sm:$0xff]
    %v215 = vld [vmem:[#allocation2 + $0x3d0] sm:$0xff]
    %v216 = vld [vmem:[#allocation2 + $0x3d8] sm:$0xff]
    %v217 = vld [vmem:[#allocation2 + $0x3e0] sm:$0xff]
    %v218 = vld [vmem:[#allocation2 + $0x3e8] sm:$0xff]
    %v219 = vld [vmem:[#allocation2 + $0x3f0] sm:$0xff]
    %v220 = vld [vmem:[#allocation2 + $0x3f8] sm:$0xff]
    %v221 = vld [vmem:[#allocation2 + $0x400] sm:$0xff]
    %v222 = vld [vmem:[#allocation2 + $0x408] sm:$0xff]
    %v223 = vld [vmem:[#allocation2 + $0x410] sm:$0xff]
    %v224 = vld [vmem:[#allocation2 + $0x418] sm:$0xff]
    %v225 = vld [vmem:[#allocation2 + $0x420] sm:$0xff]
    %v226 = vld [vmem:[#allocation2 + $0x428] sm:$0xff]
    %v227 = vld [vmem:[#allocation2 + $0x430] sm:$0xff]
    %v228 = vld [vmem:[#allocation2 + $0x438] sm:$0xff]
    %v229 = vld [vmem:[#allocation2 + $0x440] sm:$0xff]
    %v230 = vld [vmem:[#allocation2 + $0x448] sm:$0xff]
    %v231 = vld [vmem:[#allocation2 + $0x450] sm:$0xff]
    %v232 = vld [vmem:[#allocation2 + $0x458] sm:$0xff]
    %v233 = vld [vmem:[#allocation2 + $0x460] sm:$0xff]
    %v234 = vld [vmem:[#allocation2 + $0x468] sm:$0xff]
    %v235 = vld [vmem:[#allocation2 + $0x470] sm:$0xff]
    %v236 = vld [vmem:[#allocation2 + $0x478] sm:$0xff]
    %v237 = vld [vmem:[#allocation2 + $0x480] sm:$0xff]
    %v238 = vld [vmem:[#allocation2 + $0x488] sm:$0xff]
    %v239 = vld [vmem:[#allocation2 + $0x490] sm:$0xff]
    %v240 = vld [vmem:[#allocation2 + $0x498] sm:$0xff]
    %v241 = vld [vmem:[#allocation2 + $0x4a0] sm:$0xff]
    %v242 = vld [vmem:[#allocation2 + $0x4a8] sm:$0xff]
    %v243 = vld [vmem:[#allocation2 + $0x4b0] sm:$0xff]
    %v244 = vld [vmem:[#allocation2 + $0x4b8] sm:$0xff]
    %v245 = vld [vmem:[#allocation2 + $0x4c0] sm:$0xff]
    %v246 = vld [vmem:[#allocation2 + $0x4c8] sm:$0xff]
    %v247 = vld [vmem:[#allocation2 + $0x4d0] sm:$0xff]
    %v248 = vld [vmem:[#allocation2 + $0x4d8] sm:$0xff]
    %v249 = vld [vmem:[#allocation2 + $0x4e0] sm:$0xff]
    %v250 = vld [vmem:[#allocation2 + $0x4e8] sm:$0xff]
    %v251 = vld [vmem:[#allocation2 + $0x4f0] sm:$0xff]
    %v252 = vld [vmem:[#allocation2 + $0x4f8] sm:$0xff]
    %v253 = vld [vmem:[#allocation2 + $0x500] sm:$0xff]
    %v254 = vld [vmem:[#allocation2 + $0x508] sm:$0xff]
    %v255 = vld [vmem:[#allocation2 + $0x510] sm:$0xff]
    %v256 = vld [vmem:[#allocation2 + $0x518] sm:$0xff]
    %v257 = vld [vmem:[#allocation2 + $0x520] sm:$0xff]
    %v258 = vld [vmem:[#allocation2 + $0x528] sm:$0xff]
    %v259 = vld [vmem:[#allocation2 + $0x530] sm:$0xff]
    %v260 = vld [vmem:[#allocation2 + $0x538] sm:$0xff]
    %v261 = vld [vmem:[#allocation2 + $0x540] sm:$0xff]
    %v262 = vld [vmem:[#allocation2 + $0x548] sm:$0xff]
    %v263 = vld [vmem:[#allocation2 + $0x550] sm:$0xff]
    %v264 = vld [vmem:[#allocation2 + $0x558] sm:$0xff]
    %v265 = vld [vmem:[#allocation2 + $0x560] sm:$0xff]
    %v266 = vld [vmem:[#allocation2 + $0x568] sm:$0xff]
    %v267 = vld [vmem:[#allocation2 + $0x570] sm:$0xff]
    %v268 = vld [vmem:[#allocation2 + $0x578] sm:$0xff]
    %v269 = vld [vmem:[#allocation2 + $0x580] sm:$0xff]
    %v270 = vld [vmem:[#allocation2 + $0x588] sm:$0xff]
    %v271 = vld [vmem:[#allocation2 + $0x590] sm:$0xff]
    %v272 = vld [vmem:[#allocation2 + $0x598] sm:$0xff]
    %v273 = vld [vmem:[#allocation2 + $0x5a0] sm:$0xff]
    %v274 = vld [vmem:[#allocation2 + $0x5a8] sm:$0xff]
    %v275 = vld [vmem:[#allocation2 + $0x5b0] sm:$0xff]
    %v276 = vld [vmem:[#allocation2 + $0x5b8] sm:$0xff]
    %v277 = vld [vmem:[#allocation2 + $0x5c0] sm:$0xff]
    %v278 = vld [vmem:[#allocation2 + $0x5c8] sm:$0xff]
    %v279 = vld [vmem:[#allocation2 + $0x5d0] sm:$0xff]
    %v280 = vld [vmem:[#allocation2 + $0x5d8] sm:$0xff]
    %v281 = vld [vmem:[#allocation2 + $0x5e0] sm:$0xff]
    %v282 = vld [vmem:[#allocation2 + $0x5e8] sm:$0xff]
    %v283 = vld [vmem:[#allocation2 + $0x5f0] sm:$0xff]
    %v284 = vld [vmem:[#allocation2 + $0x5f8] sm:$0xff]
    %v285 = vld [vmem:[#allocation5] sm:$0xf]
    %v286 = vld [vmem:[#allocation5 + $0x4] sm:$0xf]
    %v287 = vld [vmem:[#allocation5 + $0x8] sm:$0xf]
    %v288 = vld [vmem:[#allocation5 + $0xc] sm:$0xf]
    %v289 = vld [vmem:[#allocation5 + $0x10] sm:$0xf]
    %v290 = vld [vmem:[#allocation5 + $0x14] sm:$0xf]
    %v291 = vld [vmem:[#allocation5 + $0x18] sm:$0xf]
    %v292 = vld [vmem:[#allocation5 + $0x1c] sm:$0xf]
    %v293 = vld [vmem:[#allocation5 + $0x20] sm:$0xf]
    %v294 = vld [vmem:[#allocation5 + $0x24] sm:$0xf]
    %v295 = vld [vmem:[#allocation5 + $0x28] sm:$0xf]
    %v296 = vld [vmem:[#allocation5 + $0x2c] sm:$0xf]
    %v297 = vld [vmem:[#allocation5 + $0x30] sm:$0xf]
    %v298 = vld [vmem:[#allocation5 + $0x34] sm:$0xf]
    %v299 = vld [vmem:[#allocation5 + $0x38] sm:$0xf]
    %v300 = vld [vmem:[#allocation5 + $0x3c] sm:$0xf]
    %v301 = vld [vmem:[#allocation5 + $0x40] sm:$0xf]
    %v302 = vld [vmem:[#allocation5 + $0x44] sm:$0xf]
    %v303 = vld [vmem:[#allocation5 + $0x48] sm:$0xf]
    %v304 = vld [vmem:[#allocation5 + $0x4c] sm:$0xf]
    %v305 = vld [vmem:[#allocation5 + $0x50] sm:$0xf]
    %v306 = vld [vmem:[#allocation5 + $0x54] sm:$0xf]
    %v307 = vld [vmem:[#allocation5 + $0x58] sm:$0xf]
    %v308 = vld [vmem:[#allocation5 + $0x5c] sm:$0xf]
    %v309 = vld [vmem:[#allocation5 + $0x60] sm:$0xf]
    %v310 = vld [vmem:[#allocation5 + $0x64] sm:$0xf]
    %v311 = vld [vmem:[#allocation5 + $0x68] sm:$0xf]
    %v312 = vld [vmem:[#allocation5 + $0x6c] sm:$0xf]
    %v313 = vld [vmem:[#allocation5 + $0x70] sm:$0xf]
    %v314 = vld [vmem:[#allocation5 + $0x74] sm:$0xf]
    %v315 = vld [vmem:[#allocation5 + $0x78] sm:$0xf]
    %v316 = vld [vmem:[#allocation5 + $0x7c] sm:$0xf]
    %v317 = vld [vmem:[#allocation5 + $0x80] sm:$0xf]
    %v318 = vld [vmem:[#allocation5 + $0x84] sm:$0xf]
    %v319 = vld [vmem:[#allocation5 + $0x88] sm:$0xf]
    %v320 = vld [vmem:[#allocation5 + $0x8c] sm:$0xf]
    %v321 = vld [vmem:[#allocation5 + $0x90] sm:$0xf]
    %v322 = vld [vmem:[#allocation5 + $0x94] sm:$0xf]
    %v323 = vld [vmem:[#allocation5 + $0x98] sm:$0xf]
    %v324 = vld [vmem:[#allocation5 + $0x9c] sm:$0xf]
    %v325 = vld [vmem:[#allocation5 + $0xa0] sm:$0xf]
    %v326 = vld [vmem:[#allocation5 + $0xa4] sm:$0xf]
    %v327 = vld [vmem:[#allocation5 + $0xa8] sm:$0xf]
    %v328 = vld [vmem:[#allocation5 + $0xac] sm:$0xf]
    %v329 = vld [vmem:[#allocation5 + $0xb0] sm:$0xf]
    %v330 = vld [vmem:[#allocation5 + $0xb4] sm:$0xf]
    %v331 = vld [vmem:[#allocation5 + $0xb8] sm:$0xf]
    %v332 = vld [vmem:[#allocation5 + $0xbc] sm:$0xf]
    %v333 = vld [vmem:[#allocation5 + $0xc0] sm:$0xf]
    %v334 = vld [vmem:[#allocation5 + $0xc4] sm:$0xf]
    %v335 = vld [vmem:[#allocation5 + $0xc8] sm:$0xf]
    %v336 = vld [vmem:[#allocation5 + $0xcc] sm:$0xf]
    %v337 = vld [vmem:[#allocation5 + $0xd0] sm:$0xf]
    %v338 = vld [vmem:[#allocation5 + $0xd4] sm:$0xf]
    %v339 = vld [vmem:[#allocation5 + $0xd8] sm:$0xf]
    %v340 = vld [vmem:[#allocation5 + $0xdc] sm:$0xf]
    %v341 = vld [vmem:[#allocation5 + $0xe0] sm:$0xf]
    %v342 = vld [vmem:[#allocation5 + $0xe4] sm:$0xf]
    %v343 = vld [vmem:[#allocation5 + $0xe8] sm:$0xf]
    %v344 = vld [vmem:[#allocation5 + $0xec] sm:$0xf]
    %v345 = vld [vmem:[#allocation5 + $0xf0] sm:$0xf]
    %v346 = vld [vmem:[#allocation5 + $0xf4] sm:$0xf]
    %v347 = vld [vmem:[#allocation5 + $0xf8] sm:$0xf]
    %v348 = vld [vmem:[#allocation5 + $0xfc] sm:$0xf]
    %v349 = vld [vmem:[#allocation5 + $0x100] sm:$0xf]
    %v350 = vld [vmem:[#allocation5 + $0x104] sm:$0xf]
    %v351 = vld [vmem:[#allocation5 + $0x108] sm:$0xf]
    %v352 = vld [vmem:[#allocation5 + $0x10c] sm:$0xf]
    %v353 = vld [vmem:[#allocation5 + $0x110] sm:$0xf]
    %v354 = vld [vmem:[#allocation5 + $0x114] sm:$0xf]
    %v355 = vld [vmem:[#allocation5 + $0x118] sm:$0xf]
    %v356 = vld [vmem:[#allocation5 + $0x11c] sm:$0xf]
    %v357 = vld [vmem:[#allocation5 + $0x120] sm:$0xf]
    %v358 = vld [vmem:[#allocation5 + $0x124] sm:$0xf]
    %v359 = vld [vmem:[#allocation5 + $0x128] sm:$0xf]
    %v360 = vld [vmem:[#allocation5 + $0x12c] sm:$0xf]
    %v361 = vld [vmem:[#allocation5 + $0x130] sm:$0xf]
    %v362 = vld [vmem:[#allocation5 + $0x134] sm:$0xf]
    %v363 = vld [vmem:[#allocation5 + $0x138] sm:$0xf]
    %v364 = vld [vmem:[#allocation5 + $0x13c] sm:$0xf]
    %v365 = vld [vmem:[#allocation5 + $0x140] sm:$0xf]
    %v366 = vld [vmem:[#allocation5 + $0x144] sm:$0xf]
    %v367 = vld [vmem:[#allocation5 + $0x148] sm:$0xf]
    %v368 = vld [vmem:[#allocation5 + $0x14c] sm:$0xf]
    %v369 = vld [vmem:[#allocation5 + $0x150] sm:$0xf]
    %v370 = vld [vmem:[#allocation5 + $0x154] sm:$0xf]
    %v371 = vld [vmem:[#allocation5 + $0x158] sm:$0xf]
    %v372 = vld [vmem:[#allocation5 + $0x15c] sm:$0xf]
    %v373 = vld [vmem:[#allocation5 + $0x160] sm:$0xf]
    %v374 = vld [vmem:[#allocation5 + $0x164] sm:$0xf]
    %v375 = vld [vmem:[#allocation5 + $0x168] sm:$0xf]
    %v376 = vld [vmem:[#allocation5 + $0x16c] sm:$0xf]
    %v377 = vld [vmem:[#allocation5 + $0x170] sm:$0xf]
    %v378 = vld [vmem:[#allocation5 + $0x174] sm:$0xf]
    %v379 = vld [vmem:[#allocation5 + $0x178] sm:$0xf]
    %v380 = vld [vmem:[#allocation5 + $0x17c] sm:$0xf]
    %v381 = vld [vmem:[#allocation5 + $0x180] sm:$0xf]
    %v382 = vld [vmem:[#allocation5 + $0x184] sm:$0xf]
    %v383 = vld [vmem:[#allocation5 + $0x188] sm:$0xf]
    %v384 = vld [vmem:[#allocation5 + $0x18c] sm:$0xf]
    %v385 = vld [vmem:[#allocation5 + $0x190] sm:$0xf]
    %v386 = vld [vmem:[#allocation5 + $0x194] sm:$0xf]
    %v387 = vld [vmem:[#allocation5 + $0x198] sm:$0xf]
    %v388 = vld [vmem:[#allocation5 + $0x19c] sm:$0xf]
    %v389 = vld [vmem:[#allocation5 + $0x1a0] sm:$0xf]
    %v390 = vld [vmem:[#allocation5 + $0x1a4] sm:$0xf]
    %v391 = vld [vmem:[#allocation5 + $0x1a8] sm:$0xf]
    %v392 = vld [vmem:[#allocation5 + $0x1ac] sm:$0xf]
    %v393 = vld [vmem:[#allocation5 + $0x1b0] sm:$0xf]
    %v394 = vld [vmem:[#allocation5 + $0x1b4] sm:$0xf]
    %v395 = vld [vmem:[#allocation5 + $0x1b8] sm:$0xf]
    %v396 = vld [vmem:[#allocation5 + $0x1bc] sm:$0xf]
    %v397 = vld [vmem:[#allocation5 + $0x1c0] sm:$0xf]
    %v398 = vld [vmem:[#allocation5 + $0x1c4] sm:$0xf]
    %v399 = vld [vmem:[#allocation5 + $0x1c8] sm:$0xf]
    %v400 = vld [vmem:[#allocation5 + $0x1cc] sm:$0xf]
    %v401 = vld [vmem:[#allocation5 + $0x1d0] sm:$0xf]
    %v402 = vld [vmem:[#allocation5 + $0x1d4] sm:$0xf]
    %v403 = vld [vmem:[#allocation5 + $0x1d8] sm:$0xf]
    %v404 = vld [vmem:[#allocation5 + $0x1dc] sm:$0xf]
    %v405 = vld [vmem:[#allocation5 + $0x1e0] sm:$0xf]
    %v406 = vld [vmem:[#allocation5 + $0x1e4] sm:$0xf]
    %v407 = vld [vmem:[#allocation5 + $0x1e8] sm:$0xf]
    %v408 = vld [vmem:[#allocation5 + $0x1ec] sm:$0xf]
    %v409 = vld [vmem:[#allocation5 + $0x1f0] sm:$0xf]
    %v410 = vld [vmem:[#allocation5 + $0x1f4] sm:$0xf]
    %v411 = vld [vmem:[#allocation5 + $0x1f8] sm:$0xf]
    %v412 = vld [vmem:[#allocation5 + $0x1fc] sm:$0xf]
    %v413 = vld [vmem:[#allocation5 + $0x200] sm:$0xf]
    %v414 = vld [vmem:[#allocation5 + $0x204] sm:$0xf]
    %v415 = vld [vmem:[#allocation5 + $0x208] sm:$0xf]
    %v416 = vld [vmem:[#allocation5 + $0x20c] sm:$0xf]
    %v417 = vld [vmem:[#allocation5 + $0x210] sm:$0xf]
    %v418 = vld [vmem:[#allocation5 + $0x214] sm:$0xf]
    %v419 = vld [vmem:[#allocation5 + $0x218] sm:$0xf]
    %v420 = vld [vmem:[#allocation5 + $0x21c] sm:$0xf]
    %v421 = vld [vmem:[#allocation5 + $0x220] sm:$0xf]
    %v422 = vld [vmem:[#allocation5 + $0x224] sm:$0xf]
    %v423 = vld [vmem:[#allocation5 + $0x228] sm:$0xf]
    %v424 = vld [vmem:[#allocation5 + $0x22c] sm:$0xf]
    %v425 = vld [vmem:[#allocation5 + $0x230] sm:$0xf]
    %v426 = vld [vmem:[#allocation5 + $0x234] sm:$0xf]
    %v427 = vld [vmem:[#allocation5 + $0x238] sm:$0xf]
    %v428 = vld [vmem:[#allocation5 + $0x23c] sm:$0xf]
    %v429 = vld [vmem:[#allocation5 + $0x240] sm:$0xf]
    %v430 = vld [vmem:[#allocation5 + $0x244] sm:$0xf]
    %v431 = vld [vmem:[#allocation5 + $0x248] sm:$0xf]
    %v432 = vld [vmem:[#allocation5 + $0x24c] sm:$0xf]
    %v433 = vld [vmem:[#allocation5 + $0x250] sm:$0xf]
    %v434 = vld [vmem:[#allocation5 + $0x254] sm:$0xf]
    %v435 = vld [vmem:[#allocation5 + $0x258] sm:$0xf]
    %v436 = vld [vmem:[#allocation5 + $0x25c] sm:$0xf]
    %v437 = vld [vmem:[#allocation5 + $0x260] sm:$0xf]
    %v438 = vld [vmem:[#allocation5 + $0x264] sm:$0xf]
    %v439 = vld [vmem:[#allocation5 + $0x268] sm:$0xf]
    %v440 = vld [vmem:[#allocation5 + $0x26c] sm:$0xf]
    %v441 = vld [vmem:[#allocation5 + $0x270] sm:$0xf]
    %v442 = vld [vmem:[#allocation5 + $0x274] sm:$0xf]
    %v443 = vld [vmem:[#allocation5 + $0x278] sm:$0xf]
    %v444 = vld [vmem:[#allocation5 + $0x27c] sm:$0xf]
    %v445 = vld [vmem:[#allocation5 + $0x280] sm:$0xf]
    %v446 = vld [vmem:[#allocation5 + $0x284] sm:$0xf]
    %v447 = vld [vmem:[#allocation5 + $0x288] sm:$0xf]
    %v448 = vld [vmem:[#allocation5 + $0x28c] sm:$0xf]
    %v449 = vld [vmem:[#allocation5 + $0x290] sm:$0xf]
    %v450 = vld [vmem:[#allocation5 + $0x294] sm:$0xf]
    %v451 = vld [vmem:[#allocation5 + $0x298] sm:$0xf]
    %v452 = vld [vmem:[#allocation5 + $0x29c] sm:$0xf]
    %v453 = vld [vmem:[#allocation5 + $0x2a0] sm:$0xf]
    %v454 = vld [vmem:[#allocation5 + $0x2a4] sm:$0xf]
    %v455 = vld [vmem:[#allocation5 + $0x2a8] sm:$0xf]
    %v456 = vld [vmem:[#allocation5 + $0x2ac] sm:$0xf]
    %v457 = vld [vmem:[#allocation5 + $0x2b0] sm:$0xf]
    %v458 = vld [vmem:[#allocation5 + $0x2b4] sm:$0xf]
    %v459 = vld [vmem:[#allocation5 + $0x2b8] sm:$0xf]
    %v460 = vld [vmem:[#allocation5 + $0x2bc] sm:$0xf]
    %v461 = vld [vmem:[#allocation5 + $0x2c0] sm:$0xf]
    %v462 = vld [vmem:[#allocation5 + $0x2c4] sm:$0xf]
    %v463 = vld [vmem:[#allocation5 + $0x2c8] sm:$0xf]
    %v464 = vld [vmem:[#allocation5 + $0x2cc] sm:$0xf]
    %v465 = vld [vmem:[#allocation5 + $0x2d0] sm:$0xf]
    %v466 = vld [vmem:[#allocation5 + $0x2d4] sm:$0xf]
    %v467 = vld [vmem:[#allocation5 + $0x2d8] sm:$0xf]
    %v468 = vld [vmem:[#allocation5 + $0x2dc] sm:$0xf]
    %v469 = vld [vmem:[#allocation5 + $0x2e0] sm:$0xf]
    %v470 = vld [vmem:[#allocation5 + $0x2e4] sm:$0xf]
    %v471 = vld [vmem:[#allocation5 + $0x2e8] sm:$0xf]
    %v472 = vld [vmem:[#allocation5 + $0x2ec] sm:$0xf]
    %v473 = vld [vmem:[#allocation5 + $0x2f0] sm:$0xf]
    %v474 = vld [vmem:[#allocation5 + $0x2f4] sm:$0xf]
    %v475 = vld [vmem:[#allocation5 + $0x2f8] sm:$0xf]
    %v476 = vld [vmem:[#allocation5 + $0x2fc] sm:$0xf]
    %v477 = vld [vmem:[#allocation5 + $0x300] sm:$0xf]
    %v478 = vld [vmem:[#allocation5 + $0x304] sm:$0xf]
    %v479 = vld [vmem:[#allocation5 + $0x308] sm:$0xf]
    %v480 = vld [vmem:[#allocation5 + $0x30c] sm:$0xf]
    %v481 = vld [vmem:[#allocation5 + $0x310] sm:$0xf]
    %v482 = vld [vmem:[#allocation5 + $0x314] sm:$0xf]
    %v483 = vld [vmem:[#allocation5 + $0x318] sm:$0xf]
    %v484 = vld [vmem:[#allocation5 + $0x31c] sm:$0xf]
    %v485 = vld [vmem:[#allocation5 + $0x320] sm:$0xf]
    %v486 = vld [vmem:[#allocation5 + $0x324] sm:$0xf]
    %v487 = vld [vmem:[#allocation5 + $0x328] sm:$0xf]
    %v488 = vld [vmem:[#allocation5 + $0x32c] sm:$0xf]
    %v489 = vld [vmem:[#allocation5 + $0x330] sm:$0xf]
    %v490 = vld [vmem:[#allocation5 + $0x334] sm:$0xf]
    %v491 = vld [vmem:[#allocation5 + $0x338] sm:$0xf]
    %v492 = vld [vmem:[#allocation5 + $0x33c] sm:$0xf]
    %v493 = vld [vmem:[#allocation5 + $0x340] sm:$0xf]
    %v494 = vld [vmem:[#allocation5 + $0x344] sm:$0xf]
    %v495 = vld [vmem:[#allocation5 + $0x348] sm:$0xf]
    %v496 = vld [vmem:[#allocation5 + $0x34c] sm:$0xf]
    %v497 = vld [vmem:[#allocation5 + $0x350] sm:$0xf]
    %v498 = vld [vmem:[#allocation5 + $0x354] sm:$0xf]
    %v499 = vld [vmem:[#allocation5 + $0x358] sm:$0xf]
    %v500 = vld [vmem:[#allocation5 + $0x35c] sm:$0xf]
    %v501 = vld [vmem:[#allocation5 + $0x360] sm:$0xf]
    %v502 = vld [vmem:[#allocation5 + $0x364] sm:$0xf]
    %v503 = vld [vmem:[#allocation5 + $0x368] sm:$0xf]
    %v504 = vld [vmem:[#allocation5 + $0x36c] sm:$0xf]
    %v505 = vld [vmem:[#allocation5 + $0x370] sm:$0xf]
    %v506 = vld [vmem:[#allocation5 + $0x374] sm:$0xf]
    %v507 = vld [vmem:[#allocation5 + $0x378] sm:$0xf]
    %v508 = vld [vmem:[#allocation5 + $0x37c] sm:$0xf]
    %v509 = vld [vmem:[#allocation5 + $0x380] sm:$0xf]
    %v510 = vld [vmem:[#allocation5 + $0x384] sm:$0xf]
    %v511 = vld [vmem:[#allocation5 + $0x388] sm:$0xf]
    %v512 = vld [vmem:[#allocation5 + $0x38c] sm:$0xf]
    %v513 = vld [vmem:[#allocation5 + $0x390] sm:$0xf]
    %v514 = vld [vmem:[#allocation5 + $0x394] sm:$0xf]
    %v515 = vld [vmem:[#allocation5 + $0x398] sm:$0xf]
    %v516 = vld [vmem:[#allocation5 + $0x39c] sm:$0xf]
    %v517 = vld [vmem:[#allocation5 + $0x3a0] sm:$0xf]
    %v518 = vld [vmem:[#allocation5 + $0x3a4] sm:$0xf]
    %v519 = vld [vmem:[#allocation5 + $0x3a8] sm:$0xf]
    %v520 = vld [vmem:[#allocation5 + $0x3ac] sm:$0xf]
    %v521 = vld [vmem:[#allocation5 + $0x3b0] sm:$0xf]
    %v522 = vld [vmem:[#allocation5 + $0x3b4] sm:$0xf]
    %v523 = vld [vmem:[#allocation5 + $0x3b8] sm:$0xf]
    %v524 = vld [vmem:[#allocation5 + $0x3bc] sm:$0xf]
    %v525 = vld [vmem:[#allocation5 + $0x3c0] sm:$0xf]
    %v526 = vld [vmem:[#allocation5 + $0x3c4] sm:$0xf]
    %v527 = vld [vmem:[#allocation5 + $0x3c8] sm:$0xf]
    %v528 = vld [vmem:[#allocation5 + $0x3cc] sm:$0xf]
    %v529 = vld [vmem:[#allocation5 + $0x3d0] sm:$0xf]
    %v530 = vld [vmem:[#allocation5 + $0x3d4] sm:$0xf]
    %v531 = vld [vmem:[#allocation5 + $0x3d8] sm:$0xf]
    %v532 = vld [vmem:[#allocation5 + $0x3dc] sm:$0xf]
    %v533 = vld [vmem:[#allocation5 + $0x3e0] sm:$0xf]
    %v534 = vld [vmem:[#allocation5 + $0x3e4] sm:$0xf]
    %v535 = vld [vmem:[#allocation5 + $0x3e8] sm:$0xf]
    %v536 = vld [vmem:[#allocation5 + $0x3ec] sm:$0xf]
    %v537 = vld [vmem:[#allocation5 + $0x3f0] sm:$0xf]
    %v538 = vld [vmem:[#allocation5 + $0x3f4] sm:$0xf]
    %v539 = vld [vmem:[#allocation5 + $0x3f8] sm:$0xf]
    %v540 = vld [vmem:[#allocation5 + $0x3fc] sm:$0xf]
    %v541 = vld [vmem:[#allocation5 + $0x400] sm:$0xf]
    %v542 = vld [vmem:[#allocation5 + $0x404] sm:$0xf]
    %v543 = vld [vmem:[#allocation5 + $0x408] sm:$0xf]
    %v544 = vld [vmem:[#allocation5 + $0x40c] sm:$0xf]
    %v545 = vld [vmem:[#allocation5 + $0x410] sm:$0xf]
    %v546 = vld [vmem:[#allocation5 + $0x414] sm:$0xf]
    %v547 = vld [vmem:[#allocation5 + $0x418] sm:$0xf]
    %v548 = vld [vmem:[#allocation5 + $0x41c] sm:$0xf]
    %v549 = vld [vmem:[#allocation5 + $0x420] sm:$0xf]
    %v550 = vld [vmem:[#allocation5 + $0x424] sm:$0xf]
    %v551 = vld [vmem:[#allocation5 + $0x428] sm:$0xf]
    %v552 = vld [vmem:[#allocation5 + $0x42c] sm:$0xf]
    %v553 = vld [vmem:[#allocation5 + $0x430] sm:$0xf]
    %v554 = vld [vmem:[#allocation5 + $0x434] sm:$0xf]
    %v555 = vld [vmem:[#allocation5 + $0x438] sm:$0xf]
    %v556 = vld [vmem:[#allocation5 + $0x43c] sm:$0xf]
    %v557 = vld [vmem:[#allocation5 + $0x440] sm:$0xf]
    %v558 = vld [vmem:[#allocation5 + $0x444] sm:$0xf]
    %v559 = vld [vmem:[#allocation5 + $0x448] sm:$0xf]
    %v560 = vld [vmem:[#allocation5 + $0x44c] sm:$0xf]
    %v561 = vld [vmem:[#allocation5 + $0x450] sm:$0xf]
    %v562 = vld [vmem:[#allocation5 + $0x454] sm:$0xf]
    %v563 = vld [vmem:[#allocation5 + $0x458] sm:$0xf]
    %v564 = vld [vmem:[#allocation5 + $0x45c] sm:$0xf]
    %v565 = vld [vmem:[#allocation5 + $0x460] sm:$0xf]
    %v566 = vld [vmem:[#allocation5 + $0x464] sm:$0xf]
    %v567 = vld [vmem:[#allocation5 + $0x468] sm:$0xf]
    %v568 = vld [vmem:[#allocation5 + $0x46c] sm:$0xf]
    %v569 = vld [vmem:[#allocation5 + $0x470] sm:$0xf]
    %v570 = vld [vmem:[#allocation5 + $0x474] sm:$0xf]
    %v571 = vld [vmem:[#allocation5 + $0x478] sm:$0xf]
    %v572 = vld [vmem:[#allocation5 + $0x47c] sm:$0xf]
    %v573 = vld [vmem:[#allocation5 + $0x480] sm:$0xf]
    %v574 = vld [vmem:[#allocation5 + $0x484] sm:$0xf]
    %v575 = vld [vmem:[#allocation5 + $0x488] sm:$0xf]
    %v576 = vld [vmem:[#allocation5 + $0x48c] sm:$0xf]
    %v577 = vld [vmem:[#allocation5 + $0x490] sm:$0xf]
    %v578 = vld [vmem:[#allocation5 + $0x494] sm:$0xf]
    %v579 = vld [vmem:[#allocation5 + $0x498] sm:$0xf]
    %v580 = vld [vmem:[#allocation5 + $0x49c] sm:$0xf]
    %v581 = vld [vmem:[#allocation5 + $0x4a0] sm:$0xf]
    %v582 = vld [vmem:[#allocation5 + $0x4a4] sm:$0xf]
    %v583 = vld [vmem:[#allocation5 + $0x4a8] sm:$0xf]
    %v584 = vld [vmem:[#allocation5 + $0x4ac] sm:$0xf]
    %v585 = vld [vmem:[#allocation5 + $0x4b0] sm:$0xf]
    %v586 = vld [vmem:[#allocation5 + $0x4b4] sm:$0xf]
    %v587 = vld [vmem:[#allocation5 + $0x4b8] sm:$0xf]
    %v588 = vld [vmem:[#allocation5 + $0x4bc] sm:$0xf]
    %v589 = vld [vmem:[#allocation5 + $0x4c0] sm:$0xf]
    %v590 = vld [vmem:[#allocation5 + $0x4c4] sm:$0xf]
    %v591 = vld [vmem:[#allocation5 + $0x4c8] sm:$0xf]
    %v592 = vld [vmem:[#allocation5 + $0x4cc] sm:$0xf]
    %v593 = vld [vmem:[#allocation5 + $0x4d0] sm:$0xf]
    %v594 = vld [vmem:[#allocation5 + $0x4d4] sm:$0xf]
    %v595 = vld [vmem:[#allocation5 + $0x4d8] sm:$0xf]
    %v596 = vld [vmem:[#allocation5 + $0x4dc] sm:$0xf]
    %v597 = vld [vmem:[#allocation5 + $0x4e0] sm:$0xf]
    %v598 = vld [vmem:[#allocation5 + $0x4e4] sm:$0xf]
    %v599 = vld [vmem:[#allocation5 + $0x4e8] sm:$0xf]
    %v600 = vld [vmem:[#allocation5 + $0x4ec] sm:$0xf]
    %v601 = vld [vmem:[#allocation5 + $0x4f0] sm:$0xf]
    %v602 = vld [vmem:[#allocation5 + $0x4f4] sm:$0xf]
    %v603 = vld [vmem:[#allocation5 + $0x4f8] sm:$0xf]
    %v604 = vld [vmem:[#allocation5 + $0x4fc] sm:$0xf]
    %v605 = vld [vmem:[#allocation5 + $0x500] sm:$0xf]
    %v606 = vld [vmem:[#allocation5 + $0x504] sm:$0xf]
    %v607 = vld [vmem:[#allocation5 + $0x508] sm:$0xf]
    %v608 = vld [vmem:[#allocation5 + $0x50c] sm:$0xf]
    %v609 = vld [vmem:[#allocation5 + $0x510] sm:$0xf]
    %v610 = vld [vmem:[#allocation5 + $0x514] sm:$0xf]
    %v611 = vld [vmem:[#allocation5 + $0x518] sm:$0xf]
    %v612 = vld [vmem:[#allocation5 + $0x51c] sm:$0xf]
    %v613 = vld [vmem:[#allocation5 + $0x520] sm:$0xf]
    %v614 = vld [vmem:[#allocation5 + $0x524] sm:$0xf]
    %v615 = vld [vmem:[#allocation5 + $0x528] sm:$0xf]
    %v616 = vld [vmem:[#allocation5 + $0x52c] sm:$0xf]
    %v617 = vld [vmem:[#allocation5 + $0x530] sm:$0xf]
    %v618 = vld [vmem:[#allocation5 + $0x534] sm:$0xf]
    %v619 = vld [vmem:[#allocation5 + $0x538] sm:$0xf]
    %v620 = vld [vmem:[#allocation5 + $0x53c] sm:$0xf]
    %v621 = vld [vmem:[#allocation5 + $0x540] sm:$0xf]
    %v622 = vld [vmem:[#allocation5 + $0x544] sm:$0xf]
    %v623 = vld [vmem:[#allocation5 + $0x548] sm:$0xf]
    %v624 = vld [vmem:[#allocation5 + $0x54c] sm:$0xf]
    %v625 = vld [vmem:[#allocation5 + $0x550] sm:$0xf]
    %v626 = vld [vmem:[#allocation5 + $0x554] sm:$0xf]
    %v627 = vld [vmem:[#allocation5 + $0x558] sm:$0xf]
    %v628 = vld [vmem:[#allocation5 + $0x55c] sm:$0xf]
    %v629 = vld [vmem:[#allocation5 + $0x560] sm:$0xf]
    %v630 = vld [vmem:[#allocation5 + $0x564] sm:$0xf]
    %v631 = vld [vmem:[#allocation5 + $0x568] sm:$0xf]
    %v632 = vld [vmem:[#allocation5 + $0x56c] sm:$0xf]
    %v633 = vld [vmem:[#allocation5 + $0x570] sm:$0xf]
    %v634 = vld [vmem:[#allocation5 + $0x574] sm:$0xf]
    %v635 = vld [vmem:[#allocation5 + $0x578] sm:$0xf]
    %v636 = vld [vmem:[#allocation5 + $0x57c] sm:$0xf]
    %v637 = vld [vmem:[#allocation5 + $0x580] sm:$0xf]
    %v638 = vld [vmem:[#allocation5 + $0x584] sm:$0xf]
    %v639 = vld [vmem:[#allocation5 + $0x588] sm:$0xf]
    %v640 = vld [vmem:[#allocation5 + $0x58c] sm:$0xf]
    %v641 = vld [vmem:[#allocation5 + $0x590] sm:$0xf]
    %v642 = vld [vmem:[#allocation5 + $0x594] sm:$0xf]
    %v643 = vld [vmem:[#allocation5 + $0x598] sm:$0xf]
    %v644 = vld [vmem:[#allocation5 + $0x59c] sm:$0xf]
    %v645 = vld [vmem:[#allocation5 + $0x5a0] sm:$0xf]
    %v646 = vld [vmem:[#allocation5 + $0x5a4] sm:$0xf]
    %v647 = vld [vmem:[#allocation5 + $0x5a8] sm:$0xf]
    %v648 = vld [vmem:[#allocation5 + $0x5ac] sm:$0xf]
    %v649 = vld [vmem:[#allocation5 + $0x5b0] sm:$0xf]
    %v650 = vld [vmem:[#allocation5 + $0x5b4] sm:$0xf]
    %v651 = vld [vmem:[#allocation5 + $0x5b8] sm:$0xf]
    %v652 = vld [vmem:[#allocation5 + $0x5bc] sm:$0xf]
    %v653 = vld [vmem:[#allocation5 + $0x5c0] sm:$0xf]
    %v654 = vld [vmem:[#allocation5 + $0x5c4] sm:$0xf]
    %v655 = vld [vmem:[#allocation5 + $0x5c8] sm:$0xf]
    %v656 = vld [vmem:[#allocation5 + $0x5cc] sm:$0xf]
    %v657 = vld [vmem:[#allocation5 + $0x5d0] sm:$0xf]
    %v658 = vld [vmem:[#allocation5 + $0x5d4] sm:$0xf]
    %v659 = vld [vmem:[#allocation5 + $0x5d8] sm:$0xf]
    %v660 = vld [vmem:[#allocation5 + $0x5dc] sm:$0xf]
    %v661 = vld [vmem:[#allocation5 + $0x5e0] sm:$0xf]
    %v662 = vld [vmem:[#allocation5 + $0x5e4] sm:$0xf]
    %v663 = vld [vmem:[#allocation5 + $0x5e8] sm:$0xf]
    %v664 = vld [vmem:[#allocation5 + $0x5ec] sm:$0xf]
    %v665 = vld [vmem:[#allocation5 + $0x5f0] sm:$0xf]
    %v666 = vld [vmem:[#allocation5 + $0x5f4] sm:$0xf]
    %v667 = vld [vmem:[#allocation5 + $0x5f8] sm:$0xf]
    %v668 = vld [vmem:[#allocation5 + $0x5fc] sm:$0xf]
    %v861 = vunpack.c.l.b16 %v93
    %v862 = vunpack.c.h.b16 %v93
    %v863 = vunpack.c.l.b16 %v94
    %v864 = vunpack.c.h.b16 %v94
    %v865 = vunpack.c.l.b16 %v95
    %v866 = vunpack.c.h.b16 %v95
    %v867 = vunpack.c.l.b16 %v96
    %v868 = vunpack.c.h.b16 %v96
    %v869 = vunpack.c.l.b16 %v97
    %v870 = vunpack.c.h.b16 %v97
    %v871 = vunpack.c.l.b16 %v98
    %v872 = vunpack.c.h.b16 %v98
    %v873 = vunpack.c.l.b16 %v99
    %v874 = vunpack.c.h.b16 %v99
    %v875 = vunpack.c.l.b16 %v100
    %v876 = vunpack.c.h.b16 %v100
    %v877 = vunpack.c.l.b16 %v101
    %v878 = vunpack.c.h.b16 %v101
    %v879 = vunpack.c.l.b16 %v102
    %v880 = vunpack.c.h.b16 %v102
    %v881 = vunpack.c.l.b16 %v103
    %v882 = vunpack.c.h.b16 %v103
    %v883 = vunpack.c.l.b16 %v104
    %v884 = vunpack.c.h.b16 %v104
    %v885 = vunpack.c.l.b16 %v105
    %v886 = vunpack.c.h.b16 %v105
    %v887 = vunpack.c.l.b16 %v106
    %v888 = vunpack.c.h.b16 %v106
    %v889 = vunpack.c.l.b16 %v107
    %v890 = vunpack.c.h.b16 %v107
    %v891 = vunpack.c.l.b16 %v108
    %v892 = vunpack.c.h.b16 %v108
    %v893 = vunpack.c.l.b16 %v109
    %v894 = vunpack.c.h.b16 %v109
    %v895 = vunpack.c.l.b16 %v110
    %v896 = vunpack.c.h.b16 %v110
    %v897 = vunpack.c.l.b16 %v111
    %v898 = vunpack.c.h.b16 %v111
    %v899 = vunpack.c.l.b16 %v112
    %v900 = vunpack.c.h.b16 %v112
    %v901 = vunpack.c.l.b16 %v113
    %v902 = vunpack.c.h.b16 %v113
    %v903 = vunpack.c.l.b16 %v114
    %v904 = vunpack.c.h.b16 %v114
    %v905 = vunpack.c.l.b16 %v115
    %v906 = vunpack.c.h.b16 %v115
    %v907 = vunpack.c.l.b16 %v116
    %v908 = vunpack.c.h.b16 %v116
    %v909 = vunpack.c.l.b16 %v117
    %v910 = vunpack.c.h.b16 %v117
    %v911 = vunpack.c.l.b16 %v118
    %v912 = vunpack.c.h.b16 %v118
    %v913 = vunpack.c.l.b16 %v119
    %v914 = vunpack.c.h.b16 %v119
    %v915 = vunpack.c.l.b16 %v120
    %v916 = vunpack.c.h.b16 %v120
    %v917 = vunpack.c.l.b16 %v121
    %v918 = vunpack.c.h.b16 %v121
    %v919 = vunpack.c.l.b16 %v122
    %v920 = vunpack.c.h.b16 %v122
    %v921 = vunpack.c.l.b16 %v123
    %v922 = vunpack.c.h.b16 %v123
    %v923 = vunpack.c.l.b16 %v124
    %v924 = vunpack.c.h.b16 %v124
    %v925 = vunpack.c.l.b16 %v125
    %v926 = vunpack.c.h.b16 %v125
    %v927 = vunpack.c.l.b16 %v126
    %v928 = vunpack.c.h.b16 %v126
    %v929 = vunpack.c.l.b16 %v127
    %v930 = vunpack.c.h.b16 %v127
    %v931 = vunpack.c.l.b16 %v128
    %v932 = vunpack.c.h.b16 %v128
    %v933 = vunpack.c.l.b16 %v129
    %v934 = vunpack.c.h.b16 %v129
    %v935 = vunpack.c.l.b16 %v130
    %v936 = vunpack.c.h.b16 %v130
    %v937 = vunpack.c.l.b16 %v131
    %v938 = vunpack.c.h.b16 %v131
    %v939 = vunpack.c.l.b16 %v132
    %v940 = vunpack.c.h.b16 %v132
    %v941 = vunpack.c.l.b16 %v133
    %v942 = vunpack.c.h.b16 %v133
    %v943 = vunpack.c.l.b16 %v134
    %v944 = vunpack.c.h.b16 %v134
    %v945 = vunpack.c.l.b16 %v135
    %v946 = vunpack.c.h.b16 %v135
    %v947 = vunpack.c.l.b16 %v136
    %v948 = vunpack.c.h.b16 %v136
    %v949 = vunpack.c.l.b16 %v137
    %v950 = vunpack.c.h.b16 %v137
    %v951 = vunpack.c.l.b16 %v138
    %v952 = vunpack.c.h.b16 %v138
    %v953 = vunpack.c.l.b16 %v139
    %v954 = vunpack.c.h.b16 %v139
    %v955 = vunpack.c.l.b16 %v140
    %v956 = vunpack.c.h.b16 %v140
    %v957 = vunpack.c.l.b16 %v141
    %v958 = vunpack.c.h.b16 %v141
    %v959 = vunpack.c.l.b16 %v142
    %v960 = vunpack.c.h.b16 %v142
    %v961 = vunpack.c.l.b16 %v143
    %v962 = vunpack.c.h.b16 %v143
    %v963 = vunpack.c.l.b16 %v144
    %v964 = vunpack.c.h.b16 %v144
    %v965 = vunpack.c.l.b16 %v145
    %v966 = vunpack.c.h.b16 %v145
    %v967 = vunpack.c.l.b16 %v146
    %v968 = vunpack.c.h.b16 %v146
    %v969 = vunpack.c.l.b16 %v147
    %v970 = vunpack.c.h.b16 %v147
    %v971 = vunpack.c.l.b16 %v148
    %v972 = vunpack.c.h.b16 %v148
    %v973 = vunpack.c.l.b16 %v149
    %v974 = vunpack.c.h.b16 %v149
    %v975 = vunpack.c.l.b16 %v150
    %v976 = vunpack.c.h.b16 %v150
    %v977 = vunpack.c.l.b16 %v151
    %v978 = vunpack.c.h.b16 %v151
    %v979 = vunpack.c.l.b16 %v152
    %v980 = vunpack.c.h.b16 %v152
    %v981 = vunpack.c.l.b16 %v153
    %v982 = vunpack.c.h.b16 %v153
    %v983 = vunpack.c.l.b16 %v154
    %v984 = vunpack.c.h.b16 %v154
    %v985 = vunpack.c.l.b16 %v155
    %v986 = vunpack.c.h.b16 %v155
    %v987 = vunpack.c.l.b16 %v156
    %v988 = vunpack.c.h.b16 %v156
    %v989 = vunpack.c.l.b16 %v157
    %v990 = vunpack.c.h.b16 %v157
    %v991 = vunpack.c.l.b16 %v158
    %v992 = vunpack.c.h.b16 %v158
    %v993 = vunpack.c.l.b16 %v159
    %v994 = vunpack.c.h.b16 %v159
    %v995 = vunpack.c.l.b16 %v160
    %v996 = vunpack.c.h.b16 %v160
    %v997 = vunpack.c.l.b16 %v161
    %v998 = vunpack.c.h.b16 %v161
    %v999 = vunpack.c.l.b16 %v162
    %v1000 = vunpack.c.h.b16 %v162
    %v1001 = vunpack.c.l.b16 %v163
    %v1002 = vunpack.c.h.b16 %v163
    %v1003 = vunpack.c.l.b16 %v164
    %v1004 = vunpack.c.h.b16 %v164
    %v1005 = vunpack.c.l.b16 %v165
    %v1006 = vunpack.c.h.b16 %v165
    %v1007 = vunpack.c.l.b16 %v166
    %v1008 = vunpack.c.h.b16 %v166
    %v1009 = vunpack.c.l.b16 %v167
    %v1010 = vunpack.c.h.b16 %v167
    %v1011 = vunpack.c.l.b16 %v168
    %v1012 = vunpack.c.h.b16 %v168
    %v1013 = vunpack.c.l.b16 %v169
    %v1014 = vunpack.c.h.b16 %v169
    %v1015 = vunpack.c.l.b16 %v170
    %v1016 = vunpack.c.h.b16 %v170
    %v1017 = vunpack.c.l.b16 %v171
    %v1018 = vunpack.c.h.b16 %v171
    %v1019 = vunpack.c.l.b16 %v172
    %v1020 = vunpack.c.h.b16 %v172
    %v1021 = vunpack.c.l.b16 %v173
    %v1022 = vunpack.c.h.b16 %v173
    %v1023 = vunpack.c.l.b16 %v174
    %v1024 = vunpack.c.h.b16 %v174
    %v1025 = vunpack.c.l.b16 %v175
    %v1026 = vunpack.c.h.b16 %v175
    %v1027 = vunpack.c.l.b16 %v176
    %v1028 = vunpack.c.h.b16 %v176
    %v1029 = vunpack.c.l.b16 %v177
    %v1030 = vunpack.c.h.b16 %v177
    %v1031 = vunpack.c.l.b16 %v178
    %v1032 = vunpack.c.h.b16 %v178
    %v1033 = vunpack.c.l.b16 %v179
    %v1034 = vunpack.c.h.b16 %v179
    %v1035 = vunpack.c.l.b16 %v180
    %v1036 = vunpack.c.h.b16 %v180
    %v1037 = vunpack.c.l.b16 %v181
    %v1038 = vunpack.c.h.b16 %v181
    %v1039 = vunpack.c.l.b16 %v182
    %v1040 = vunpack.c.h.b16 %v182
    %v1041 = vunpack.c.l.b16 %v183
    %v1042 = vunpack.c.h.b16 %v183
    %v1043 = vunpack.c.l.b16 %v184
    %v1044 = vunpack.c.h.b16 %v184
    %v1045 = vunpack.c.l.b16 %v185
    %v1046 = vunpack.c.h.b16 %v185
    %v1047 = vunpack.c.l.b16 %v186
    %v1048 = vunpack.c.h.b16 %v186
    %v1049 = vunpack.c.l.b16 %v187
    %v1050 = vunpack.c.h.b16 %v187
    %v1051 = vunpack.c.l.b16 %v188
    %v1052 = vunpack.c.h.b16 %v188
    %v1053 = vunpack.c.l.b16 %v189
    %v1054 = vunpack.c.h.b16 %v189
    %v1055 = vunpack.c.l.b16 %v190
    %v1056 = vunpack.c.h.b16 %v190
    %v1057 = vunpack.c.l.b16 %v191
    %v1058 = vunpack.c.h.b16 %v191
    %v1059 = vunpack.c.l.b16 %v192
    %v1060 = vunpack.c.h.b16 %v192
    %v1061 = vunpack.c.l.b16 %v193
    %v1062 = vunpack.c.h.b16 %v193
    %v1063 = vunpack.c.l.b16 %v194
    %v1064 = vunpack.c.h.b16 %v194
    %v1065 = vunpack.c.l.b16 %v195
    %v1066 = vunpack.c.h.b16 %v195
    %v1067 = vunpack.c.l.b16 %v196
    %v1068 = vunpack.c.h.b16 %v196
    %v1069 = vunpack.c.l.b16 %v197
    %v1070 = vunpack.c.h.b16 %v197
    %v1071 = vunpack.c.l.b16 %v198
    %v1072 = vunpack.c.h.b16 %v198
    %v1073 = vunpack.c.l.b16 %v199
    %v1074 = vunpack.c.h.b16 %v199
    %v1075 = vunpack.c.l.b16 %v200
    %v1076 = vunpack.c.h.b16 %v200
    %v1077 = vunpack.c.l.b16 %v201
    %v1078 = vunpack.c.h.b16 %v201
    %v1079 = vunpack.c.l.b16 %v202
    %v1080 = vunpack.c.h.b16 %v202
    %v1081 = vunpack.c.l.b16 %v203
    %v1082 = vunpack.c.h.b16 %v203
    %v1083 = vunpack.c.l.b16 %v204
    %v1084 = vunpack.c.h.b16 %v204
    %v1085 = vunpack.c.l.b16 %v205
    %v1086 = vunpack.c.h.b16 %v205
    %v1087 = vunpack.c.l.b16 %v206
    %v1088 = vunpack.c.h.b16 %v206
    %v1089 = vunpack.c.l.b16 %v207
    %v1090 = vunpack.c.h.b16 %v207
    %v1091 = vunpack.c.l.b16 %v208
    %v1092 = vunpack.c.h.b16 %v208
    %v1093 = vunpack.c.l.b16 %v209
    %v1094 = vunpack.c.h.b16 %v209
    %v1095 = vunpack.c.l.b16 %v210
    %v1096 = vunpack.c.h.b16 %v210
    %v1097 = vunpack.c.l.b16 %v211
    %v1098 = vunpack.c.h.b16 %v211
    %v1099 = vunpack.c.l.b16 %v212
    %v1100 = vunpack.c.h.b16 %v212
    %v1101 = vunpack.c.l.b16 %v213
    %v1102 = vunpack.c.h.b16 %v213
    %v1103 = vunpack.c.l.b16 %v214
    %v1104 = vunpack.c.h.b16 %v214
    %v1105 = vunpack.c.l.b16 %v215
    %v1106 = vunpack.c.h.b16 %v215
    %v1107 = vunpack.c.l.b16 %v216
    %v1108 = vunpack.c.h.b16 %v216
    %v1109 = vunpack.c.l.b16 %v217
    %v1110 = vunpack.c.h.b16 %v217
    %v1111 = vunpack.c.l.b16 %v218
    %v1112 = vunpack.c.h.b16 %v218
    %v1113 = vunpack.c.l.b16 %v219
    %v1114 = vunpack.c.h.b16 %v219
    %v1115 = vunpack.c.l.b16 %v220
    %v1116 = vunpack.c.h.b16 %v220
    %v1117 = vunpack.c.l.b16 %v221
    %v1118 = vunpack.c.h.b16 %v221
    %v1119 = vunpack.c.l.b16 %v222
    %v1120 = vunpack.c.h.b16 %v222
    %v1121 = vunpack.c.l.b16 %v223
    %v1122 = vunpack.c.h.b16 %v223
    %v1123 = vunpack.c.l.b16 %v224
    %v1124 = vunpack.c.h.b16 %v224
    %v1125 = vunpack.c.l.b16 %v225
    %v1126 = vunpack.c.h.b16 %v225
    %v1127 = vunpack.c.l.b16 %v226
    %v1128 = vunpack.c.h.b16 %v226
    %v1129 = vunpack.c.l.b16 %v227
    %v1130 = vunpack.c.h.b16 %v227
    %v1131 = vunpack.c.l.b16 %v228
    %v1132 = vunpack.c.h.b16 %v228
    %v1133 = vunpack.c.l.b16 %v229
    %v1134 = vunpack.c.h.b16 %v229
    %v1135 = vunpack.c.l.b16 %v230
    %v1136 = vunpack.c.h.b16 %v230
    %v1137 = vunpack.c.l.b16 %v231
    %v1138 = vunpack.c.h.b16 %v231
    %v1139 = vunpack.c.l.b16 %v232
    %v1140 = vunpack.c.h.b16 %v232
    %v1141 = vunpack.c.l.b16 %v233
    %v1142 = vunpack.c.h.b16 %v233
    %v1143 = vunpack.c.l.b16 %v234
    %v1144 = vunpack.c.h.b16 %v234
    %v1145 = vunpack.c.l.b16 %v235
    %v1146 = vunpack.c.h.b16 %v235
    %v1147 = vunpack.c.l.b16 %v236
    %v1148 = vunpack.c.h.b16 %v236
    %v1149 = vunpack.c.l.b16 %v237
    %v1150 = vunpack.c.h.b16 %v237
    %v1151 = vunpack.c.l.b16 %v238
    %v1152 = vunpack.c.h.b16 %v238
    %v1153 = vunpack.c.l.b16 %v239
    %v1154 = vunpack.c.h.b16 %v239
    %v1155 = vunpack.c.l.b16 %v240
    %v1156 = vunpack.c.h.b16 %v240
    %v1157 = vunpack.c.l.b16 %v241
    %v1158 = vunpack.c.h.b16 %v241
    %v1159 = vunpack.c.l.b16 %v242
    %v1160 = vunpack.c.h.b16 %v242
    %v1161 = vunpack.c.l.b16 %v243
    %v1162 = vunpack.c.h.b16 %v243
    %v1163 = vunpack.c.l.b16 %v244
    %v1164 = vunpack.c.h.b16 %v244
    %v1165 = vunpack.c.l.b16 %v245
    %v1166 = vunpack.c.h.b16 %v245
    %v1167 = vunpack.c.l.b16 %v246
    %v1168 = vunpack.c.h.b16 %v246
    %v1169 = vunpack.c.l.b16 %v247
    %v1170 = vunpack.c.h.b16 %v247
    %v1171 = vunpack.c.l.b16 %v248
    %v1172 = vunpack.c.h.b16 %v248
    %v1173 = vunpack.c.l.b16 %v249
    %v1174 = vunpack.c.h.b16 %v249
    %v1175 = vunpack.c.l.b16 %v250
    %v1176 = vunpack.c.h.b16 %v250
    %v1177 = vunpack.c.l.b16 %v251
    %v1178 = vunpack.c.h.b16 %v251
    %v1179 = vunpack.c.l.b16 %v252
    %v1180 = vunpack.c.h.b16 %v252
    %v1181 = vunpack.c.l.b16 %v253
    %v1182 = vunpack.c.h.b16 %v253
    %v1183 = vunpack.c.l.b16 %v254
    %v1184 = vunpack.c.h.b16 %v254
    %v1185 = vunpack.c.l.b16 %v255
    %v1186 = vunpack.c.h.b16 %v255
    %v1187 = vunpack.c.l.b16 %v256
    %v1188 = vunpack.c.h.b16 %v256
    %v1189 = vunpack.c.l.b16 %v257
    %v1190 = vunpack.c.h.b16 %v257
    %v1191 = vunpack.c.l.b16 %v258
    %v1192 = vunpack.c.h.b16 %v258
    %v1193 = vunpack.c.l.b16 %v259
    %v1194 = vunpack.c.h.b16 %v259
    %v1195 = vunpack.c.l.b16 %v260
    %v1196 = vunpack.c.h.b16 %v260
    %v1197 = vunpack.c.l.b16 %v261
    %v1198 = vunpack.c.h.b16 %v261
    %v1199 = vunpack.c.l.b16 %v262
    %v1200 = vunpack.c.h.b16 %v262
    %v1201 = vunpack.c.l.b16 %v263
    %v1202 = vunpack.c.h.b16 %v263
    %v1203 = vunpack.c.l.b16 %v264
    %v1204 = vunpack.c.h.b16 %v264
    %v1205 = vunpack.c.l.b16 %v265
    %v1206 = vunpack.c.h.b16 %v265
    %v1207 = vunpack.c.l.b16 %v266
    %v1208 = vunpack.c.h.b16 %v266
    %v1209 = vunpack.c.l.b16 %v267
    %v1210 = vunpack.c.h.b16 %v267
    %v1211 = vunpack.c.l.b16 %v268
    %v1212 = vunpack.c.h.b16 %v268
    %v1213 = vunpack.c.l.b16 %v269
    %v1214 = vunpack.c.h.b16 %v269
    %v1215 = vunpack.c.l.b16 %v270
    %v1216 = vunpack.c.h.b16 %v270
    %v1217 = vunpack.c.l.b16 %v271
    %v1218 = vunpack.c.h.b16 %v271
    %v1219 = vunpack.c.l.b16 %v272
    %v1220 = vunpack.c.h.b16 %v272
    %v1221 = vunpack.c.l.b16 %v273
    %v1222 = vunpack.c.h.b16 %v273
    %v1223 = vunpack.c.l.b16 %v274
    %v1224 = vunpack.c.h.b16 %v274
    %v1225 = vunpack.c.l.b16 %v275
    %v1226 = vunpack.c.h.b16 %v275
    %v1227 = vunpack.c.l.b16 %v276
    %v1228 = vunpack.c.h.b16 %v276
    %v1229 = vunpack.c.l.b16 %v277
    %v1230 = vunpack.c.h.b16 %v277
    %v1231 = vunpack.c.l.b16 %v278
    %v1232 = vunpack.c.h.b16 %v278
    %v1233 = vunpack.c.l.b16 %v279
    %v1234 = vunpack.c.h.b16 %v279
    %v1235 = vunpack.c.l.b16 %v280
    %v1236 = vunpack.c.h.b16 %v280
    %v1237 = vunpack.c.l.b16 %v281
    %v1238 = vunpack.c.h.b16 %v281
    %v1239 = vunpack.c.l.b16 %v282
    %v1240 = vunpack.c.h.b16 %v282
    %v1241 = vunpack.c.l.b16 %v283
    %v1242 = vunpack.c.h.b16 %v283
    %v1243 = vunpack.c.l.b16 %v284
    %v1244 = vunpack.c.h.b16 %v284
    %v1245 = vpack.c.b16 %v885, %v861
    %v1246 = vpack.c.b16 %v886, %v862
    %v1247 = vpack.c.b16 %v887, %v863
    %v1248 = vpack.c.b16 %v888, %v864
    %v1249 = vpack.c.b16 %v889, %v865
    %v1250 = vpack.c.b16 %v890, %v866
    %v1251 = vpack.c.b16 %v891, %v867
    %v1252 = vpack.c.b16 %v892, %v868
    %v1253 = vpack.c.b16 %v893, %v869
    %v1254 = vpack.c.b16 %v894, %v870
    %v1255 = vpack.c.b16 %v895, %v871
    %v1256 = vpack.c.b16 %v896, %v872
    %v1257 = vpack.c.b16 %v897, %v873
    %v1258 = vpack.c.b16 %v898, %v874
    %v1259 = vpack.c.b16 %v899, %v875
    %v1260 = vpack.c.b16 %v900, %v876
    %v1261 = vpack.c.b16 %v901, %v877
    %v1262 = vpack.c.b16 %v902, %v878
    %v1263 = vpack.c.b16 %v903, %v879
    %v1264 = vpack.c.b16 %v904, %v880
    %v1265 = vpack.c.b16 %v905, %v881
    %v1266 = vpack.c.b16 %v906, %v882
    %v1267 = vpack.c.b16 %v907, %v883
    %v1268 = vpack.c.b16 %v908, %v884
    %v1269 = vpack.c.b16 %v933, %v909
    %v1270 = vpack.c.b16 %v934, %v910
    %v1271 = vpack.c.b16 %v935, %v911
    %v1272 = vpack.c.b16 %v936, %v912
    %v1273 = vpack.c.b16 %v937, %v913
    %v1274 = vpack.c.b16 %v938, %v914
    %v1275 = vpack.c.b16 %v939, %v915
    %v1276 = vpack.c.b16 %v940, %v916
    %v1277 = vpack.c.b16 %v941, %v917
    %v1278 = vpack.c.b16 %v942, %v918
    %v1279 = vpack.c.b16 %v943, %v919
    %v1280 = vpack.c.b16 %v944, %v920
    %v1281 = vpack.c.b16 %v945, %v921
    %v1282 = vpack.c.b16 %v946, %v922
    %v1283 = vpack.c.b16 %v947, %v923
    %v1284 = vpack.c.b16 %v948, %v924
    %v1285 = vpack.c.b16 %v949, %v925
    %v1286 = vpack.c.b16 %v950, %v926
    %v1287 = vpack.c.b16 %v951, %v927
    %v1288 = vpack.c.b16 %v952, %v928
    %v1289 = vpack.c.b16 %v953, %v929
    %v1290 = vpack.c.b16 %v954, %v930
    %v1291 = vpack.c.b16 %v955, %v931
    %v1292 = vpack.c.b16 %v956, %v932
    %v1293 = vpack.c.b16 %v981, %v957
    %v1294 = vpack.c.b16 %v982, %v958
    %v1295 = vpack.c.b16 %v983, %v959
    %v1296 = vpack.c.b16 %v984, %v960
    %v1297 = vpack.c.b16 %v985, %v961
    %v1298 = vpack.c.b16 %v986, %v962
    %v1299 = vpack.c.b16 %v987, %v963
    %v1300 = vpack.c.b16 %v988, %v964
    %v1301 = vpack.c.b16 %v989, %v965
    %v1302 = vpack.c.b16 %v990, %v966
    %v1303 = vpack.c.b16 %v991, %v967
    %v1304 = vpack.c.b16 %v992, %v968
    %v1305 = vpack.c.b16 %v993, %v969
    %v1306 = vpack.c.b16 %v994, %v970
    %v1307 = vpack.c.b16 %v995, %v971
    %v1308 = vpack.c.b16 %v996, %v972
    %v1309 = vpack.c.b16 %v997, %v973
    %v1310 = vpack.c.b16 %v998, %v974
    %v1311 = vpack.c.b16 %v999, %v975
    %v1312 = vpack.c.b16 %v1000, %v976
    %v1313 = vpack.c.b16 %v1001, %v977
    %v1314 = vpack.c.b16 %v1002, %v978
    %v1315 = vpack.c.b16 %v1003, %v979
    %v1316 = vpack.c.b16 %v1004, %v980
    %v1317 = vpack.c.b16 %v1029, %v1005
    %v1318 = vpack.c.b16 %v1030, %v1006
    %v1319 = vpack.c.b16 %v1031, %v1007
    %v1320 = vpack.c.b16 %v1032, %v1008
    %v1321 = vpack.c.b16 %v1033, %v1009
    %v1322 = vpack.c.b16 %v1034, %v1010
    %v1323 = vpack.c.b16 %v1035, %v1011
    %v1324 = vpack.c.b16 %v1036, %v1012
    %v1325 = vpack.c.b16 %v1037, %v1013
    %v1326 = vpack.c.b16 %v1038, %v1014
    %v1327 = vpack.c.b16 %v1039, %v1015
    %v1328 = vpack.c.b16 %v1040, %v1016
    %v1329 = vpack.c.b16 %v1041, %v1017
    %v1330 = vpack.c.b16 %v1042, %v1018
    %v1331 = vpack.c.b16 %v1043, %v1019
    %v1332 = vpack.c.b16 %v1044, %v1020
    %v1333 = vpack.c.b16 %v1045, %v1021
    %v1334 = vpack.c.b16 %v1046, %v1022
    %v1335 = vpack.c.b16 %v1047, %v1023
    %v1336 = vpack.c.b16 %v1048, %v1024
    %v1337 = vpack.c.b16 %v1049, %v1025
    %v1338 = vpack.c.b16 %v1050, %v1026
    %v1339 = vpack.c.b16 %v1051, %v1027
    %v1340 = vpack.c.b16 %v1052, %v1028
    %v1341 = vpack.c.b16 %v1077, %v1053
    %v1342 = vpack.c.b16 %v1078, %v1054
    %v1343 = vpack.c.b16 %v1079, %v1055
    %v1344 = vpack.c.b16 %v1080, %v1056
    %v1345 = vpack.c.b16 %v1081, %v1057
    %v1346 = vpack.c.b16 %v1082, %v1058
    %v1347 = vpack.c.b16 %v1083, %v1059
    %v1348 = vpack.c.b16 %v1084, %v1060
    %v1349 = vpack.c.b16 %v1085, %v1061
    %v1350 = vpack.c.b16 %v1086, %v1062
    %v1351 = vpack.c.b16 %v1087, %v1063
    %v1352 = vpack.c.b16 %v1088, %v1064
    %v1353 = vpack.c.b16 %v1089, %v1065
    %v1354 = vpack.c.b16 %v1090, %v1066
    %v1355 = vpack.c.b16 %v1091, %v1067
    %v1356 = vpack.c.b16 %v1092, %v1068
    %v1357 = vpack.c.b16 %v1093, %v1069
    %v1358 = vpack.c.b16 %v1094, %v1070
    %v1359 = vpack.c.b16 %v1095, %v1071
    %v1360 = vpack.c.b16 %v1096, %v1072
    %v1361 = vpack.c.b16 %v1097, %v1073
    %v1362 = vpack.c.b16 %v1098, %v1074
    %v1363 = vpack.c.b16 %v1099, %v1075
    %v1364 = vpack.c.b16 %v1100, %v1076
    %v1365 = vpack.c.b16 %v1125, %v1101
    %v1366 = vpack.c.b16 %v1126, %v1102
    %v1367 = vpack.c.b16 %v1127, %v1103
    %v1368 = vpack.c.b16 %v1128, %v1104
    %v1369 = vpack.c.b16 %v1129, %v1105
    %v1370 = vpack.c.b16 %v1130, %v1106
    %v1371 = vpack.c.b16 %v1131, %v1107
    %v1372 = vpack.c.b16 %v1132, %v1108
    %v1373 = vpack.c.b16 %v1133, %v1109
    %v1374 = vpack.c.b16 %v1134, %v1110
    %v1375 = vpack.c.b16 %v1135, %v1111
    %v1376 = vpack.c.b16 %v1136, %v1112
    %v1377 = vpack.c.b16 %v1137, %v1113
    %v1378 = vpack.c.b16 %v1138, %v1114
    %v1379 = vpack.c.b16 %v1139, %v1115
    %v1380 = vpack.c.b16 %v1140, %v1116
    %v1381 = vpack.c.b16 %v1141, %v1117
    %v1382 = vpack.c.b16 %v1142, %v1118
    %v1383 = vpack.c.b16 %v1143, %v1119
    %v1384 = vpack.c.b16 %v1144, %v1120
    %v1385 = vpack.c.b16 %v1145, %v1121
    %v1386 = vpack.c.b16 %v1146, %v1122
    %v1387 = vpack.c.b16 %v1147, %v1123
    %v1388 = vpack.c.b16 %v1148, %v1124
    %v1389 = vpack.c.b16 %v1173, %v1149
    %v1390 = vpack.c.b16 %v1174, %v1150
    %v1391 = vpack.c.b16 %v1175, %v1151
    %v1392 = vpack.c.b16 %v1176, %v1152
    %v1393 = vpack.c.b16 %v1177, %v1153
    %v1394 = vpack.c.b16 %v1178, %v1154
    %v1395 = vpack.c.b16 %v1179, %v1155
    %v1396 = vpack.c.b16 %v1180, %v1156
    %v1397 = vpack.c.b16 %v1181, %v1157
    %v1398 = vpack.c.b16 %v1182, %v1158
    %v1399 = vpack.c.b16 %v1183, %v1159
    %v1400 = vpack.c.b16 %v1184, %v1160
    %v1401 = vpack.c.b16 %v1185, %v1161
    %v1402 = vpack.c.b16 %v1186, %v1162
    %v1403 = vpack.c.b16 %v1187, %v1163
    %v1404 = vpack.c.b16 %v1188, %v1164
    %v1405 = vpack.c.b16 %v1189, %v1165
    %v1406 = vpack.c.b16 %v1190, %v1166
    %v1407 = vpack.c.b16 %v1191, %v1167
    %v1408 = vpack.c.b16 %v1192, %v1168
    %v1409 = vpack.c.b16 %v1193, %v1169
    %v1410 = vpack.c.b16 %v1194, %v1170
    %v1411 = vpack.c.b16 %v1195, %v1171
    %v1412 = vpack.c.b16 %v1196, %v1172
    %v1413 = vpack.c.b16 %v1221, %v1197
    %v1414 = vpack.c.b16 %v1222, %v1198
    %v1415 = vpack.c.b16 %v1223, %v1199
    %v1416 = vpack.c.b16 %v1224, %v1200
    %v1417 = vpack.c.b16 %v1225, %v1201
    %v1418 = vpack.c.b16 %v1226, %v1202
    %v1419 = vpack.c.b16 %v1227, %v1203
    %v1420 = vpack.c.b16 %v1228, %v1204
    %v1421 = vpack.c.b16 %v1229, %v1205
    %v1422 = vpack.c.b16 %v1230, %v1206
    %v1423 = vpack.c.b16 %v1231, %v1207
    %v1424 = vpack.c.b16 %v1232, %v1208
    %v1425 = vpack.c.b16 %v1233, %v1209
    %v1426 = vpack.c.b16 %v1234, %v1210
    %v1427 = vpack.c.b16 %v1235, %v1211
    %v1428 = vpack.c.b16 %v1236, %v1212
    %v1429 = vpack.c.b16 %v1237, %v1213
    %v1430 = vpack.c.b16 %v1238, %v1214
    %v1431 = vpack.c.b16 %v1239, %v1215
    %v1432 = vpack.c.b16 %v1240, %v1216
    %v1433 = vpack.c.b16 %v1241, %v1217
    %v1434 = vpack.c.b16 %v1242, %v1218
    %v1435 = vpack.c.b16 %v1243, %v1219
    %v1436 = vpack.c.b16 %v1244, %v1220
    %v2013 = vunpack.c.l.b16 %v285
    %v2014 = vunpack.c.l.b16 %v286
    %v2015 = vunpack.c.l.b16 %v287
    %v2016 = vunpack.c.l.b16 %v288
    %v2017 = vunpack.c.l.b16 %v289
    %v2018 = vunpack.c.l.b16 %v290
    %v2019 = vunpack.c.l.b16 %v291
    %v2020 = vunpack.c.l.b16 %v292
    %v2021 = vunpack.c.l.b16 %v293
    %v2022 = vunpack.c.l.b16 %v294
    %v2023 = vunpack.c.l.b16 %v295
    %v2024 = vunpack.c.l.b16 %v296
    %v2025 = vunpack.c.l.b16 %v297
    %v2026 = vunpack.c.l.b16 %v298
    %v2027 = vunpack.c.l.b16 %v299
    %v2028 = vunpack.c.l.b16 %v300
    %v2029 = vunpack.c.l.b16 %v301
    %v2030 = vunpack.c.l.b16 %v302
    %v2031 = vunpack.c.l.b16 %v303
    %v2032 = vunpack.c.l.b16 %v304
    %v2033 = vunpack.c.l.b16 %v305
    %v2034 = vunpack.c.l.b16 %v306
    %v2035 = vunpack.c.l.b16 %v307
    %v2036 = vunpack.c.l.b16 %v308
    %v2037 = vunpack.c.l.b16 %v309
    %v2038 = vunpack.c.l.b16 %v310
    %v2039 = vunpack.c.l.b16 %v311
    %v2040 = vunpack.c.l.b16 %v312
    %v2041 = vunpack.c.l.b16 %v313
    %v2042 = vunpack.c.l.b16 %v314
    %v2043 = vunpack.c.l.b16 %v315
    %v2044 = vunpack.c.l.b16 %v316
    %v2045 = vunpack.c.l.b16 %v317
    %v2046 = vunpack.c.l.b16 %v318
    %v2047 = vunpack.c.l.b16 %v319
    %v2048 = vunpack.c.l.b16 %v320
    %v2049 = vunpack.c.l.b16 %v321
    %v2050 = vunpack.c.l.b16 %v322
    %v2051 = vunpack.c.l.b16 %v323
    %v2052 = vunpack.c.l.b16 %v324
    %v2053 = vunpack.c.l.b16 %v325
    %v2054 = vunpack.c.l.b16 %v326
    %v2055 = vunpack.c.l.b16 %v327
    %v2056 = vunpack.c.l.b16 %v328
    %v2057 = vunpack.c.l.b16 %v329
    %v2058 = vunpack.c.l.b16 %v330
    %v2059 = vunpack.c.l.b16 %v331
    %v2060 = vunpack.c.l.b16 %v332
    %v2061 = vunpack.c.l.b16 %v333
    %v2062 = vunpack.c.l.b16 %v334
    %v2063 = vunpack.c.l.b16 %v335
    %v2064 = vunpack.c.l.b16 %v336
    %v2065 = vunpack.c.l.b16 %v337
    %v2066 = vunpack.c.l.b16 %v338
    %v2067 = vunpack.c.l.b16 %v339
    %v2068 = vunpack.c.l.b16 %v340
    %v2069 = vunpack.c.l.b16 %v341
    %v2070 = vunpack.c.l.b16 %v342
    %v2071 = vunpack.c.l.b16 %v343
    %v2072 = vunpack.c.l.b16 %v344
    %v2073 = vunpack.c.l.b16 %v345
    %v2074 = vunpack.c.l.b16 %v346
    %v2075 = vunpack.c.l.b16 %v347
    %v2076 = vunpack.c.l.b16 %v348
    %v2077 = vunpack.c.l.b16 %v349
    %v2078 = vunpack.c.l.b16 %v350
    %v2079 = vunpack.c.l.b16 %v351
    %v2080 = vunpack.c.l.b16 %v352
    %v2081 = vunpack.c.l.b16 %v353
    %v2082 = vunpack.c.l.b16 %v354
    %v2083 = vunpack.c.l.b16 %v355
    %v2084 = vunpack.c.l.b16 %v356
    %v2085 = vunpack.c.l.b16 %v357
    %v2086 = vunpack.c.l.b16 %v358
    %v2087 = vunpack.c.l.b16 %v359
    %v2088 = vunpack.c.l.b16 %v360
    %v2089 = vunpack.c.l.b16 %v361
    %v2090 = vunpack.c.l.b16 %v362
    %v2091 = vunpack.c.l.b16 %v363
    %v2092 = vunpack.c.l.b16 %v364
    %v2093 = vunpack.c.l.b16 %v365
    %v2094 = vunpack.c.l.b16 %v366
    %v2095 = vunpack.c.l.b16 %v367
    %v2096 = vunpack.c.l.b16 %v368
    %v2097 = vunpack.c.l.b16 %v369
    %v2098 = vunpack.c.l.b16 %v370
    %v2099 = vunpack.c.l.b16 %v371
    %v2100 = vunpack.c.l.b16 %v372
    %v2101 = vunpack.c.l.b16 %v373
    %v2102 = vunpack.c.l.b16 %v374
    %v2103 = vunpack.c.l.b16 %v375
    %v2104 = vunpack.c.l.b16 %v376
    %v2105 = vunpack.c.l.b16 %v377
    %v2106 = vunpack.c.l.b16 %v378
    %v2107 = vunpack.c.l.b16 %v379
    %v2108 = vunpack.c.l.b16 %v380
    %v2109 = vunpack.c.l.b16 %v381
    %v2110 = vunpack.c.l.b16 %v382
    %v2111 = vunpack.c.l.b16 %v383
    %v2112 = vunpack.c.l.b16 %v384
    %v2113 = vunpack.c.l.b16 %v385
    %v2114 = vunpack.c.l.b16 %v386
    %v2115 = vunpack.c.l.b16 %v387
    %v2116 = vunpack.c.l.b16 %v388
    %v2117 = vunpack.c.l.b16 %v389
    %v2118 = vunpack.c.l.b16 %v390
    %v2119 = vunpack.c.l.b16 %v391
    %v2120 = vunpack.c.l.b16 %v392
    %v2121 = vunpack.c.l.b16 %v393
    %v2122 = vunpack.c.l.b16 %v394
    %v2123 = vunpack.c.l.b16 %v395
    %v2124 = vunpack.c.l.b16 %v396
    %v2125 = vunpack.c.l.b16 %v397
    %v2126 = vunpack.c.l.b16 %v398
    %v2127 = vunpack.c.l.b16 %v399
    %v2128 = vunpack.c.l.b16 %v400
    %v2129 = vunpack.c.l.b16 %v401
    %v2130 = vunpack.c.l.b16 %v402
    %v2131 = vunpack.c.l.b16 %v403
    %v2132 = vunpack.c.l.b16 %v404
    %v2133 = vunpack.c.l.b16 %v405
    %v2134 = vunpack.c.l.b16 %v406
    %v2135 = vunpack.c.l.b16 %v407
    %v2136 = vunpack.c.l.b16 %v408
    %v2137 = vunpack.c.l.b16 %v409
    %v2138 = vunpack.c.l.b16 %v410
    %v2139 = vunpack.c.l.b16 %v411
    %v2140 = vunpack.c.l.b16 %v412
    %v2141 = vunpack.c.l.b16 %v413
    %v2142 = vunpack.c.l.b16 %v414
    %v2143 = vunpack.c.l.b16 %v415
    %v2144 = vunpack.c.l.b16 %v416
    %v2145 = vunpack.c.l.b16 %v417
    %v2146 = vunpack.c.l.b16 %v418
    %v2147 = vunpack.c.l.b16 %v419
    %v2148 = vunpack.c.l.b16 %v420
    %v2149 = vunpack.c.l.b16 %v421
    %v2150 = vunpack.c.l.b16 %v422
    %v2151 = vunpack.c.l.b16 %v423
    %v2152 = vunpack.c.l.b16 %v424
    %v2153 = vunpack.c.l.b16 %v425
    %v2154 = vunpack.c.l.b16 %v426
    %v2155 = vunpack.c.l.b16 %v427
    %v2156 = vunpack.c.l.b16 %v428
    %v2157 = vunpack.c.l.b16 %v429
    %v2158 = vunpack.c.l.b16 %v430
    %v2159 = vunpack.c.l.b16 %v431
    %v2160 = vunpack.c.l.b16 %v432
    %v2161 = vunpack.c.l.b16 %v433
    %v2162 = vunpack.c.l.b16 %v434
    %v2163 = vunpack.c.l.b16 %v435
    %v2164 = vunpack.c.l.b16 %v436
    %v2165 = vunpack.c.l.b16 %v437
    %v2166 = vunpack.c.l.b16 %v438
    %v2167 = vunpack.c.l.b16 %v439
    %v2168 = vunpack.c.l.b16 %v440
    %v2169 = vunpack.c.l.b16 %v441
    %v2170 = vunpack.c.l.b16 %v442
    %v2171 = vunpack.c.l.b16 %v443
    %v2172 = vunpack.c.l.b16 %v444
    %v2173 = vunpack.c.l.b16 %v445
    %v2174 = vunpack.c.l.b16 %v446
    %v2175 = vunpack.c.l.b16 %v447
    %v2176 = vunpack.c.l.b16 %v448
    %v2177 = vunpack.c.l.b16 %v449
    %v2178 = vunpack.c.l.b16 %v450
    %v2179 = vunpack.c.l.b16 %v451
    %v2180 = vunpack.c.l.b16 %v452
    %v2181 = vunpack.c.l.b16 %v453
    %v2182 = vunpack.c.l.b16 %v454
    %v2183 = vunpack.c.l.b16 %v455
    %v2184 = vunpack.c.l.b16 %v456
    %v2185 = vunpack.c.l.b16 %v457
    %v2186 = vunpack.c.l.b16 %v458
    %v2187 = vunpack.c.l.b16 %v459
    %v2188 = vunpack.c.l.b16 %v460
    %v2189 = vunpack.c.l.b16 %v461
    %v2190 = vunpack.c.l.b16 %v462
    %v2191 = vunpack.c.l.b16 %v463
    %v2192 = vunpack.c.l.b16 %v464
    %v2193 = vunpack.c.l.b16 %v465
    %v2194 = vunpack.c.l.b16 %v466
    %v2195 = vunpack.c.l.b16 %v467
    %v2196 = vunpack.c.l.b16 %v468
    %v2197 = vunpack.c.l.b16 %v469
    %v2198 = vunpack.c.l.b16 %v470
    %v2199 = vunpack.c.l.b16 %v471
    %v2200 = vunpack.c.l.b16 %v472
    %v2201 = vunpack.c.l.b16 %v473
    %v2202 = vunpack.c.l.b16 %v474
    %v2203 = vunpack.c.l.b16 %v475
    %v2204 = vunpack.c.l.b16 %v476
    %v2205 = vunpack.c.l.b16 %v477
    %v2206 = vunpack.c.l.b16 %v478
    %v2207 = vunpack.c.l.b16 %v479
    %v2208 = vunpack.c.l.b16 %v480
    %v2209 = vunpack.c.l.b16 %v481
    %v2210 = vunpack.c.l.b16 %v482
    %v2211 = vunpack.c.l.b16 %v483
    %v2212 = vunpack.c.l.b16 %v484
    %v2213 = vunpack.c.l.b16 %v485
    %v2214 = vunpack.c.l.b16 %v486
    %v2215 = vunpack.c.l.b16 %v487
    %v2216 = vunpack.c.l.b16 %v488
    %v2217 = vunpack.c.l.b16 %v489
    %v2218 = vunpack.c.l.b16 %v490
    %v2219 = vunpack.c.l.b16 %v491
    %v2220 = vunpack.c.l.b16 %v492
    %v2221 = vunpack.c.l.b16 %v493
    %v2222 = vunpack.c.l.b16 %v494
    %v2223 = vunpack.c.l.b16 %v495
    %v2224 = vunpack.c.l.b16 %v496
    %v2225 = vunpack.c.l.b16 %v497
    %v2226 = vunpack.c.l.b16 %v498
    %v2227 = vunpack.c.l.b16 %v499
    %v2228 = vunpack.c.l.b16 %v500
    %v2229 = vunpack.c.l.b16 %v501
    %v2230 = vunpack.c.l.b16 %v502
    %v2231 = vunpack.c.l.b16 %v503
    %v2232 = vunpack.c.l.b16 %v504
    %v2233 = vunpack.c.l.b16 %v505
    %v2234 = vunpack.c.l.b16 %v506
    %v2235 = vunpack.c.l.b16 %v507
    %v2236 = vunpack.c.l.b16 %v508
    %v2237 = vunpack.c.l.b16 %v509
    %v2238 = vunpack.c.l.b16 %v510
    %v2239 = vunpack.c.l.b16 %v511
    %v2240 = vunpack.c.l.b16 %v512
    %v2241 = vunpack.c.l.b16 %v513
    %v2242 = vunpack.c.l.b16 %v514
    %v2243 = vunpack.c.l.b16 %v515
    %v2244 = vunpack.c.l.b16 %v516
    %v2245 = vunpack.c.l.b16 %v517
    %v2246 = vunpack.c.l.b16 %v518
    %v2247 = vunpack.c.l.b16 %v519
    %v2248 = vunpack.c.l.b16 %v520
    %v2249 = vunpack.c.l.b16 %v521
    %v2250 = vunpack.c.l.b16 %v522
    %v2251 = vunpack.c.l.b16 %v523
    %v2252 = vunpack.c.l.b16 %v524
    %v2253 = vunpack.c.l.b16 %v525
    %v2254 = vunpack.c.l.b16 %v526
    %v2255 = vunpack.c.l.b16 %v527
    %v2256 = vunpack.c.l.b16 %v528
    %v2257 = vunpack.c.l.b16 %v529
    %v2258 = vunpack.c.l.b16 %v530
    %v2259 = vunpack.c.l.b16 %v531
    %v2260 = vunpack.c.l.b16 %v532
    %v2261 = vunpack.c.l.b16 %v533
    %v2262 = vunpack.c.l.b16 %v534
    %v2263 = vunpack.c.l.b16 %v535
    %v2264 = vunpack.c.l.b16 %v536
    %v2265 = vunpack.c.l.b16 %v537
    %v2266 = vunpack.c.l.b16 %v538
    %v2267 = vunpack.c.l.b16 %v539
    %v2268 = vunpack.c.l.b16 %v540
    %v2269 = vunpack.c.l.b16 %v541
    %v2270 = vunpack.c.l.b16 %v542
    %v2271 = vunpack.c.l.b16 %v543
    %v2272 = vunpack.c.l.b16 %v544
    %v2273 = vunpack.c.l.b16 %v545
    %v2274 = vunpack.c.l.b16 %v546
    %v2275 = vunpack.c.l.b16 %v547
    %v2276 = vunpack.c.l.b16 %v548
    %v2277 = vunpack.c.l.b16 %v549
    %v2278 = vunpack.c.l.b16 %v550
    %v2279 = vunpack.c.l.b16 %v551
    %v2280 = vunpack.c.l.b16 %v552
    %v2281 = vunpack.c.l.b16 %v553
    %v2282 = vunpack.c.l.b16 %v554
    %v2283 = vunpack.c.l.b16 %v555
    %v2284 = vunpack.c.l.b16 %v556
    %v2285 = vunpack.c.l.b16 %v557
    %v2286 = vunpack.c.l.b16 %v558
    %v2287 = vunpack.c.l.b16 %v559
    %v2288 = vunpack.c.l.b16 %v560
    %v2289 = vunpack.c.l.b16 %v561
    %v2290 = vunpack.c.l.b16 %v562
    %v2291 = vunpack.c.l.b16 %v563
    %v2292 = vunpack.c.l.b16 %v564
    %v2293 = vunpack.c.l.b16 %v565
    %v2294 = vunpack.c.l.b16 %v566
    %v2295 = vunpack.c.l.b16 %v567
    %v2296 = vunpack.c.l.b16 %v568
    %v2297 = vunpack.c.l.b16 %v569
    %v2298 = vunpack.c.l.b16 %v570
    %v2299 = vunpack.c.l.b16 %v571
    %v2300 = vunpack.c.l.b16 %v572
    %v2301 = vunpack.c.l.b16 %v573
    %v2302 = vunpack.c.l.b16 %v574
    %v2303 = vunpack.c.l.b16 %v575
    %v2304 = vunpack.c.l.b16 %v576
    %v2305 = vunpack.c.l.b16 %v577
    %v2306 = vunpack.c.l.b16 %v578
    %v2307 = vunpack.c.l.b16 %v579
    %v2308 = vunpack.c.l.b16 %v580
    %v2309 = vunpack.c.l.b16 %v581
    %v2310 = vunpack.c.l.b16 %v582
    %v2311 = vunpack.c.l.b16 %v583
    %v2312 = vunpack.c.l.b16 %v584
    %v2313 = vunpack.c.l.b16 %v585
    %v2314 = vunpack.c.l.b16 %v586
    %v2315 = vunpack.c.l.b16 %v587
    %v2316 = vunpack.c.l.b16 %v588
    %v2317 = vunpack.c.l.b16 %v589
    %v2318 = vunpack.c.l.b16 %v590
    %v2319 = vunpack.c.l.b16 %v591
    %v2320 = vunpack.c.l.b16 %v592
    %v2321 = vunpack.c.l.b16 %v593
    %v2322 = vunpack.c.l.b16 %v594
    %v2323 = vunpack.c.l.b16 %v595
    %v2324 = vunpack.c.l.b16 %v596
    %v2325 = vunpack.c.l.b16 %v597
    %v2326 = vunpack.c.l.b16 %v598
    %v2327 = vunpack.c.l.b16 %v599
    %v2328 = vunpack.c.l.b16 %v600
    %v2329 = vunpack.c.l.b16 %v601
    %v2330 = vunpack.c.l.b16 %v602
    %v2331 = vunpack.c.l.b16 %v603
    %v2332 = vunpack.c.l.b16 %v604
    %v2333 = vunpack.c.l.b16 %v605
    %v2334 = vunpack.c.l.b16 %v606
    %v2335 = vunpack.c.l.b16 %v607
    %v2336 = vunpack.c.l.b16 %v608
    %v2337 = vunpack.c.l.b16 %v609
    %v2338 = vunpack.c.l.b16 %v610
    %v2339 = vunpack.c.l.b16 %v611
    %v2340 = vunpack.c.l.b16 %v612
    %v2341 = vunpack.c.l.b16 %v613
    %v2342 = vunpack.c.l.b16 %v614
    %v2343 = vunpack.c.l.b16 %v615
    %v2344 = vunpack.c.l.b16 %v616
    %v2345 = vunpack.c.l.b16 %v617
    %v2346 = vunpack.c.l.b16 %v618
    %v2347 = vunpack.c.l.b16 %v619
    %v2348 = vunpack.c.l.b16 %v620
    %v2349 = vunpack.c.l.b16 %v621
    %v2350 = vunpack.c.l.b16 %v622
    %v2351 = vunpack.c.l.b16 %v623
    %v2352 = vunpack.c.l.b16 %v624
    %v2353 = vunpack.c.l.b16 %v625
    %v2354 = vunpack.c.l.b16 %v626
    %v2355 = vunpack.c.l.b16 %v627
    %v2356 = vunpack.c.l.b16 %v628
    %v2357 = vunpack.c.l.b16 %v629
    %v2358 = vunpack.c.l.b16 %v630
    %v2359 = vunpack.c.l.b16 %v631
    %v2360 = vunpack.c.l.b16 %v632
    %v2361 = vunpack.c.l.b16 %v633
    %v2362 = vunpack.c.l.b16 %v634
    %v2363 = vunpack.c.l.b16 %v635
    %v2364 = vunpack.c.l.b16 %v636
    %v2365 = vunpack.c.l.b16 %v637
    %v2366 = vunpack.c.l.b16 %v638
    %v2367 = vunpack.c.l.b16 %v639
    %v2368 = vunpack.c.l.b16 %v640
    %v2369 = vunpack.c.l.b16 %v641
    %v2370 = vunpack.c.l.b16 %v642
    %v2371 = vunpack.c.l.b16 %v643
    %v2372 = vunpack.c.l.b16 %v644
    %v2373 = vunpack.c.l.b16 %v645
    %v2374 = vunpack.c.l.b16 %v646
    %v2375 = vunpack.c.l.b16 %v647
    %v2376 = vunpack.c.l.b16 %v648
    %v2377 = vunpack.c.l.b16 %v649
    %v2378 = vunpack.c.l.b16 %v650
    %v2379 = vunpack.c.l.b16 %v651
    %v2380 = vunpack.c.l.b16 %v652
    %v2381 = vunpack.c.l.b16 %v653
    %v2382 = vunpack.c.l.b16 %v654
    %v2383 = vunpack.c.l.b16 %v655
    %v2384 = vunpack.c.l.b16 %v656
    %v2385 = vunpack.c.l.b16 %v657
    %v2386 = vunpack.c.l.b16 %v658
    %v2387 = vunpack.c.l.b16 %v659
    %v2388 = vunpack.c.l.b16 %v660
    %v2389 = vunpack.c.l.b16 %v661
    %v2390 = vunpack.c.l.b16 %v662
    %v2391 = vunpack.c.l.b16 %v663
    %v2392 = vunpack.c.l.b16 %v664
    %v2393 = vunpack.c.l.b16 %v665
    %v2394 = vunpack.c.l.b16 %v666
    %v2395 = vunpack.c.l.b16 %v667
    %v2396 = vunpack.c.l.b16 %v668
    %v2397 = vpack.c.b16 %v2014, %v2013
    %v2398 = vpack.c.b16 %v2016, %v2015
    %v2399 = vpack.c.b16 %v2018, %v2017
    %v2400 = vpack.c.b16 %v2020, %v2019
    %v2401 = vpack.c.b16 %v2022, %v2021
    %v2402 = vpack.c.b16 %v2024, %v2023
    %v2403 = vpack.c.b16 %v2026, %v2025
    %v2404 = vpack.c.b16 %v2028, %v2027
    %v2405 = vpack.c.b16 %v2030, %v2029
    %v2406 = vpack.c.b16 %v2032, %v2031
    %v2407 = vpack.c.b16 %v2034, %v2033
    %v2408 = vpack.c.b16 %v2036, %v2035
    %v2409 = vpack.c.b16 %v2038, %v2037
    %v2410 = vpack.c.b16 %v2040, %v2039
    %v2411 = vpack.c.b16 %v2042, %v2041
    %v2412 = vpack.c.b16 %v2044, %v2043
    %v2413 = vpack.c.b16 %v2046, %v2045
    %v2414 = vpack.c.b16 %v2048, %v2047
    %v2415 = vpack.c.b16 %v2050, %v2049
    %v2416 = vpack.c.b16 %v2052, %v2051
    %v2417 = vpack.c.b16 %v2054, %v2053
    %v2418 = vpack.c.b16 %v2056, %v2055
    %v2419 = vpack.c.b16 %v2058, %v2057
    %v2420 = vpack.c.b16 %v2060, %v2059
    %v2421 = vpack.c.b16 %v2062, %v2061
    %v2422 = vpack.c.b16 %v2064, %v2063
    %v2423 = vpack.c.b16 %v2066, %v2065
    %v2424 = vpack.c.b16 %v2068, %v2067
    %v2425 = vpack.c.b16 %v2070, %v2069
    %v2426 = vpack.c.b16 %v2072, %v2071
    %v2427 = vpack.c.b16 %v2074, %v2073
    %v2428 = vpack.c.b16 %v2076, %v2075
    %v2429 = vpack.c.b16 %v2078, %v2077
    %v2430 = vpack.c.b16 %v2080, %v2079
    %v2431 = vpack.c.b16 %v2082, %v2081
    %v2432 = vpack.c.b16 %v2084, %v2083
    %v2433 = vpack.c.b16 %v2086, %v2085
    %v2434 = vpack.c.b16 %v2088, %v2087
    %v2435 = vpack.c.b16 %v2090, %v2089
    %v2436 = vpack.c.b16 %v2092, %v2091
    %v2437 = vpack.c.b16 %v2094, %v2093
    %v2438 = vpack.c.b16 %v2096, %v2095
    %v2439 = vpack.c.b16 %v2098, %v2097
    %v2440 = vpack.c.b16 %v2100, %v2099
    %v2441 = vpack.c.b16 %v2102, %v2101
    %v2442 = vpack.c.b16 %v2104, %v2103
    %v2443 = vpack.c.b16 %v2106, %v2105
    %v2444 = vpack.c.b16 %v2108, %v2107
    %v2445 = vpack.c.b16 %v2110, %v2109
    %v2446 = vpack.c.b16 %v2112, %v2111
    %v2447 = vpack.c.b16 %v2114, %v2113
    %v2448 = vpack.c.b16 %v2116, %v2115
    %v2449 = vpack.c.b16 %v2118, %v2117
    %v2450 = vpack.c.b16 %v2120, %v2119
    %v2451 = vpack.c.b16 %v2122, %v2121
    %v2452 = vpack.c.b16 %v2124, %v2123
    %v2453 = vpack.c.b16 %v2126, %v2125
    %v2454 = vpack.c.b16 %v2128, %v2127
    %v2455 = vpack.c.b16 %v2130, %v2129
    %v2456 = vpack.c.b16 %v2132, %v2131
    %v2457 = vpack.c.b16 %v2134, %v2133
    %v2458 = vpack.c.b16 %v2136, %v2135
    %v2459 = vpack.c.b16 %v2138, %v2137
    %v2460 = vpack.c.b16 %v2140, %v2139
    %v2461 = vpack.c.b16 %v2142, %v2141
    %v2462 = vpack.c.b16 %v2144, %v2143
    %v2463 = vpack.c.b16 %v2146, %v2145
    %v2464 = vpack.c.b16 %v2148, %v2147
    %v2465 = vpack.c.b16 %v2150, %v2149
    %v2466 = vpack.c.b16 %v2152, %v2151
    %v2467 = vpack.c.b16 %v2154, %v2153
    %v2468 = vpack.c.b16 %v2156, %v2155
    %v2469 = vpack.c.b16 %v2158, %v2157
    %v2470 = vpack.c.b16 %v2160, %v2159
    %v2471 = vpack.c.b16 %v2162, %v2161
    %v2472 = vpack.c.b16 %v2164, %v2163
    %v2473 = vpack.c.b16 %v2166, %v2165
    %v2474 = vpack.c.b16 %v2168, %v2167
    %v2475 = vpack.c.b16 %v2170, %v2169
    %v2476 = vpack.c.b16 %v2172, %v2171
    %v2477 = vpack.c.b16 %v2174, %v2173
    %v2478 = vpack.c.b16 %v2176, %v2175
    %v2479 = vpack.c.b16 %v2178, %v2177
    %v2480 = vpack.c.b16 %v2180, %v2179
    %v2481 = vpack.c.b16 %v2182, %v2181
    %v2482 = vpack.c.b16 %v2184, %v2183
    %v2483 = vpack.c.b16 %v2186, %v2185
    %v2484 = vpack.c.b16 %v2188, %v2187
    %v2485 = vpack.c.b16 %v2190, %v2189
    %v2486 = vpack.c.b16 %v2192, %v2191
    %v2487 = vpack.c.b16 %v2194, %v2193
    %v2488 = vpack.c.b16 %v2196, %v2195
    %v2489 = vpack.c.b16 %v2198, %v2197
    %v2490 = vpack.c.b16 %v2200, %v2199
    %v2491 = vpack.c.b16 %v2202, %v2201
    %v2492 = vpack.c.b16 %v2204, %v2203
    %v2493 = vpack.c.b16 %v2206, %v2205
    %v2494 = vpack.c.b16 %v2208, %v2207
    %v2495 = vpack.c.b16 %v2210, %v2209
    %v2496 = vpack.c.b16 %v2212, %v2211
    %v2497 = vpack.c.b16 %v2214, %v2213
    %v2498 = vpack.c.b16 %v2216, %v2215
    %v2499 = vpack.c.b16 %v2218, %v2217
    %v2500 = vpack.c.b16 %v2220, %v2219
    %v2501 = vpack.c.b16 %v2222, %v2221
    %v2502 = vpack.c.b16 %v2224, %v2223
    %v2503 = vpack.c.b16 %v2226, %v2225
    %v2504 = vpack.c.b16 %v2228, %v2227
    %v2505 = vpack.c.b16 %v2230, %v2229
    %v2506 = vpack.c.b16 %v2232, %v2231
    %v2507 = vpack.c.b16 %v2234, %v2233
    %v2508 = vpack.c.b16 %v2236, %v2235
    %v2509 = vpack.c.b16 %v2238, %v2237
    %v2510 = vpack.c.b16 %v2240, %v2239
    %v2511 = vpack.c.b16 %v2242, %v2241
    %v2512 = vpack.c.b16 %v2244, %v2243
    %v2513 = vpack.c.b16 %v2246, %v2245
    %v2514 = vpack.c.b16 %v2248, %v2247
    %v2515 = vpack.c.b16 %v2250, %v2249
    %v2516 = vpack.c.b16 %v2252, %v2251
    %v2517 = vpack.c.b16 %v2254, %v2253
    %v2518 = vpack.c.b16 %v2256, %v2255
    %v2519 = vpack.c.b16 %v2258, %v2257
    %v2520 = vpack.c.b16 %v2260, %v2259
    %v2521 = vpack.c.b16 %v2262, %v2261
    %v2522 = vpack.c.b16 %v2264, %v2263
    %v2523 = vpack.c.b16 %v2266, %v2265
    %v2524 = vpack.c.b16 %v2268, %v2267
    %v2525 = vpack.c.b16 %v2270, %v2269
    %v2526 = vpack.c.b16 %v2272, %v2271
    %v2527 = vpack.c.b16 %v2274, %v2273
    %v2528 = vpack.c.b16 %v2276, %v2275
    %v2529 = vpack.c.b16 %v2278, %v2277
    %v2530 = vpack.c.b16 %v2280, %v2279
    %v2531 = vpack.c.b16 %v2282, %v2281
    %v2532 = vpack.c.b16 %v2284, %v2283
    %v2533 = vpack.c.b16 %v2286, %v2285
    %v2534 = vpack.c.b16 %v2288, %v2287
    %v2535 = vpack.c.b16 %v2290, %v2289
    %v2536 = vpack.c.b16 %v2292, %v2291
    %v2537 = vpack.c.b16 %v2294, %v2293
    %v2538 = vpack.c.b16 %v2296, %v2295
    %v2539 = vpack.c.b16 %v2298, %v2297
    %v2540 = vpack.c.b16 %v2300, %v2299
    %v2541 = vpack.c.b16 %v2302, %v2301
    %v2542 = vpack.c.b16 %v2304, %v2303
    %v2543 = vpack.c.b16 %v2306, %v2305
    %v2544 = vpack.c.b16 %v2308, %v2307
    %v2545 = vpack.c.b16 %v2310, %v2309
    %v2546 = vpack.c.b16 %v2312, %v2311
    %v2547 = vpack.c.b16 %v2314, %v2313
    %v2548 = vpack.c.b16 %v2316, %v2315
    %v2549 = vpack.c.b16 %v2318, %v2317
    %v2550 = vpack.c.b16 %v2320, %v2319
    %v2551 = vpack.c.b16 %v2322, %v2321
    %v2552 = vpack.c.b16 %v2324, %v2323
    %v2553 = vpack.c.b16 %v2326, %v2325
    %v2554 = vpack.c.b16 %v2328, %v2327
    %v2555 = vpack.c.b16 %v2330, %v2329
    %v2556 = vpack.c.b16 %v2332, %v2331
    %v2557 = vpack.c.b16 %v2334, %v2333
    %v2558 = vpack.c.b16 %v2336, %v2335
    %v2559 = vpack.c.b16 %v2338, %v2337
    %v2560 = vpack.c.b16 %v2340, %v2339
    %v2561 = vpack.c.b16 %v2342, %v2341
    %v2562 = vpack.c.b16 %v2344, %v2343
    %v2563 = vpack.c.b16 %v2346, %v2345
    %v2564 = vpack.c.b16 %v2348, %v2347
    %v2565 = vpack.c.b16 %v2350, %v2349
    %v2566 = vpack.c.b16 %v2352, %v2351
    %v2567 = vpack.c.b16 %v2354, %v2353
    %v2568 = vpack.c.b16 %v2356, %v2355
    %v2569 = vpack.c.b16 %v2358, %v2357
    %v2570 = vpack.c.b16 %v2360, %v2359
    %v2571 = vpack.c.b16 %v2362, %v2361
    %v2572 = vpack.c.b16 %v2364, %v2363
    %v2573 = vpack.c.b16 %v2366, %v2365
    %v2574 = vpack.c.b16 %v2368, %v2367
    %v2575 = vpack.c.b16 %v2370, %v2369
    %v2576 = vpack.c.b16 %v2372, %v2371
    %v2577 = vpack.c.b16 %v2374, %v2373
    %v2578 = vpack.c.b16 %v2376, %v2375
    %v2579 = vpack.c.b16 %v2378, %v2377
    %v2580 = vpack.c.b16 %v2380, %v2379
    %v2581 = vpack.c.b16 %v2382, %v2381
    %v2582 = vpack.c.b16 %v2384, %v2383
    %v2583 = vpack.c.b16 %v2386, %v2385
    %v2584 = vpack.c.b16 %v2388, %v2387
    %v2585 = vpack.c.b16 %v2390, %v2389
    %v2586 = vpack.c.b16 %v2392, %v2391
    %v2587 = vpack.c.b16 %v2394, %v2393
    %v2588 = vpack.c.b16 %v2396, %v2395
    %2781 = vmatprep.subr.bf16.mxu0 0
    %2782 = vmatpush1.bf16.msra.mxu0 %v2397
    %2783 = vmatprep.subr.bf16.mxu0 0
    %2784 = vmatpush1.bf16.msra.mxu0 %v2398
    %2785 = vmatprep.subr.bf16.mxu0 0
    %2786 = vmatpush1.bf16.msra.mxu0 %v2399
    %2787 = vmatprep.subr.bf16.mxu0 0
    %2788 = vmatpush1.bf16.msra.mxu0 %v2400
    %2789 = vmatprep.subr.bf16.mxu0 0
    %2790 = vmatpush1.bf16.msra.mxu0 %v2401
    %2791 = vmatprep.subr.bf16.mxu0 0
    %2792 = vmatpush1.bf16.msra.mxu0 %v2402
    %2793 = vmatprep.subr.bf16.mxu0 0
    %2794 = vmatpush1.bf16.msra.mxu0 %v2403
    %2795 = vmatprep.subr.bf16.mxu0 0
    %2796 = vmatpush1.bf16.msra.mxu0 %v2404
    %2797 = vmatprep.subr.bf16.mxu0 0
    %2798 = vmatpush1.bf16.msra.mxu0 %v2405
    %2799 = vmatprep.subr.bf16.mxu0 0
    %2800 = vmatpush1.bf16.msra.mxu0 %v2406
    %2801 = vmatprep.subr.bf16.mxu0 0
    %2802 = vmatpush1.bf16.msra.mxu0 %v2407
    %2803 = vmatprep.subr.bf16.mxu0 0
    %2804 = vmatpush1.bf16.msra.mxu0 %v2408
    %2805 = vmatprep.subr.bf16.mxu0 0
    %2806 = vmatpush1.bf16.msra.mxu0 %v2409
    %2807 = vmatprep.subr.bf16.mxu0 0
    %2808 = vmatpush1.bf16.msra.mxu0 %v2410
    %2809 = vmatprep.subr.bf16.mxu0 0
    %2810 = vmatpush1.bf16.msra.mxu0 %v2411
    %2811 = vmatprep.subr.bf16.mxu0 0
    %2812 = vmatpush1.bf16.msra.mxu0 %v2412
    %2813 = vmatprep.mubr.bf16.mxu0 %v1246
    %2814 = vmatmul.mubr.bf16.gmra.mrb[0].mxu0 %v1245
    %v2815 = vpop.f32.mrb[0].mxu0
    %v2816 = vadd.f32 0.0, %v2815
    %v2817 = vpop.f32.mrb[0].mxu0
    %v2818 = vpop.f32.mrb[0].mxu0
    %v2819 = vadd.f32 0.0, %v2818
    %v2820 = vpop.f32.mrb[0].mxu0
    %2821 = vmatprep.mubr.bf16.mxu0 %v1270
    %2822 = vmatmul.mubr.bf16.gmra.mrb[0].mxu0 %v1269
    %v2823 = vpop.f32.mrb[0].mxu0
    %v2824 = vadd.f32 0.0, %v2823
    %v2825 = vpop.f32.mrb[0].mxu0
    %v2826 = vpop.f32.mrb[0].mxu0
    %v2827 = vadd.f32 0.0, %v2826
    %v2828 = vpop.f32.mrb[0].mxu0
    %2829 = vmatprep.mubr.bf16.mxu0 %v1294
    %2830 = vmatmul.mubr.bf16.gmra.mrb[0].mxu0 %v1293
    %v2831 = vpop.f32.mrb[0].mxu0
    %v2832 = vadd.f32 0.0, %v2831
    %v2833 = vpop.f32.mrb[0].mxu0
    %v2834 = vpop.f32.mrb[0].mxu0
    %v2835 = vadd.f32 0.0, %v2834
    %v2836 = vpop.f32.mrb[0].mxu0
    %2837 = vmatprep.mubr.bf16.mxu0 %v1318
    %2838 = vmatmul.mubr.bf16.gmra.mrb[0].mxu0 %v1317
    %v2839 = vpop.f32.mrb[0].mxu0
    %v2840 = vadd.f32 0.0, %v2839
    %v2841 = vpop.f32.mrb[0].mxu0
    %v2842 = vpop.f32.mrb[0].mxu0
    %v2843 = vadd.f32 0.0, %v2842
    %v2844 = vpop.f32.mrb[0].mxu0
    %2845 = vmatprep.mubr.bf16.mxu0 %v1342
    %2846 = vmatmul.mubr.bf16.gmra.mrb[0].mxu0 %v1341
    %v2847 = vpop.f32.mrb[0].mxu0
    %v2848 = vadd.f32 0.0, %v2847
    %v2849 = vpop.f32.mrb[0].mxu0
    %v2850 = vpop.f32.mrb[0].mxu0
    %v2851 = vadd.f32 0.0, %v2850
    %v2852 = vpop.f32.mrb[0].mxu0
    %2853 = vmatprep.mubr.bf16.mxu0 %v1366
    %2854 = vmatmul.mubr.bf16.gmra.mrb[0].mxu0 %v1365
    %v2855 = vpop.f32.mrb[0].mxu0
    %v2856 = vadd.f32 0.0, %v2855
    %v2857 = vpop.f32.mrb[0].mxu0
    %v2858 = vpop.f32.mrb[0].mxu0
    %v2859 = vadd.f32 0.0, %v2858
    %v2860 = vpop.f32.mrb[0].mxu0
    %2861 = vmatprep.mubr.bf16.mxu0 %v1390
    %2862 = vmatmul.mubr.bf16.gmra.mrb[0].mxu0 %v1389
    %v2863 = vpop.f32.mrb[0].mxu0
    %v2864 = vadd.f32 0.0, %v2863
    %v2865 = vpop.f32.mrb[0].mxu0
    %v2866 = vpop.f32.mrb[0].mxu0
    %v2867 = vadd.f32 0.0, %v2866
    %v2868 = vpop.f32.mrb[0].mxu0
    %2869 = vmatprep.mubr.bf16.mxu0 %v1414
    %2870 = vmatmul.mubr.bf16.gmra.mrb[0].mxu0 %v1413
    %v2871 = vpop.f32.mrb[0].mxu0
    %v2872 = vadd.f32 0.0, %v2871
    %v2873 = vpop.f32.mrb[0].mxu0
    %v2874 = vpop.f32.mrb[0].mxu0
    %v2875 = vadd.f32 0.0, %v2874
    %v2876 = vpop.f32.mrb[0].mxu0
    %2877 = vdwg.mxu0
    %2878 = vmatprep.subr.bf16.mxu0 0
    %2879 = vmatpush1.bf16.msra.mxu0 %v2413
    %2880 = vmatprep.subr.bf16.mxu0 0
    %2881 = vmatpush1.bf16.msra.mxu0 %v2414
    %2882 = vmatprep.subr.bf16.mxu0 0
    %2883 = vmatpush1.bf16.msra.mxu0 %v2415
    %2884 = vmatprep.subr.bf16.mxu0 0
    %2885 = vmatpush1.bf16.msra.mxu0 %v2416
    %2886 = vmatprep.subr.bf16.mxu0 0
    %2887 = vmatpush1.bf16.msra.mxu0 %v2417
    %2888 = vmatprep.subr.bf16.mxu0 0
    %2889 = vmatpush1.bf16.msra.mxu0 %v2418
    %2890 = vmatprep.subr.bf16.mxu0 0
    %2891 = vmatpush1.bf16.msra.mxu0 %v2419
    %2892 = vmatprep.subr.bf16.mxu0 0
    %2893 = vmatpush1.bf16.msra.mxu0 %v2420
    %2894 = vmatprep.subr.bf16.mxu0 0
    %2895 = vmatpush1.bf16.msra.mxu0 %v2421
    %2896 = vmatprep.subr.bf16.mxu0 0
    %2897 = vmatpush1.bf16.msra.mxu0 %v2422
    %2898 = vmatprep.subr.bf16.mxu0 0
    %2899 = vmatpush1.bf16.msra.mxu0 %v2423
    %2900 = vmatprep.subr.bf16.mxu0 0
    %2901 = vmatpush1.bf16.msra.mxu0 %v2424
    %2902 = vmatprep.subr.bf16.mxu0 0
    %2903 = vmatpush1.bf16.msra.mxu0 %v2425
    %2904 = vmatprep.subr.bf16.mxu0 0
    %2905 = vmatpush1.bf16.msra.mxu0 %v2426
    %2906 = vmatprep.subr.bf16.mxu0 0
    %2907 = vmatpush1.bf16.msra.mxu0 %v2427
    %2908 = vmatprep.subr.bf16.mxu0 0
    %2909 = vmatpush1.bf16.msra.mxu0 %v2428
    %2910 = vmatprep.mubr.bf16.mxu0 %v1248
    %2911 = vmatmul.mubr.bf16.gmra.mrb[0].mxu0 %v1247
    %v2912 = vpop.f32.mrb[0].mxu0
    %v2913 = vadd.f32 %v2816, %v2912
    %v2914 = vpop.f32.mrb[0].mxu0
    %v2915 = vpop.f32.mrb[0].mxu0
    %v2916 = vadd.f32 %v2819, %v2915
    %v2917 = vpop.f32.mrb[0].mxu0
    %2918 = vmatprep.mubr.bf16.mxu0 %v1272
    %2919 = vmatmul.mubr.bf16.gmra.mrb[0].mxu0 %v1271
    %v2920 = vpop.f32.mrb[0].mxu0
    %v2921 = vadd.f32 %v2824, %v2920
    %v2922 = vpop.f32.mrb[0].mxu0
    %v2923 = vpop.f32.mrb[0].mxu0
    %v2924 = vadd.f32 %v2827, %v2923
    %v2925 = vpop.f32.mrb[0].mxu0
    %2926 = vmatprep.mubr.bf16.mxu0 %v1296
    %2927 = vmatmul.mubr.bf16.gmra.mrb[0].mxu0 %v1295
    %v2928 = vpop.f32.mrb[0].mxu0
    %v2929 = vadd.f32 %v2832, %v2928
    %v2930 = vpop.f32.mrb[0].mxu0
    %v2931 = vpop.f32.mrb[0].mxu0
    %v2932 = vadd.f32 %v2835, %v2931
    %v2933 = vpop.f32.mrb[0].mxu0
    %2934 = vmatprep.mubr.bf16.mxu0 %v1320
    %2935 = vmatmul.mubr.bf16.gmra.mrb[0].mxu0 %v1319
    %v2936 = vpop.f32.mrb[0].mxu0
    %v2937 = vadd.f32 %v2840, %v2936
    %v2938 = vpop.f32.mrb[0].mxu0
    %v2939 = vpop.f32.mrb[0].mxu0
    %v2940 = vadd.f32 %v2843, %v2939
    %v2941 = vpop.f32.mrb[0].mxu0
    %2942 = vmatprep.mubr.bf16.mxu0 %v1344
    %2943 = vmatmul.mubr.bf16.gmra.mrb[0].mxu0 %v1343
    %v2944 = vpop.f32.mrb[0].mxu0
    %v2945 = vadd.f32 %v2848, %v2944
    %v2946 = vpop.f32.mrb[0].mxu0
    %v2947 = vpop.f32.mrb[0].mxu0
    %v2948 = vadd.f32 %v2851, %v2947
    %v2949 = vpop.f32.mrb[0].mxu0
    %2950 = vmatprep.mubr.bf16.mxu0 %v1368
    %2951 = vmatmul.mubr.bf16.gmra.mrb[0].mxu0 %v1367
    %v2952 = vpop.f32.mrb[0].mxu0
    %v2953 = vadd.f32 %v2856, %v2952
    %v2954 = vpop.f32.mrb[0].mxu0
    %v2955 = vpop.f32.mrb[0].mxu0
    %v2956 = vadd.f32 %v2859, %v2955
    %v2957 = vpop.f32.mrb[0].mxu0
    %2958 = vmatprep.mubr.bf16.mxu0 %v1392
    %2959 = vmatmul.mubr.bf16.gmra.mrb[0].mxu0 %v1391
    %v2960 = vpop.f32.mrb[0].mxu0
    %v2961 = vadd.f32 %v2864, %v2960
    %v2962 = vpop.f32.mrb[0].mxu0
    %v2963 = vpop.f32.mrb[0].mxu0
    %v2964 = vadd.f32 %v2867, %v2963
    %v2965 = vpop.f32.mrb[0].mxu0
    %2966 = vmatprep.mubr.bf16.mxu0 %v1416
    %2967 = vmatmul.mubr.bf16.gmra.mrb[0].mxu0 %v1415
    %v2968 = vpop.f32.mrb[0].mxu0
    %v2969 = vadd.f32 %v2872, %v2968
    %v2970 = vpop.f32.mrb[0].mxu0
    %v2971 = vpop.f32.mrb[0].mxu0
    %v2972 = vadd.f32 %v2875, %v2971
    %v2973 = vpop.f32.mrb[0].mxu0
    %2974 = vdwg.mxu0
    %2975 = vmatprep.subr.bf16.mxu0 0
    %2976 = vmatpush1.bf16.msra.mxu0 %v2429
    %2977 = vmatprep.subr.bf16.mxu0 0
    %2978 = vmatpush1.bf16.msra.mxu0 %v2430
    %2979 = vmatprep.subr.bf16.mxu0 0
    %2980 = vmatpush1.bf16.msra.mxu0 %v2431
    %2981 = vmatprep.subr.bf16.mxu0 0
    %2982 = vmatpush1.bf16.msra.mxu0 %v2432
    %2983 = vmatprep.subr.bf16.mxu0 0
    %2984 = vmatpush1.bf16.msra.mxu0 %v2433
    %2985 = vmatprep.subr.bf16.mxu0 0
    %2986 = vmatpush1.bf16.msra.mxu0 %v2434
    %2987 = vmatprep.subr.bf16.mxu0 0
    %2988 = vmatpush1.bf16.msra.mxu0 %v2435
    %2989 = vmatprep.subr.bf16.mxu0 0
    %2990 = vmatpush1.bf16.msra.mxu0 %v2436
    %2991 = vmatprep.subr.bf16.mxu0 0
    %2992 = vmatpush1.bf16.msra.mxu0 %v2437
    %2993 = vmatprep.subr.bf16.mxu0 0
    %2994 = vmatpush1.bf16.msra.mxu0 %v2438
    %2995 = vmatprep.subr.bf16.mxu0 0
    %2996 = vmatpush1.bf16.msra.mxu0 %v2439
    %2997 = vmatprep.subr.bf16.mxu0 0
    %2998 = vmatpush1.bf16.msra.mxu0 %v2440
    %2999 = vmatprep.subr.bf16.mxu0 0
    %3000 = vmatpush1.bf16.msra.mxu0 %v2441
    %3001 = vmatprep.subr.bf16.mxu0 0
    %3002 = vmatpush1.bf16.msra.mxu0 %v2442
    %3003 = vmatprep.subr.bf16.mxu0 0
    %3004 = vmatpush1.bf16.msra.mxu0 %v2443
    %3005 = vmatprep.subr.bf16.mxu0 0
    %3006 = vmatpush1.bf16.msra.mxu0 %v2444
    %3007 = vmatprep.mubr.bf16.mxu0 %v1250
    %3008 = vmatmul.mubr.bf16.gmra.mrb[0].mxu0 %v1249
    %v3009 = vpop.f32.mrb[0].mxu0
    %v3010 = vadd.f32 %v2913, %v3009
    %v3011 = vpop.f32.mrb[0].mxu0
    %v3012 = vpop.f32.mrb[0].mxu0
    %v3013 = vadd.f32 %v2916, %v3012
    %v3014 = vpop.f32.mrb[0].mxu0
    %3015 = vmatprep.mubr.bf16.mxu0 %v1274
    %3016 = vmatmul.mubr.bf16.gmra.mrb[0].mxu0 %v1273
    %v3017 = vpop.f32.mrb[0].mxu0
    %v3018 = vadd.f32 %v2921, %v3017
    %v3019 = vpop.f32.mrb[0].mxu0
    %v3020 = vpop.f32.mrb[0].mxu0
    %v3021 = vadd.f32 %v2924, %v3020
    %v3022 = vpop.f32.mrb[0].mxu0
    %3023 = vmatprep.mubr.bf16.mxu0 %v1298
    %3024 = vmatmul.mubr.bf16.gmra.mrb[0].mxu0 %v1297
    %v3025 = vpop.f32.mrb[0].mxu0
    %v3026 = vadd.f32 %v2929, %v3025
    %v3027 = vpop.f32.mrb[0].mxu0
    %v3028 = vpop.f32.mrb[0].mxu0
    %v3029 = vadd.f32 %v2932, %v3028
    %v3030 = vpop.f32.mrb[0].mxu0
    %3031 = vmatprep.mubr.bf16.mxu0 %v1322
    %3032 = vmatmul.mubr.bf16.gmra.mrb[0].mxu0 %v1321
    %v3033 = vpop.f32.mrb[0].mxu0
    %v3034 = vadd.f32 %v2937, %v3033
    %v3035 = vpop.f32.mrb[0].mxu0
    %v3036 = vpop.f32.mrb[0].mxu0
    %v3037 = vadd.f32 %v2940, %v3036
    %v3038 = vpop.f32.mrb[0].mxu0
    %3039 = vmatprep.mubr.bf16.mxu0 %v1346
    %3040 = vmatmul.mubr.bf16.gmra.mrb[0].mxu0 %v1345
    %v3041 = vpop.f32.mrb[0].mxu0
    %v3042 = vadd.f32 %v2945, %v3041
    %v3043 = vpop.f32.mrb[0].mxu0
    %v3044 = vpop.f32.mrb[0].mxu0
    %v3045 = vadd.f32 %v2948, %v3044
    %v3046 = vpop.f32.mrb[0].mxu0
    %3047 = vmatprep.mubr.bf16.mxu0 %v1370
    %3048 = vmatmul.mubr.bf16.gmra.mrb[0].mxu0 %v1369
    %v3049 = vpop.f32.mrb[0].mxu0
    %v3050 = vadd.f32 %v2953, %v3049
    %v3051 = vpop.f32.mrb[0].mxu0
    %v3052 = vpop.f32.mrb[0].mxu0
    %v3053 = vadd.f32 %v2956, %v3052
    %v3054 = vpop.f32.mrb[0].mxu0
    %3055 = vmatprep.mubr.bf16.mxu0 %v1394
    %3056 = vmatmul.mubr.bf16.gmra.mrb[0].mxu0 %v1393
    %v3057 = vpop.f32.mrb[0].mxu0
    %v3058 = vadd.f32 %v2961, %v3057
    %v3059 = vpop.f32.mrb[0].mxu0
    %v3060 = vpop.f32.mrb[0].mxu0
    %v3061 = vadd.f32 %v2964, %v3060
    %v3062 = vpop.f32.mrb[0].mxu0
    %3063 = vmatprep.mubr.bf16.mxu0 %v1418
    %3064 = vmatmul.mubr.bf16.gmra.mrb[0].mxu0 %v1417
    %v3065 = vpop.f32.mrb[0].mxu0
    %v3066 = vadd.f32 %v2969, %v3065
    %v3067 = vpop.f32.mrb[0].mxu0
    %v3068 = vpop.f32.mrb[0].mxu0
    %v3069 = vadd.f32 %v2972, %v3068
    %v3070 = vpop.f32.mrb[0].mxu0
    %3071 = vdwg.mxu0
    %3072 = vmatprep.subr.bf16.mxu0 0
    %3073 = vmatpush1.bf16.msra.mxu0 %v2445
    %3074 = vmatprep.subr.bf16.mxu0 0
    %3075 = vmatpush1.bf16.msra.mxu0 %v2446
    %3076 = vmatprep.subr.bf16.mxu0 0
    %3077 = vmatpush1.bf16.msra.mxu0 %v2447
    %3078 = vmatprep.subr.bf16.mxu0 0
    %3079 = vmatpush1.bf16.msra.mxu0 %v2448
    %3080 = vmatprep.subr.bf16.mxu0 0
    %3081 = vmatpush1.bf16.msra.mxu0 %v2449
    %3082 = vmatprep.subr.bf16.mxu0 0
    %3083 = vmatpush1.bf16.msra.mxu0 %v2450
    %3084 = vmatprep.subr.bf16.mxu0 0
    %3085 = vmatpush1.bf16.msra.mxu0 %v2451
    %3086 = vmatprep.subr.bf16.mxu0 0
    %3087 = vmatpush1.bf16.msra.mxu0 %v2452
    %3088 = vmatprep.subr.bf16.mxu0 0
    %3089 = vmatpush1.bf16.msra.mxu0 %v2453
    %3090 = vmatprep.subr.bf16.mxu0 0
    %3091 = vmatpush1.bf16.msra.mxu0 %v2454
    %3092 = vmatprep.subr.bf16.mxu0 0
    %3093 = vmatpush1.bf16.msra.mxu0 %v2455
    %3094 = vmatprep.subr.bf16.mxu0 0
    %3095 = vmatpush1.bf16.msra.mxu0 %v2456
    %3096 = vmatprep.subr.bf16.mxu0 0
    %3097 = vmatpush1.bf16.msra.mxu0 %v2457
    %3098 = vmatprep.subr.bf16.mxu0 0
    %3099 = vmatpush1.bf16.msra.mxu0 %v2458
    %3100 = vmatprep.subr.bf16.mxu0 0
    %3101 = vmatpush1.bf16.msra.mxu0 %v2459
    %3102 = vmatprep.subr.bf16.mxu0 0
    %3103 = vmatpush1.bf16.msra.mxu0 %v2460
    %3104 = vmatprep.mubr.bf16.mxu0 %v1252
    %3105 = vmatmul.mubr.bf16.gmra.mrb[0].mxu0 %v1251
    %v3106 = vpop.f32.mrb[0].mxu0
    %v3107 = vadd.f32 %v3010, %v3106
    %v3108 = vpop.f32.mrb[0].mxu0
    %v3109 = vpop.f32.mrb[0].mxu0
    %v3110 = vadd.f32 %v3013, %v3109
    %v3111 = vpop.f32.mrb[0].mxu0
    %3112 = vmatprep.mubr.bf16.mxu0 %v1276
    %3113 = vmatmul.mubr.bf16.gmra.mrb[0].mxu0 %v1275
    %v3114 = vpop.f32.mrb[0].mxu0
    %v3115 = vadd.f32 %v3018, %v3114
    %v3116 = vpop.f32.mrb[0].mxu0
    %v3117 = vpop.f32.mrb[0].mxu0
    %v3118 = vadd.f32 %v3021, %v3117
    %v3119 = vpop.f32.mrb[0].mxu0
    %3120 = vmatprep.mubr.bf16.mxu0 %v1300
    %3121 = vmatmul.mubr.bf16.gmra.mrb[0].mxu0 %v1299
    %v3122 = vpop.f32.mrb[0].mxu0
    %v3123 = vadd.f32 %v3026, %v3122
    %v3124 = vpop.f32.mrb[0].mxu0
    %v3125 = vpop.f32.mrb[0].mxu0
    %v3126 = vadd.f32 %v3029, %v3125
    %v3127 = vpop.f32.mrb[0].mxu0
    %3128 = vmatprep.mubr.bf16.mxu0 %v1324
    %3129 = vmatmul.mubr.bf16.gmra.mrb[0].mxu0 %v1323
    %v3130 = vpop.f32.mrb[0].mxu0
    %v3131 = vadd.f32 %v3034, %v3130
    %v3132 = vpop.f32.mrb[0].mxu0
    %v3133 = vpop.f32.mrb[0].mxu0
    %v3134 = vadd.f32 %v3037, %v3133
    %v3135 = vpop.f32.mrb[0].mxu0
    %3136 = vmatprep.mubr.bf16.mxu0 %v1348
    %3137 = vmatmul.mubr.bf16.gmra.mrb[0].mxu0 %v1347
    %v3138 = vpop.f32.mrb[0].mxu0
    %v3139 = vadd.f32 %v3042, %v3138
    %v3140 = vpop.f32.mrb[0].mxu0
    %v3141 = vpop.f32.mrb[0].mxu0
    %v3142 = vadd.f32 %v3045, %v3141
    %v3143 = vpop.f32.mrb[0].mxu0
    %3144 = vmatprep.mubr.bf16.mxu0 %v1372
    %3145 = vmatmul.mubr.bf16.gmra.mrb[0].mxu0 %v1371
    %v3146 = vpop.f32.mrb[0].mxu0
    %v3147 = vadd.f32 %v3050, %v3146
    %v3148 = vpop.f32.mrb[0].mxu0
    %v3149 = vpop.f32.mrb[0].mxu0
    %v3150 = vadd.f32 %v3053, %v3149
    %v3151 = vpop.f32.mrb[0].mxu0
    %3152 = vmatprep.mubr.bf16.mxu0 %v1396
    %3153 = vmatmul.mubr.bf16.gmra.mrb[0].mxu0 %v1395
    %v3154 = vpop.f32.mrb[0].mxu0
    %v3155 = vadd.f32 %v3058, %v3154
    %v3156 = vpop.f32.mrb[0].mxu0
    %v3157 = vpop.f32.mrb[0].mxu0
    %v3158 = vadd.f32 %v3061, %v3157
    %v3159 = vpop.f32.mrb[0].mxu0
    %3160 = vmatprep.mubr.bf16.mxu0 %v1420
    %3161 = vmatmul.mubr.bf16.gmra.mrb[0].mxu0 %v1419
    %v3162 = vpop.f32.mrb[0].mxu0
    %v3163 = vadd.f32 %v3066, %v3162
    %v3164 = vpop.f32.mrb[0].mxu0
    %v3165 = vpop.f32.mrb[0].mxu0
    %v3166 = vadd.f32 %v3069, %v3165
    %v3167 = vpop.f32.mrb[0].mxu0
    %3168 = vdwg.mxu0
    %3169 = vmatprep.subr.bf16.mxu0 0
    %3170 = vmatpush1.bf16.msra.mxu0 %v2461
    %3171 = vmatprep.subr.bf16.mxu0 0
    %3172 = vmatpush1.bf16.msra.mxu0 %v2462
    %3173 = vmatprep.subr.bf16.mxu0 0
    %3174 = vmatpush1.bf16.msra.mxu0 %v2463
    %3175 = vmatprep.subr.bf16.mxu0 0
    %3176 = vmatpush1.bf16.msra.mxu0 %v2464
    %3177 = vmatprep.subr.bf16.mxu0 0
    %3178 = vmatpush1.bf16.msra.mxu0 %v2465
    %3179 = vmatprep.subr.bf16.mxu0 0
    %3180 = vmatpush1.bf16.msra.mxu0 %v2466
    %3181 = vmatprep.subr.bf16.mxu0 0
    %3182 = vmatpush1.bf16.msra.mxu0 %v2467
    %3183 = vmatprep.subr.bf16.mxu0 0
    %3184 = vmatpush1.bf16.msra.mxu0 %v2468
    %3185 = vmatprep.subr.bf16.mxu0 0
    %3186 = vmatpush1.bf16.msra.mxu0 %v2469
    %3187 = vmatprep.subr.bf16.mxu0 0
    %3188 = vmatpush1.bf16.msra.mxu0 %v2470
    %3189 = vmatprep.subr.bf16.mxu0 0
    %3190 = vmatpush1.bf16.msra.mxu0 %v2471
    %3191 = vmatprep.subr.bf16.mxu0 0
    %3192 = vmatpush1.bf16.msra.mxu0 %v2472
    %3193 = vmatprep.subr.bf16.mxu0 0
    %3194 = vmatpush1.bf16.msra.mxu0 %v2473
    %3195 = vmatprep.subr.bf16.mxu0 0
    %3196 = vmatpush1.bf16.msra.mxu0 %v2474
    %3197 = vmatprep.subr.bf16.mxu0 0
    %3198 = vmatpush1.bf16.msra.mxu0 %v2475
    %3199 = vmatprep.subr.bf16.mxu0 0
    %3200 = vmatpush1.bf16.msra.mxu0 %v2476
    %3201 = vmatprep.mubr.bf16.mxu0 %v1254
    %3202 = vmatmul.mubr.bf16.gmra.mrb[0].mxu0 %v1253
    %v3203 = vpop.f32.mrb[0].mxu0
    %v3204 = vadd.f32 %v3107, %v3203
    %v3205 = vpop.f32.mrb[0].mxu0
    %v3206 = vpop.f32.mrb[0].mxu0
    %v3207 = vadd.f32 %v3110, %v3206
    %v3208 = vpop.f32.mrb[0].mxu0
    %3209 = vmatprep.mubr.bf16.mxu0 %v1278
    %3210 = vmatmul.mubr.bf16.gmra.mrb[0].mxu0 %v1277
    %v3211 = vpop.f32.mrb[0].mxu0
    %v3212 = vadd.f32 %v3115, %v3211
    %v3213 = vpop.f32.mrb[0].mxu0
    %v3214 = vpop.f32.mrb[0].mxu0
    %v3215 = vadd.f32 %v3118, %v3214
    %v3216 = vpop.f32.mrb[0].mxu0
    %3217 = vmatprep.mubr.bf16.mxu0 %v1302
    %3218 = vmatmul.mubr.bf16.gmra.mrb[0].mxu0 %v1301
    %v3219 = vpop.f32.mrb[0].mxu0
    %v3220 = vadd.f32 %v3123, %v3219
    %v3221 = vpop.f32.mrb[0].mxu0
    %v3222 = vpop.f32.mrb[0].mxu0
    %v3223 = vadd.f32 %v3126, %v3222
    %v3224 = vpop.f32.mrb[0].mxu0
    %3225 = vmatprep.mubr.bf16.mxu0 %v1326
    %3226 = vmatmul.mubr.bf16.gmra.mrb[0].mxu0 %v1325
    %v3227 = vpop.f32.mrb[0].mxu0
    %v3228 = vadd.f32 %v3131, %v3227
    %v3229 = vpop.f32.mrb[0].mxu0
    %v3230 = vpop.f32.mrb[0].mxu0
    %v3231 = vadd.f32 %v3134, %v3230
    %v3232 = vpop.f32.mrb[0].mxu0
    %3233 = vmatprep.mubr.bf16.mxu0 %v1350
    %3234 = vmatmul.mubr.bf16.gmra.mrb[0].mxu0 %v1349
    %v3235 = vpop.f32.mrb[0].mxu0
    %v3236 = vadd.f32 %v3139, %v3235
    %v3237 = vpop.f32.mrb[0].mxu0
    %v3238 = vpop.f32.mrb[0].mxu0
    %v3239 = vadd.f32 %v3142, %v3238
    %v3240 = vpop.f32.mrb[0].mxu0
    %3241 = vmatprep.mubr.bf16.mxu0 %v1374
    %3242 = vmatmul.mubr.bf16.gmra.mrb[0].mxu0 %v1373
    %v3243 = vpop.f32.mrb[0].mxu0
    %v3244 = vadd.f32 %v3147, %v3243
    %v3245 = vpop.f32.mrb[0].mxu0
    %v3246 = vpop.f32.mrb[0].mxu0
    %v3247 = vadd.f32 %v3150, %v3246
    %v3248 = vpop.f32.mrb[0].mxu0
    %3249 = vmatprep.mubr.bf16.mxu0 %v1398
    %3250 = vmatmul.mubr.bf16.gmra.mrb[0].mxu0 %v1397
    %v3251 = vpop.f32.mrb[0].mxu0
    %v3252 = vadd.f32 %v3155, %v3251
    %v3253 = vpop.f32.mrb[0].mxu0
    %v3254 = vpop.f32.mrb[0].mxu0
    %v3255 = vadd.f32 %v3158, %v3254
    %v3256 = vpop.f32.mrb[0].mxu0
    %3257 = vmatprep.mubr.bf16.mxu0 %v1422
    %3258 = vmatmul.mubr.bf16.gmra.mrb[0].mxu0 %v1421
    %v3259 = vpop.f32.mrb[0].mxu0
    %v3260 = vadd.f32 %v3163, %v3259
    %v3261 = vpop.f32.mrb[0].mxu0
    %v3262 = vpop.f32.mrb[0].mxu0
    %v3263 = vadd.f32 %v3166, %v3262
    %v3264 = vpop.f32.mrb[0].mxu0
    %3265 = vdwg.mxu0
    %3266 = vmatprep.subr.bf16.mxu0 0
    %3267 = vmatpush1.bf16.msra.mxu0 %v2477
    %3268 = vmatprep.subr.bf16.mxu0 0
    %3269 = vmatpush1.bf16.msra.mxu0 %v2478
    %3270 = vmatprep.subr.bf16.mxu0 0
    %3271 = vmatpush1.bf16.msra.mxu0 %v2479
    %3272 = vmatprep.subr.bf16.mxu0 0
    %3273 = vmatpush1.bf16.msra.mxu0 %v2480
    %3274 = vmatprep.subr.bf16.mxu0 0
    %3275 = vmatpush1.bf16.msra.mxu0 %v2481
    %3276 = vmatprep.subr.bf16.mxu0 0
    %3277 = vmatpush1.bf16.msra.mxu0 %v2482
    %3278 = vmatprep.subr.bf16.mxu0 0
    %3279 = vmatpush1.bf16.msra.mxu0 %v2483
    %3280 = vmatprep.subr.bf16.mxu0 0
    %3281 = vmatpush1.bf16.msra.mxu0 %v2484
    %3282 = vmatprep.subr.bf16.mxu0 0
    %3283 = vmatpush1.bf16.msra.mxu0 %v2485
    %3284 = vmatprep.subr.bf16.mxu0 0
    %3285 = vmatpush1.bf16.msra.mxu0 %v2486
    %3286 = vmatprep.subr.bf16.mxu0 0
    %3287 = vmatpush1.bf16.msra.mxu0 %v2487
    %3288 = vmatprep.subr.bf16.mxu0 0
    %3289 = vmatpush1.bf16.msra.mxu0 %v2488
    %3290 = vmatprep.subr.bf16.mxu0 0
    %3291 = vmatpush1.bf16.msra.mxu0 %v2489
    %3292 = vmatprep.subr.bf16.mxu0 0
    %3293 = vmatpush1.bf16.msra.mxu0 %v2490
    %3294 = vmatprep.subr.bf16.mxu0 0
    %3295 = vmatpush1.bf16.msra.mxu0 %v2491
    %3296 = vmatprep.subr.bf16.mxu0 0
    %3297 = vmatpush1.bf16.msra.mxu0 %v2492
    %3298 = vmatprep.mubr.bf16.mxu0 %v1256
    %3299 = vmatmul.mubr.bf16.gmra.mrb[0].mxu0 %v1255
    %v3300 = vpop.f32.mrb[0].mxu0
    %v3301 = vadd.f32 %v3204, %v3300
    %v3302 = vpop.f32.mrb[0].mxu0
    %v3303 = vpop.f32.mrb[0].mxu0
    %v3304 = vadd.f32 %v3207, %v3303
    %v3305 = vpop.f32.mrb[0].mxu0
    %3306 = vmatprep.mubr.bf16.mxu0 %v1280
    %3307 = vmatmul.mubr.bf16.gmra.mrb[0].mxu0 %v1279
    %v3308 = vpop.f32.mrb[0].mxu0
    %v3309 = vadd.f32 %v3212, %v3308
    %v3310 = vpop.f32.mrb[0].mxu0
    %v3311 = vpop.f32.mrb[0].mxu0
    %v3312 = vadd.f32 %v3215, %v3311
    %v3313 = vpop.f32.mrb[0].mxu0
    %3314 = vmatprep.mubr.bf16.mxu0 %v1304
    %3315 = vmatmul.mubr.bf16.gmra.mrb[0].mxu0 %v1303
    %v3316 = vpop.f32.mrb[0].mxu0
    %v3317 = vadd.f32 %v3220, %v3316
    %v3318 = vpop.f32.mrb[0].mxu0
    %v3319 = vpop.f32.mrb[0].mxu0
    %v3320 = vadd.f32 %v3223, %v3319
    %v3321 = vpop.f32.mrb[0].mxu0
    %3322 = vmatprep.mubr.bf16.mxu0 %v1328
    %3323 = vmatmul.mubr.bf16.gmra.mrb[0].mxu0 %v1327
    %v3324 = vpop.f32.mrb[0].mxu0
    %v3325 = vadd.f32 %v3228, %v3324
    %v3326 = vpop.f32.mrb[0].mxu0
    %v3327 = vpop.f32.mrb[0].mxu0
    %v3328 = vadd.f32 %v3231, %v3327
    %v3329 = vpop.f32.mrb[0].mxu0
    %3330 = vmatprep.mubr.bf16.mxu0 %v1352
    %3331 = vmatmul.mubr.bf16.gmra.mrb[0].mxu0 %v1351
    %v3332 = vpop.f32.mrb[0].mxu0
    %v3333 = vadd.f32 %v3236, %v3332
    %v3334 = vpop.f32.mrb[0].mxu0
    %v3335 = vpop.f32.mrb[0].mxu0
    %v3336 = vadd.f32 %v3239, %v3335
    %v3337 = vpop.f32.mrb[0].mxu0
    %3338 = vmatprep.mubr.bf16.mxu0 %v1376
    %3339 = vmatmul.mubr.bf16.gmra.mrb[0].mxu0 %v1375
    %v3340 = vpop.f32.mrb[0].mxu0
    %v3341 = vadd.f32 %v3244, %v3340
    %v3342 = vpop.f32.mrb[0].mxu0
    %v3343 = vpop.f32.mrb[0].mxu0
    %v3344 = vadd.f32 %v3247, %v3343
    %v3345 = vpop.f32.mrb[0].mxu0
    %3346 = vmatprep.mubr.bf16.mxu0 %v1400
    %3347 = vmatmul.mubr.bf16.gmra.mrb[0].mxu0 %v1399
    %v3348 = vpop.f32.mrb[0].mxu0
    %v3349 = vadd.f32 %v3252, %v3348
    %v3350 = vpop.f32.mrb[0].mxu0
    %v3351 = vpop.f32.mrb[0].mxu0
    %v3352 = vadd.f32 %v3255, %v3351
    %v3353 = vpop.f32.mrb[0].mxu0
    %3354 = vmatprep.mubr.bf16.mxu0 %v1424
    %3355 = vmatmul.mubr.bf16.gmra.mrb[0].mxu0 %v1423
    %v3356 = vpop.f32.mrb[0].mxu0
    %v3357 = vadd.f32 %v3260, %v3356
    %v3358 = vpop.f32.mrb[0].mxu0
    %v3359 = vpop.f32.mrb[0].mxu0
    %v3360 = vadd.f32 %v3263, %v3359
    %v3361 = vpop.f32.mrb[0].mxu0
    %3362 = vdwg.mxu0
    %3363 = vmatprep.subr.bf16.mxu0 0
    %3364 = vmatpush1.bf16.msra.mxu0 %v2493
    %3365 = vmatprep.subr.bf16.mxu0 0
    %3366 = vmatpush1.bf16.msra.mxu0 %v2494
    %3367 = vmatprep.subr.bf16.mxu0 0
    %3368 = vmatpush1.bf16.msra.mxu0 %v2495
    %3369 = vmatprep.subr.bf16.mxu0 0
    %3370 = vmatpush1.bf16.msra.mxu0 %v2496
    %3371 = vmatprep.subr.bf16.mxu0 0
    %3372 = vmatpush1.bf16.msra.mxu0 %v2497
    %3373 = vmatprep.subr.bf16.mxu0 0
    %3374 = vmatpush1.bf16.msra.mxu0 %v2498
    %3375 = vmatprep.subr.bf16.mxu0 0
    %3376 = vmatpush1.bf16.msra.mxu0 %v2499
    %3377 = vmatprep.subr.bf16.mxu0 0
    %3378 = vmatpush1.bf16.msra.mxu0 %v2500
    %3379 = vmatprep.subr.bf16.mxu0 0
    %3380 = vmatpush1.bf16.msra.mxu0 %v2501
    %3381 = vmatprep.subr.bf16.mxu0 0
    %3382 = vmatpush1.bf16.msra.mxu0 %v2502
    %3383 = vmatprep.subr.bf16.mxu0 0
    %3384 = vmatpush1.bf16.msra.mxu0 %v2503
    %3385 = vmatprep.subr.bf16.mxu0 0
    %3386 = vmatpush1.bf16.msra.mxu0 %v2504
    %3387 = vmatprep.subr.bf16.mxu0 0
    %3388 = vmatpush1.bf16.msra.mxu0 %v2505
    %3389 = vmatprep.subr.bf16.mxu0 0
    %3390 = vmatpush1.bf16.msra.mxu0 %v2506
    %3391 = vmatprep.subr.bf16.mxu0 0
    %3392 = vmatpush1.bf16.msra.mxu0 %v2507
    %3393 = vmatprep.subr.bf16.mxu0 0
    %3394 = vmatpush1.bf16.msra.mxu0 %v2508
    %3395 = vmatprep.mubr.bf16.mxu0 %v1258
    %3396 = vmatmul.mubr.bf16.gmra.mrb[0].mxu0 %v1257
    %v3397 = vpop.f32.mrb[0].mxu0
    %v3398 = vadd.f32 %v3301, %v3397
    %v3399 = vpop.f32.mrb[0].mxu0
    %v3400 = vpop.f32.mrb[0].mxu0
    %v3401 = vadd.f32 %v3304, %v3400
    %v3402 = vpop.f32.mrb[0].mxu0
    %3403 = vmatprep.mubr.bf16.mxu0 %v1282
    %3404 = vmatmul.mubr.bf16.gmra.mrb[0].mxu0 %v1281
    %v3405 = vpop.f32.mrb[0].mxu0
    %v3406 = vadd.f32 %v3309, %v3405
    %v3407 = vpop.f32.mrb[0].mxu0
    %v3408 = vpop.f32.mrb[0].mxu0
    %v3409 = vadd.f32 %v3312, %v3408
    %v3410 = vpop.f32.mrb[0].mxu0
    %3411 = vmatprep.mubr.bf16.mxu0 %v1306
    %3412 = vmatmul.mubr.bf16.gmra.mrb[0].mxu0 %v1305
    %v3413 = vpop.f32.mrb[0].mxu0
    %v3414 = vadd.f32 %v3317, %v3413
    %v3415 = vpop.f32.mrb[0].mxu0
    %v3416 = vpop.f32.mrb[0].mxu0
    %v3417 = vadd.f32 %v3320, %v3416
    %v3418 = vpop.f32.mrb[0].mxu0
    %3419 = vmatprep.mubr.bf16.mxu0 %v1330
    %3420 = vmatmul.mubr.bf16.gmra.mrb[0].mxu0 %v1329
    %v3421 = vpop.f32.mrb[0].mxu0
    %v3422 = vadd.f32 %v3325, %v3421
    %v3423 = vpop.f32.mrb[0].mxu0
    %v3424 = vpop.f32.mrb[0].mxu0
    %v3425 = vadd.f32 %v3328, %v3424
    %v3426 = vpop.f32.mrb[0].mxu0
    %3427 = vmatprep.mubr.bf16.mxu0 %v1354
    %3428 = vmatmul.mubr.bf16.gmra.mrb[0].mxu0 %v1353
    %v3429 = vpop.f32.mrb[0].mxu0
    %v3430 = vadd.f32 %v3333, %v3429
    %v3431 = vpop.f32.mrb[0].mxu0
    %v3432 = vpop.f32.mrb[0].mxu0
    %v3433 = vadd.f32 %v3336, %v3432
    %v3434 = vpop.f32.mrb[0].mxu0
    %3435 = vmatprep.mubr.bf16.mxu0 %v1378
    %3436 = vmatmul.mubr.bf16.gmra.mrb[0].mxu0 %v1377
    %v3437 = vpop.f32.mrb[0].mxu0
    %v3438 = vadd.f32 %v3341, %v3437
    %v3439 = vpop.f32.mrb[0].mxu0
    %v3440 = vpop.f32.mrb[0].mxu0
    %v3441 = vadd.f32 %v3344, %v3440
    %v3442 = vpop.f32.mrb[0].mxu0
    %3443 = vmatprep.mubr.bf16.mxu0 %v1402
    %3444 = vmatmul.mubr.bf16.gmra.mrb[0].mxu0 %v1401
    %v3445 = vpop.f32.mrb[0].mxu0
    %v3446 = vadd.f32 %v3349, %v3445
    %v3447 = vpop.f32.mrb[0].mxu0
    %v3448 = vpop.f32.mrb[0].mxu0
    %v3449 = vadd.f32 %v3352, %v3448
    %v3450 = vpop.f32.mrb[0].mxu0
    %3451 = vmatprep.mubr.bf16.mxu0 %v1426
    %3452 = vmatmul.mubr.bf16.gmra.mrb[0].mxu0 %v1425
    %v3453 = vpop.f32.mrb[0].mxu0
    %v3454 = vadd.f32 %v3357, %v3453
    %v3455 = vpop.f32.mrb[0].mxu0
    %v3456 = vpop.f32.mrb[0].mxu0
    %v3457 = vadd.f32 %v3360, %v3456
    %v3458 = vpop.f32.mrb[0].mxu0
    %3459 = vdwg.mxu0
    %3460 = vmatprep.subr.bf16.mxu0 0
    %3461 = vmatpush1.bf16.msra.mxu0 %v2509
    %3462 = vmatprep.subr.bf16.mxu0 0
    %3463 = vmatpush1.bf16.msra.mxu0 %v2510
    %3464 = vmatprep.subr.bf16.mxu0 0
    %3465 = vmatpush1.bf16.msra.mxu0 %v2511
    %3466 = vmatprep.subr.bf16.mxu0 0
    %3467 = vmatpush1.bf16.msra.mxu0 %v2512
    %3468 = vmatprep.subr.bf16.mxu0 0
    %3469 = vmatpush1.bf16.msra.mxu0 %v2513
    %3470 = vmatprep.subr.bf16.mxu0 0
    %3471 = vmatpush1.bf16.msra.mxu0 %v2514
    %3472 = vmatprep.subr.bf16.mxu0 0
    %3473 = vmatpush1.bf16.msra.mxu0 %v2515
    %3474 = vmatprep.subr.bf16.mxu0 0
    %3475 = vmatpush1.bf16.msra.mxu0 %v2516
    %3476 = vmatprep.subr.bf16.mxu0 0
    %3477 = vmatpush1.bf16.msra.mxu0 %v2517
    %3478 = vmatprep.subr.bf16.mxu0 0
    %3479 = vmatpush1.bf16.msra.mxu0 %v2518
    %3480 = vmatprep.subr.bf16.mxu0 0
    %3481 = vmatpush1.bf16.msra.mxu0 %v2519
    %3482 = vmatprep.subr.bf16.mxu0 0
    %3483 = vmatpush1.bf16.msra.mxu0 %v2520
    %3484 = vmatprep.subr.bf16.mxu0 0
    %3485 = vmatpush1.bf16.msra.mxu0 %v2521
    %3486 = vmatprep.subr.bf16.mxu0 0
    %3487 = vmatpush1.bf16.msra.mxu0 %v2522
    %3488 = vmatprep.subr.bf16.mxu0 0
    %3489 = vmatpush1.bf16.msra.mxu0 %v2523
    %3490 = vmatprep.subr.bf16.mxu0 0
    %3491 = vmatpush1.bf16.msra.mxu0 %v2524
    %3492 = vmatprep.mubr.bf16.mxu0 %v1260
    %3493 = vmatmul.mubr.bf16.gmra.mrb[0].mxu0 %v1259
    %v3494 = vpop.f32.mrb[0].mxu0
    %v3495 = vadd.f32 %v3398, %v3494
    %v3496 = vpop.f32.mrb[0].mxu0
    %v3497 = vpop.f32.mrb[0].mxu0
    %v3498 = vadd.f32 %v3401, %v3497
    %v3499 = vpop.f32.mrb[0].mxu0
    %3500 = vmatprep.mubr.bf16.mxu0 %v1284
    %3501 = vmatmul.mubr.bf16.gmra.mrb[0].mxu0 %v1283
    %v3502 = vpop.f32.mrb[0].mxu0
    %v3503 = vadd.f32 %v3406, %v3502
    %v3504 = vpop.f32.mrb[0].mxu0
    %v3505 = vpop.f32.mrb[0].mxu0
    %v3506 = vadd.f32 %v3409, %v3505
    %v3507 = vpop.f32.mrb[0].mxu0
    %3508 = vmatprep.mubr.bf16.mxu0 %v1308
    %3509 = vmatmul.mubr.bf16.gmra.mrb[0].mxu0 %v1307
    %v3510 = vpop.f32.mrb[0].mxu0
    %v3511 = vadd.f32 %v3414, %v3510
    %v3512 = vpop.f32.mrb[0].mxu0
    %v3513 = vpop.f32.mrb[0].mxu0
    %v3514 = vadd.f32 %v3417, %v3513
    %v3515 = vpop.f32.mrb[0].mxu0
    %3516 = vmatprep.mubr.bf16.mxu0 %v1332
    %3517 = vmatmul.mubr.bf16.gmra.mrb[0].mxu0 %v1331
    %v3518 = vpop.f32.mrb[0].mxu0
    %v3519 = vadd.f32 %v3422, %v3518
    %v3520 = vpop.f32.mrb[0].mxu0
    %v3521 = vpop.f32.mrb[0].mxu0
    %v3522 = vadd.f32 %v3425, %v3521
    %v3523 = vpop.f32.mrb[0].mxu0
    %3524 = vmatprep.mubr.bf16.mxu0 %v1356
    %3525 = vmatmul.mubr.bf16.gmra.mrb[0].mxu0 %v1355
    %v3526 = vpop.f32.mrb[0].mxu0
    %v3527 = vadd.f32 %v3430, %v3526
    %v3528 = vpop.f32.mrb[0].mxu0
    %v3529 = vpop.f32.mrb[0].mxu0
    %v3530 = vadd.f32 %v3433, %v3529
    %v3531 = vpop.f32.mrb[0].mxu0
    %3532 = vmatprep.mubr.bf16.mxu0 %v1380
    %3533 = vmatmul.mubr.bf16.gmra.mrb[0].mxu0 %v1379
    %v3534 = vpop.f32.mrb[0].mxu0
    %v3535 = vadd.f32 %v3438, %v3534
    %v3536 = vpop.f32.mrb[0].mxu0
    %v3537 = vpop.f32.mrb[0].mxu0
    %v3538 = vadd.f32 %v3441, %v3537
    %v3539 = vpop.f32.mrb[0].mxu0
    %3540 = vmatprep.mubr.bf16.mxu0 %v1404
    %3541 = vmatmul.mubr.bf16.gmra.mrb[0].mxu0 %v1403
    %v3542 = vpop.f32.mrb[0].mxu0
    %v3543 = vadd.f32 %v3446, %v3542
    %v3544 = vpop.f32.mrb[0].mxu0
    %v3545 = vpop.f32.mrb[0].mxu0
    %v3546 = vadd.f32 %v3449, %v3545
    %v3547 = vpop.f32.mrb[0].mxu0
    %3548 = vmatprep.mubr.bf16.mxu0 %v1428
    %3549 = vmatmul.mubr.bf16.gmra.mrb[0].mxu0 %v1427
    %v3550 = vpop.f32.mrb[0].mxu0
    %v3551 = vadd.f32 %v3454, %v3550
    %v3552 = vpop.f32.mrb[0].mxu0
    %v3553 = vpop.f32.mrb[0].mxu0
    %v3554 = vadd.f32 %v3457, %v3553
    %v3555 = vpop.f32.mrb[0].mxu0
    %3556 = vdwg.mxu0
    %3557 = vmatprep.subr.bf16.mxu0 0
    %3558 = vmatpush1.bf16.msra.mxu0 %v2525
    %3559 = vmatprep.subr.bf16.mxu0 0
    %3560 = vmatpush1.bf16.msra.mxu0 %v2526
    %3561 = vmatprep.subr.bf16.mxu0 0
    %3562 = vmatpush1.bf16.msra.mxu0 %v2527
    %3563 = vmatprep.subr.bf16.mxu0 0
    %3564 = vmatpush1.bf16.msra.mxu0 %v2528
    %3565 = vmatprep.subr.bf16.mxu0 0
    %3566 = vmatpush1.bf16.msra.mxu0 %v2529
    %3567 = vmatprep.subr.bf16.mxu0 0
    %3568 = vmatpush1.bf16.msra.mxu0 %v2530
    %3569 = vmatprep.subr.bf16.mxu0 0
    %3570 = vmatpush1.bf16.msra.mxu0 %v2531
    %3571 = vmatprep.subr.bf16.mxu0 0
    %3572 = vmatpush1.bf16.msra.mxu0 %v2532
    %3573 = vmatprep.subr.bf16.mxu0 0
    %3574 = vmatpush1.bf16.msra.mxu0 %v2533
    %3575 = vmatprep.subr.bf16.mxu0 0
    %3576 = vmatpush1.bf16.msra.mxu0 %v2534
    %3577 = vmatprep.subr.bf16.mxu0 0
    %3578 = vmatpush1.bf16.msra.mxu0 %v2535
    %3579 = vmatprep.subr.bf16.mxu0 0
    %3580 = vmatpush1.bf16.msra.mxu0 %v2536
    %3581 = vmatprep.subr.bf16.mxu0 0
    %3582 = vmatpush1.bf16.msra.mxu0 %v2537
    %3583 = vmatprep.subr.bf16.mxu0 0
    %3584 = vmatpush1.bf16.msra.mxu0 %v2538
    %3585 = vmatprep.subr.bf16.mxu0 0
    %3586 = vmatpush1.bf16.msra.mxu0 %v2539
    %3587 = vmatprep.subr.bf16.mxu0 0
    %3588 = vmatpush1.bf16.msra.mxu0 %v2540
    %3589 = vmatprep.mubr.bf16.mxu0 %v1262
    %3590 = vmatmul.mubr.bf16.gmra.mrb[0].mxu0 %v1261
    %v3591 = vpop.f32.mrb[0].mxu0
    %v3592 = vadd.f32 %v3495, %v3591
    %v3593 = vpop.f32.mrb[0].mxu0
    %v3594 = vpop.f32.mrb[0].mxu0
    %v3595 = vadd.f32 %v3498, %v3594
    %v3596 = vpop.f32.mrb[0].mxu0
    %3597 = vmatprep.mubr.bf16.mxu0 %v1286
    %3598 = vmatmul.mubr.bf16.gmra.mrb[0].mxu0 %v1285
    %v3599 = vpop.f32.mrb[0].mxu0
    %v3600 = vadd.f32 %v3503, %v3599
    %v3601 = vpop.f32.mrb[0].mxu0
    %v3602 = vpop.f32.mrb[0].mxu0
    %v3603 = vadd.f32 %v3506, %v3602
    %v3604 = vpop.f32.mrb[0].mxu0
    %3605 = vmatprep.mubr.bf16.mxu0 %v1310
    %3606 = vmatmul.mubr.bf16.gmra.mrb[0].mxu0 %v1309
    %v3607 = vpop.f32.mrb[0].mxu0
    %v3608 = vadd.f32 %v3511, %v3607
    %v3609 = vpop.f32.mrb[0].mxu0
    %v3610 = vpop.f32.mrb[0].mxu0
    %v3611 = vadd.f32 %v3514, %v3610
    %v3612 = vpop.f32.mrb[0].mxu0
    %3613 = vmatprep.mubr.bf16.mxu0 %v1334
    %3614 = vmatmul.mubr.bf16.gmra.mrb[0].mxu0 %v1333
    %v3615 = vpop.f32.mrb[0].mxu0
    %v3616 = vadd.f32 %v3519, %v3615
    %v3617 = vpop.f32.mrb[0].mxu0
    %v3618 = vpop.f32.mrb[0].mxu0
    %v3619 = vadd.f32 %v3522, %v3618
    %v3620 = vpop.f32.mrb[0].mxu0
    %3621 = vmatprep.mubr.bf16.mxu0 %v1358
    %3622 = vmatmul.mubr.bf16.gmra.mrb[0].mxu0 %v1357
    %v3623 = vpop.f32.mrb[0].mxu0
    %v3624 = vadd.f32 %v3527, %v3623
    %v3625 = vpop.f32.mrb[0].mxu0
    %v3626 = vpop.f32.mrb[0].mxu0
    %v3627 = vadd.f32 %v3530, %v3626
    %v3628 = vpop.f32.mrb[0].mxu0
    %3629 = vmatprep.mubr.bf16.mxu0 %v1382
    %3630 = vmatmul.mubr.bf16.gmra.mrb[0].mxu0 %v1381
    %v3631 = vpop.f32.mrb[0].mxu0
    %v3632 = vadd.f32 %v3535, %v3631
    %v3633 = vpop.f32.mrb[0].mxu0
    %v3634 = vpop.f32.mrb[0].mxu0
    %v3635 = vadd.f32 %v3538, %v3634
    %v3636 = vpop.f32.mrb[0].mxu0
    %3637 = vmatprep.mubr.bf16.mxu0 %v1406
    %3638 = vmatmul.mubr.bf16.gmra.mrb[0].mxu0 %v1405
    %v3639 = vpop.f32.mrb[0].mxu0
    %v3640 = vadd.f32 %v3543, %v3639
    %v3641 = vpop.f32.mrb[0].mxu0
    %v3642 = vpop.f32.mrb[0].mxu0
    %v3643 = vadd.f32 %v3546, %v3642
    %v3644 = vpop.f32.mrb[0].mxu0
    %3645 = vmatprep.mubr.bf16.mxu0 %v1430
    %3646 = vmatmul.mubr.bf16.gmra.mrb[0].mxu0 %v1429
    %v3647 = vpop.f32.mrb[0].mxu0
    %v3648 = vadd.f32 %v3551, %v3647
    %v3649 = vpop.f32.mrb[0].mxu0
    %v3650 = vpop.f32.mrb[0].mxu0
    %v3651 = vadd.f32 %v3554, %v3650
    %v3652 = vpop.f32.mrb[0].mxu0
    %3653 = vdwg.mxu0
    %3654 = vmatprep.subr.bf16.mxu0 0
    %3655 = vmatpush1.bf16.msra.mxu0 %v2541
    %3656 = vmatprep.subr.bf16.mxu0 0
    %3657 = vmatpush1.bf16.msra.mxu0 %v2542
    %3658 = vmatprep.subr.bf16.mxu0 0
    %3659 = vmatpush1.bf16.msra.mxu0 %v2543
    %3660 = vmatprep.subr.bf16.mxu0 0
    %3661 = vmatpush1.bf16.msra.mxu0 %v2544
    %3662 = vmatprep.subr.bf16.mxu0 0
    %3663 = vmatpush1.bf16.msra.mxu0 %v2545
    %3664 = vmatprep.subr.bf16.mxu0 0
    %3665 = vmatpush1.bf16.msra.mxu0 %v2546
    %3666 = vmatprep.subr.bf16.mxu0 0
    %3667 = vmatpush1.bf16.msra.mxu0 %v2547
    %3668 = vmatprep.subr.bf16.mxu0 0
    %3669 = vmatpush1.bf16.msra.mxu0 %v2548
    %3670 = vmatprep.subr.bf16.mxu0 0
    %3671 = vmatpush1.bf16.msra.mxu0 %v2549
    %3672 = vmatprep.subr.bf16.mxu0 0
    %3673 = vmatpush1.bf16.msra.mxu0 %v2550
    %3674 = vmatprep.subr.bf16.mxu0 0
    %3675 = vmatpush1.bf16.msra.mxu0 %v2551
    %3676 = vmatprep.subr.bf16.mxu0 0
    %3677 = vmatpush1.bf16.msra.mxu0 %v2552
    %3678 = vmatprep.subr.bf16.mxu0 0
    %3679 = vmatpush1.bf16.msra.mxu0 %v2553
    %3680 = vmatprep.subr.bf16.mxu0 0
    %3681 = vmatpush1.bf16.msra.mxu0 %v2554
    %3682 = vmatprep.subr.bf16.mxu0 0
    %3683 = vmatpush1.bf16.msra.mxu0 %v2555
    %3684 = vmatprep.subr.bf16.mxu0 0
    %3685 = vmatpush1.bf16.msra.mxu0 %v2556
    %3686 = vmatprep.mubr.bf16.mxu0 %v1264
    %3687 = vmatmul.mubr.bf16.gmra.mrb[0].mxu0 %v1263
    %v3688 = vpop.f32.mrb[0].mxu0
    %v3689 = vadd.f32 %v3592, %v3688
    %v3690 = vpop.f32.mrb[0].mxu0
    %v3691 = vpop.f32.mrb[0].mxu0
    %v3692 = vadd.f32 %v3595, %v3691
    %v3693 = vpop.f32.mrb[0].mxu0
    %3694 = vmatprep.mubr.bf16.mxu0 %v1288
    %3695 = vmatmul.mubr.bf16.gmra.mrb[0].mxu0 %v1287
    %v3696 = vpop.f32.mrb[0].mxu0
    %v3697 = vadd.f32 %v3600, %v3696
    %v3698 = vpop.f32.mrb[0].mxu0
    %v3699 = vpop.f32.mrb[0].mxu0
    %v3700 = vadd.f32 %v3603, %v3699
    %v3701 = vpop.f32.mrb[0].mxu0
    %3702 = vmatprep.mubr.bf16.mxu0 %v1312
    %3703 = vmatmul.mubr.bf16.gmra.mrb[0].mxu0 %v1311
    %v3704 = vpop.f32.mrb[0].mxu0
    %v3705 = vadd.f32 %v3608, %v3704
    %v3706 = vpop.f32.mrb[0].mxu0
    %v3707 = vpop.f32.mrb[0].mxu0
    %v3708 = vadd.f32 %v3611, %v3707
    %v3709 = vpop.f32.mrb[0].mxu0
    %3710 = vmatprep.mubr.bf16.mxu0 %v1336
    %3711 = vmatmul.mubr.bf16.gmra.mrb[0].mxu0 %v1335
    %v3712 = vpop.f32.mrb[0].mxu0
    %v3713 = vadd.f32 %v3616, %v3712
    %v3714 = vpop.f32.mrb[0].mxu0
    %v3715 = vpop.f32.mrb[0].mxu0
    %v3716 = vadd.f32 %v3619, %v3715
    %v3717 = vpop.f32.mrb[0].mxu0
    %3718 = vmatprep.mubr.bf16.mxu0 %v1360
    %3719 = vmatmul.mubr.bf16.gmra.mrb[0].mxu0 %v1359
    %v3720 = vpop.f32.mrb[0].mxu0
    %v3721 = vadd.f32 %v3624, %v3720
    %v3722 = vpop.f32.mrb[0].mxu0
    %v3723 = vpop.f32.mrb[0].mxu0
    %v3724 = vadd.f32 %v3627, %v3723
    %v3725 = vpop.f32.mrb[0].mxu0
    %3726 = vmatprep.mubr.bf16.mxu0 %v1384
    %3727 = vmatmul.mubr.bf16.gmra.mrb[0].mxu0 %v1383
    %v3728 = vpop.f32.mrb[0].mxu0
    %v3729 = vadd.f32 %v3632, %v3728
    %v3730 = vpop.f32.mrb[0].mxu0
    %v3731 = vpop.f32.mrb[0].mxu0
    %v3732 = vadd.f32 %v3635, %v3731
    %v3733 = vpop.f32.mrb[0].mxu0
    %3734 = vmatprep.mubr.bf16.mxu0 %v1408
    %3735 = vmatmul.mubr.bf16.gmra.mrb[0].mxu0 %v1407
    %v3736 = vpop.f32.mrb[0].mxu0
    %v3737 = vadd.f32 %v3640, %v3736
    %v3738 = vpop.f32.mrb[0].mxu0
    %v3739 = vpop.f32.mrb[0].mxu0
    %v3740 = vadd.f32 %v3643, %v3739
    %v3741 = vpop.f32.mrb[0].mxu0
    %3742 = vmatprep.mubr.bf16.mxu0 %v1432
    %3743 = vmatmul.mubr.bf16.gmra.mrb[0].mxu0 %v1431
    %v3744 = vpop.f32.mrb[0].mxu0
    %v3745 = vadd.f32 %v3648, %v3744
    %v3746 = vpop.f32.mrb[0].mxu0
    %v3747 = vpop.f32.mrb[0].mxu0
    %v3748 = vadd.f32 %v3651, %v3747
    %v3749 = vpop.f32.mrb[0].mxu0
    %3750 = vdwg.mxu0
    %3751 = vmatprep.subr.bf16.mxu0 0
    %3752 = vmatpush1.bf16.msra.mxu0 %v2557
    %3753 = vmatprep.subr.bf16.mxu0 0
    %3754 = vmatpush1.bf16.msra.mxu0 %v2558
    %3755 = vmatprep.subr.bf16.mxu0 0
    %3756 = vmatpush1.bf16.msra.mxu0 %v2559
    %3757 = vmatprep.subr.bf16.mxu0 0
    %3758 = vmatpush1.bf16.msra.mxu0 %v2560
    %3759 = vmatprep.subr.bf16.mxu0 0
    %3760 = vmatpush1.bf16.msra.mxu0 %v2561
    %3761 = vmatprep.subr.bf16.mxu0 0
    %3762 = vmatpush1.bf16.msra.mxu0 %v2562
    %3763 = vmatprep.subr.bf16.mxu0 0
    %3764 = vmatpush1.bf16.msra.mxu0 %v2563
    %3765 = vmatprep.subr.bf16.mxu0 0
    %3766 = vmatpush1.bf16.msra.mxu0 %v2564
    %3767 = vmatprep.subr.bf16.mxu0 0
    %3768 = vmatpush1.bf16.msra.mxu0 %v2565
    %3769 = vmatprep.subr.bf16.mxu0 0
    %3770 = vmatpush1.bf16.msra.mxu0 %v2566
    %3771 = vmatprep.subr.bf16.mxu0 0
    %3772 = vmatpush1.bf16.msra.mxu0 %v2567
    %3773 = vmatprep.subr.bf16.mxu0 0
    %3774 = vmatpush1.bf16.msra.mxu0 %v2568
    %3775 = vmatprep.subr.bf16.mxu0 0
    %3776 = vmatpush1.bf16.msra.mxu0 %v2569
    %3777 = vmatprep.subr.bf16.mxu0 0
    %3778 = vmatpush1.bf16.msra.mxu0 %v2570
    %3779 = vmatprep.subr.bf16.mxu0 0
    %3780 = vmatpush1.bf16.msra.mxu0 %v2571
    %3781 = vmatprep.subr.bf16.mxu0 0
    %3782 = vmatpush1.bf16.msra.mxu0 %v2572
    %3783 = vmatprep.mubr.bf16.mxu0 %v1266
    %3784 = vmatmul.mubr.bf16.gmra.mrb[0].mxu0 %v1265
    %v3785 = vpop.f32.mrb[0].mxu0
    %v3786 = vadd.f32 %v3689, %v3785
    %v3787 = vpop.f32.mrb[0].mxu0
    %v3788 = vpop.f32.mrb[0].mxu0
    %v3789 = vadd.f32 %v3692, %v3788
    %v3790 = vpop.f32.mrb[0].mxu0
    %3791 = vmatprep.mubr.bf16.mxu0 %v1290
    %3792 = vmatmul.mubr.bf16.gmra.mrb[0].mxu0 %v1289
    %v3793 = vpop.f32.mrb[0].mxu0
    %v3794 = vadd.f32 %v3697, %v3793
    %v3795 = vpop.f32.mrb[0].mxu0
    %v3796 = vpop.f32.mrb[0].mxu0
    %v3797 = vadd.f32 %v3700, %v3796
    %v3798 = vpop.f32.mrb[0].mxu0
    %3799 = vmatprep.mubr.bf16.mxu0 %v1314
    %3800 = vmatmul.mubr.bf16.gmra.mrb[0].mxu0 %v1313
    %v3801 = vpop.f32.mrb[0].mxu0
    %v3802 = vadd.f32 %v3705, %v3801
    %v3803 = vpop.f32.mrb[0].mxu0
    %v3804 = vpop.f32.mrb[0].mxu0
    %v3805 = vadd.f32 %v3708, %v3804
    %v3806 = vpop.f32.mrb[0].mxu0
    %3807 = vmatprep.mubr.bf16.mxu0 %v1338
    %3808 = vmatmul.mubr.bf16.gmra.mrb[0].mxu0 %v1337
    %v3809 = vpop.f32.mrb[0].mxu0
    %v3810 = vadd.f32 %v3713, %v3809
    %v3811 = vpop.f32.mrb[0].mxu0
    %v3812 = vpop.f32.mrb[0].mxu0
    %v3813 = vadd.f32 %v3716, %v3812
    %v3814 = vpop.f32.mrb[0].mxu0
    %3815 = vmatprep.mubr.bf16.mxu0 %v1362
    %3816 = vmatmul.mubr.bf16.gmra.mrb[0].mxu0 %v1361
    %v3817 = vpop.f32.mrb[0].mxu0
    %v3818 = vadd.f32 %v3721, %v3817
    %v3819 = vpop.f32.mrb[0].mxu0
    %v3820 = vpop.f32.mrb[0].mxu0
    %v3821 = vadd.f32 %v3724, %v3820
    %v3822 = vpop.f32.mrb[0].mxu0
    %3823 = vmatprep.mubr.bf16.mxu0 %v1386
    %3824 = vmatmul.mubr.bf16.gmra.mrb[0].mxu0 %v1385
    %v3825 = vpop.f32.mrb[0].mxu0
    %v3826 = vadd.f32 %v3729, %v3825
    %v3827 = vpop.f32.mrb[0].mxu0
    %v3828 = vpop.f32.mrb[0].mxu0
    %v3829 = vadd.f32 %v3732, %v3828
    %v3830 = vpop.f32.mrb[0].mxu0
    %3831 = vmatprep.mubr.bf16.mxu0 %v1410
    %3832 = vmatmul.mubr.bf16.gmra.mrb[0].mxu0 %v1409
    %v3833 = vpop.f32.mrb[0].mxu0
    %v3834 = vadd.f32 %v3737, %v3833
    %v3835 = vpop.f32.mrb[0].mxu0
    %v3836 = vpop.f32.mrb[0].mxu0
    %v3837 = vadd.f32 %v3740, %v3836
    %v3838 = vpop.f32.mrb[0].mxu0
    %3839 = vmatprep.mubr.bf16.mxu0 %v1434
    %3840 = vmatmul.mubr.bf16.gmra.mrb[0].mxu0 %v1433
    %v3841 = vpop.f32.mrb[0].mxu0
    %v3842 = vadd.f32 %v3745, %v3841
    %v3843 = vpop.f32.mrb[0].mxu0
    %v3844 = vpop.f32.mrb[0].mxu0
    %v3845 = vadd.f32 %v3748, %v3844
    %v3846 = vpop.f32.mrb[0].mxu0
    %3847 = vdwg.mxu0
    %3848 = vmatprep.subr.bf16.mxu0 0
    %3849 = vmatpush1.bf16.msra.mxu0 %v2573
    %3850 = vmatprep.subr.bf16.mxu0 0
    %3851 = vmatpush1.bf16.msra.mxu0 %v2574
    %3852 = vmatprep.subr.bf16.mxu0 0
    %3853 = vmatpush1.bf16.msra.mxu0 %v2575
    %3854 = vmatprep.subr.bf16.mxu0 0
    %3855 = vmatpush1.bf16.msra.mxu0 %v2576
    %3856 = vmatprep.subr.bf16.mxu0 0
    %3857 = vmatpush1.bf16.msra.mxu0 %v2577
    %3858 = vmatprep.subr.bf16.mxu0 0
    %3859 = vmatpush1.bf16.msra.mxu0 %v2578
    %3860 = vmatprep.subr.bf16.mxu0 0
    %3861 = vmatpush1.bf16.msra.mxu0 %v2579
    %3862 = vmatprep.subr.bf16.mxu0 0
    %3863 = vmatpush1.bf16.msra.mxu0 %v2580
    %3864 = vmatprep.subr.bf16.mxu0 0
    %3865 = vmatpush1.bf16.msra.mxu0 %v2581
    %3866 = vmatprep.subr.bf16.mxu0 0
    %3867 = vmatpush1.bf16.msra.mxu0 %v2582
    %3868 = vmatprep.subr.bf16.mxu0 0
    %3869 = vmatpush1.bf16.msra.mxu0 %v2583
    %3870 = vmatprep.subr.bf16.mxu0 0
    %3871 = vmatpush1.bf16.msra.mxu0 %v2584
    %3872 = vmatprep.subr.bf16.mxu0 0
    %3873 = vmatpush1.bf16.msra.mxu0 %v2585
    %3874 = vmatprep.subr.bf16.mxu0 0
    %3875 = vmatpush1.bf16.msra.mxu0 %v2586
    %3876 = vmatprep.subr.bf16.mxu0 0
    %3877 = vmatpush1.bf16.msra.mxu0 %v2587
    %3878 = vmatprep.subr.bf16.mxu0 0
    %3879 = vmatpush1.bf16.msra.mxu0 %v2588
    %3880 = vmatprep.mubr.bf16.mxu0 %v1268
    %3881 = vmatmul.mubr.bf16.gmra.mrb[0].mxu0 %v1267
    %v3882 = vpop.f32.mrb[0].mxu0
    %v3883 = vadd.f32 %v3786, %v3882
    %v3884 = vpop.f32.mrb[0].mxu0
    %v3885 = vpop.f32.mrb[0].mxu0
    %v3886 = vadd.f32 %v3789, %v3885
    %v3887 = vpop.f32.mrb[0].mxu0
    %3888 = vmatprep.mubr.bf16.mxu0 %v1292
    %3889 = vmatmul.mubr.bf16.gmra.mrb[0].mxu0 %v1291
    %v3890 = vpop.f32.mrb[0].mxu0
    %v3891 = vadd.f32 %v3794, %v3890
    %v3892 = vpop.f32.mrb[0].mxu0
    %v3893 = vpop.f32.mrb[0].mxu0
    %v3894 = vadd.f32 %v3797, %v3893
    %v3895 = vpop.f32.mrb[0].mxu0
    %3896 = vmatprep.mubr.bf16.mxu0 %v1316
    %3897 = vmatmul.mubr.bf16.gmra.mrb[0].mxu0 %v1315
    %v3898 = vpop.f32.mrb[0].mxu0
    %v3899 = vadd.f32 %v3802, %v3898
    %v3900 = vpop.f32.mrb[0].mxu0
    %v3901 = vpop.f32.mrb[0].mxu0
    %v3902 = vadd.f32 %v3805, %v3901
    %v3903 = vpop.f32.mrb[0].mxu0
    %3904 = vmatprep.mubr.bf16.mxu0 %v1340
    %3905 = vmatmul.mubr.bf16.gmra.mrb[0].mxu0 %v1339
    %v3906 = vpop.f32.mrb[0].mxu0
    %v3907 = vadd.f32 %v3810, %v3906
    %v3908 = vpop.f32.mrb[0].mxu0
    %v3909 = vpop.f32.mrb[0].mxu0
    %v3910 = vadd.f32 %v3813, %v3909
    %v3911 = vpop.f32.mrb[0].mxu0
    %3912 = vmatprep.mubr.bf16.mxu0 %v1364
    %3913 = vmatmul.mubr.bf16.gmra.mrb[0].mxu0 %v1363
    %v3914 = vpop.f32.mrb[0].mxu0
    %v3915 = vadd.f32 %v3818, %v3914
    %v3916 = vpop.f32.mrb[0].mxu0
    %v3917 = vpop.f32.mrb[0].mxu0
    %v3918 = vadd.f32 %v3821, %v3917
    %v3919 = vpop.f32.mrb[0].mxu0
    %3920 = vmatprep.mubr.bf16.mxu0 %v1388
    %3921 = vmatmul.mubr.bf16.gmra.mrb[0].mxu0 %v1387
    %v3922 = vpop.f32.mrb[0].mxu0
    %v3923 = vadd.f32 %v3826, %v3922
    %v3924 = vpop.f32.mrb[0].mxu0
    %v3925 = vpop.f32.mrb[0].mxu0
    %v3926 = vadd.f32 %v3829, %v3925
    %v3927 = vpop.f32.mrb[0].mxu0
    %3928 = vmatprep.mubr.bf16.mxu0 %v1412
    %3929 = vmatmul.mubr.bf16.gmra.mrb[0].mxu0 %v1411
    %v3930 = vpop.f32.mrb[0].mxu0
    %v3931 = vadd.f32 %v3834, %v3930
    %v3932 = vpop.f32.mrb[0].mxu0
    %v3933 = vpop.f32.mrb[0].mxu0
    %v3934 = vadd.f32 %v3837, %v3933
    %v3935 = vpop.f32.mrb[0].mxu0
    %3936 = vmatprep.mubr.bf16.mxu0 %v1436
    %3937 = vmatmul.mubr.bf16.gmra.mrb[0].mxu0 %v1435
    %v3938 = vpop.f32.mrb[0].mxu0
    %v3939 = vadd.f32 %v3842, %v3938
    %v3940 = vpop.f32.mrb[0].mxu0
    %v3941 = vpop.f32.mrb[0].mxu0
    %v3942 = vadd.f32 %v3845, %v3941
    %v3943 = vpop.f32.mrb[0].mxu0
    %3944 = vdwg.mxu0
    %v3945 = vmax.f32 %v3883, 0.0
    %v3946 = vmax.f32 %v3886, 0.0
    %v3947 = vmax.f32 %v3891, 0.0
    %v3948 = vmax.f32 %v3894, 0.0
    %v3949 = vmax.f32 %v3899, 0.0
    %v3950 = vmax.f32 %v3902, 0.0
    %v3951 = vmax.f32 %v3907, 0.0
    %v3952 = vmax.f32 %v3910, 0.0
    %v3953 = vmax.f32 %v3915, 0.0
    %v3954 = vmax.f32 %v3918, 0.0
    %v3955 = vmax.f32 %v3923, 0.0
    %v3956 = vmax.f32 %v3926, 0.0
    %v3957 = vmax.f32 %v3931, 0.0
    %v3958 = vmax.f32 %v3934, 0.0
    %v3959 = vmax.f32 %v3939, 0.0
    %v3960 = vmax.f32 %v3942, 0.0
    %v3961 = vpack.c.bf16 %v3946, %v3945
    %v3962 = vpack.c.bf16 %v3948, %v3947
    %v3963 = vpack.c.bf16 %v3950, %v3949
    %v3964 = vpack.c.bf16 %v3952, %v3951
    %v3965 = vpack.c.bf16 %v3954, %v3953
    %v3966 = vpack.c.bf16 %v3956, %v3955
    %v3967 = vpack.c.bf16 %v3958, %v3957
    %v3968 = vpack.c.bf16 %v3960, %v3959
    %v3969 = vld [vmem:[#allocation7] sm:$0xf]
    %v3970 = vld [vmem:[#allocation7 + $0x4] sm:$0xf]
    %v3971 = vld [vmem:[#allocation7 + $0x8] sm:$0xf]
    %v3972 = vld [vmem:[#allocation7 + $0xc] sm:$0xf]
    %v3973 = vld [vmem:[#allocation7 + $0x10] sm:$0xf]
    %v3974 = vld [vmem:[#allocation7 + $0x14] sm:$0xf]
    %v3975 = vld [vmem:[#allocation7 + $0x18] sm:$0xf]
    %v3976 = vld [vmem:[#allocation7 + $0x1c] sm:$0xf]
    %v3977 = vld [vmem:[#allocation7 + $0x20] sm:$0xf]
    %v3978 = vld [vmem:[#allocation7 + $0x24] sm:$0xf]
    %v3979 = vld [vmem:[#allocation7 + $0x28] sm:$0xf]
    %v3980 = vld [vmem:[#allocation7 + $0x2c] sm:$0xf]
    %v3981 = vld [vmem:[#allocation7 + $0x30] sm:$0xf]
    %v3982 = vld [vmem:[#allocation7 + $0x34] sm:$0xf]
    %v3983 = vld [vmem:[#allocation7 + $0x38] sm:$0xf]
    %v3984 = vld [vmem:[#allocation7 + $0x3c] sm:$0xf]
    %v4001 = vunpack.c.l.b16 %v3969
    %v4002 = vunpack.c.l.b16 %v3970
    %v4003 = vunpack.c.l.b16 %v3971
    %v4004 = vunpack.c.l.b16 %v3972
    %v4005 = vunpack.c.l.b16 %v3973
    %v4006 = vunpack.c.l.b16 %v3974
    %v4007 = vunpack.c.l.b16 %v3975
    %v4008 = vunpack.c.l.b16 %v3976
    %v4009 = vunpack.c.l.b16 %v3977
    %v4010 = vunpack.c.l.b16 %v3978
    %v4011 = vunpack.c.l.b16 %v3979
    %v4012 = vunpack.c.l.b16 %v3980
    %v4013 = vunpack.c.l.b16 %v3981
    %v4014 = vunpack.c.l.b16 %v3982
    %v4015 = vunpack.c.l.b16 %v3983
    %v4016 = vunpack.c.l.b16 %v3984
    %v4017 = vpack.c.b16 %v4002, %v4001
    %v4018 = vpack.c.b16 %v4004, %v4003
    %v4019 = vpack.c.b16 %v4006, %v4005
    %v4020 = vpack.c.b16 %v4008, %v4007
    %v4021 = vpack.c.b16 %v4010, %v4009
    %v4022 = vpack.c.b16 %v4012, %v4011
    %v4023 = vpack.c.b16 %v4014, %v4013
    %v4024 = vpack.c.b16 %v4016, %v4015
    %4033 = vmatprep.subr.bf16.mxu0 0
    %4034 = vmatpush1.bf16.msra.mxu0 %v4017
    %4035 = vmatprep.subr.bf16.mxu0 0
    %4036 = vmatpush1.bf16.msra.mxu0 %v4018
    %4037 = vmatprep.subr.bf16.mxu0 0
    %4038 = vmatpush1.bf16.msra.mxu0 %v4019
    %4039 = vmatprep.subr.bf16.mxu0 0
    %4040 = vmatpush1.bf16.msra.mxu0 %v4020
    %4041 = vmatprep.subr.bf16.mxu0 0
    %4042 = vmatpush1.bf16.msra.mxu0 %v4021
    %4043 = vmatprep.subr.bf16.mxu0 0
    %4044 = vmatpush1.bf16.msra.mxu0 %v4022
    %4045 = vmatprep.subr.bf16.mxu0 0
    %4046 = vmatpush1.bf16.msra.mxu0 %v4023
    %4047 = vmatprep.subr.bf16.mxu0 0
    %4048 = vmatpush1.bf16.msra.mxu0 %v4024
    %4049 = vmatprep.subr.bf16.mxu0 0
    %4050 = vmatpush1.bf16.msra.mxu0 0
    %4051 = vmatprep.subr.bf16.mxu0 0
    %4052 = vmatpush1.bf16.msra.mxu0 0
    %4053 = vmatprep.subr.bf16.mxu0 0
    %4054 = vmatpush1.bf16.msra.mxu0 0
    %4055 = vmatprep.subr.bf16.mxu0 0
    %4056 = vmatpush1.bf16.msra.mxu0 0
    %4057 = vmatprep.subr.bf16.mxu0 0
    %4058 = vmatpush1.bf16.msra.mxu0 0
    %4059 = vmatprep.subr.bf16.mxu0 0
    %4060 = vmatpush1.bf16.msra.mxu0 0
    %4061 = vmatprep.subr.bf16.mxu0 0
    %4062 = vmatpush1.bf16.msra.mxu0 0
    %4063 = vmatprep.subr.bf16.mxu0 0
    %4064 = vmatpush1.bf16.msra.mxu0 0
    %4065 = vmatprep.mubr.bf16.mxu0 0
    %4066 = vmatmul.mubr.bf16.gmra.mrb[0].mxu0 %v3961
    %v4067 = vpop.f32.mrb[0].mxu0
    %v4068 = vadd.f32 0.0, %v4067
    %v4069 = vpop.f32.mrb[0].mxu0
    %v4070 = vpop.f32.mrb[0].mxu0
    %v4071 = vadd.f32 0.0, %v4070
    %v4072 = vpop.f32.mrb[0].mxu0
    %4073 = vmatprep.mubr.bf16.mxu0 0
    %4074 = vmatmul.mubr.bf16.gmra.mrb[0].mxu0 %v3962
    %v4075 = vpop.f32.mrb[0].mxu0
    %v4076 = vadd.f32 0.0, %v4075
    %v4077 = vpop.f32.mrb[0].mxu0
    %v4078 = vpop.f32.mrb[0].mxu0
    %v4079 = vadd.f32 0.0, %v4078
    %v4080 = vpop.f32.mrb[0].mxu0
    %4081 = vmatprep.mubr.bf16.mxu0 0
    %4082 = vmatmul.mubr.bf16.gmra.mrb[0].mxu0 %v3963
    %v4083 = vpop.f32.mrb[0].mxu0
    %v4084 = vadd.f32 0.0, %v4083
    %v4085 = vpop.f32.mrb[0].mxu0
    %v4086 = vpop.f32.mrb[0].mxu0
    %v4087 = vadd.f32 0.0, %v4086
    %v4088 = vpop.f32.mrb[0].mxu0
    %4089 = vmatprep.mubr.bf16.mxu0 0
    %4090 = vmatmul.mubr.bf16.gmra.mrb[0].mxu0 %v3964
    %v4091 = vpop.f32.mrb[0].mxu0
    %v4092 = vadd.f32 0.0, %v4091
    %v4093 = vpop.f32.mrb[0].mxu0
    %v4094 = vpop.f32.mrb[0].mxu0
    %v4095 = vadd.f32 0.0, %v4094
    %v4096 = vpop.f32.mrb[0].mxu0
    %4097 = vmatprep.mubr.bf16.mxu0 0
    %4098 = vmatmul.mubr.bf16.gmra.mrb[0].mxu0 %v3965
    %v4099 = vpop.f32.mrb[0].mxu0
    %v4100 = vadd.f32 0.0, %v4099
    %v4101 = vpop.f32.mrb[0].mxu0
    %v4102 = vpop.f32.mrb[0].mxu0
    %v4103 = vadd.f32 0.0, %v4102
    %v4104 = vpop.f32.mrb[0].mxu0
    %4105 = vmatprep.mubr.bf16.mxu0 0
    %4106 = vmatmul.mubr.bf16.gmra.mrb[0].mxu0 %v3966
    %v4107 = vpop.f32.mrb[0].mxu0
    %v4108 = vadd.f32 0.0, %v4107
    %v4109 = vpop.f32.mrb[0].mxu0
    %v4110 = vpop.f32.mrb[0].mxu0
    %v4111 = vadd.f32 0.0, %v4110
    %v4112 = vpop.f32.mrb[0].mxu0
    %4113 = vmatprep.mubr.bf16.mxu0 0
    %4114 = vmatmul.mubr.bf16.gmra.mrb[0].mxu0 %v3967
    %v4115 = vpop.f32.mrb[0].mxu0
    %v4116 = vadd.f32 0.0, %v4115
    %v4117 = vpop.f32.mrb[0].mxu0
    %v4118 = vpop.f32.mrb[0].mxu0
    %v4119 = vadd.f32 0.0, %v4118
    %v4120 = vpop.f32.mrb[0].mxu0
    %4121 = vmatprep.mubr.bf16.mxu0 0
    %4122 = vmatmul.mubr.bf16.gmra.mrb[0].mxu0 %v3968
    %v4123 = vpop.f32.mrb[0].mxu0
    %v4124 = vadd.f32 0.0, %v4123
    %v4125 = vpop.f32.mrb[0].mxu0
    %v4126 = vpop.f32.mrb[0].mxu0
    %v4127 = vadd.f32 0.0, %v4126
    %v4128 = vpop.f32.mrb[0].mxu0
    %4129 = vdwg.mxu0
    %v4130 = vmax.f32 %v4068, 0.0
    %v4131 = vmax.f32 %v4071, 0.0
    %v4132 = vmax.f32 %v4076, 0.0
    %v4133 = vmax.f32 %v4079, 0.0
    %v4134 = vmax.f32 %v4084, 0.0
    %v4135 = vmax.f32 %v4087, 0.0
    %v4136 = vmax.f32 %v4092, 0.0
    %v4137 = vmax.f32 %v4095, 0.0
    %v4138 = vmax.f32 %v4100, 0.0
    %v4139 = vmax.f32 %v4103, 0.0
    %v4140 = vmax.f32 %v4108, 0.0
    %v4141 = vmax.f32 %v4111, 0.0
    %v4142 = vmax.f32 %v4116, 0.0
    %v4143 = vmax.f32 %v4119, 0.0
    %v4144 = vmax.f32 %v4124, 0.0
    %v4145 = vmax.f32 %v4127, 0.0
    %v4146 = vpack.c.bf16 %v4131, %v4130
    %v4147 = vpack.c.bf16 %v4133, %v4132
    %v4148 = vpack.c.bf16 %v4135, %v4134
    %v4149 = vpack.c.bf16 %v4137, %v4136
    %v4150 = vpack.c.bf16 %v4139, %v4138
    %v4151 = vpack.c.bf16 %v4141, %v4140
    %v4152 = vpack.c.bf16 %v4143, %v4142
    %v4153 = vpack.c.bf16 %v4145, %v4144
    %v4154 = vld [vmem:[#allocation8] sm:$0xf]
    %v4155 = vld [vmem:[#allocation8 + $0x4] sm:$0xf]
    %v4156 = vld [vmem:[#allocation8 + $0x8] sm:$0xf]
    %v4157 = vld [vmem:[#allocation8 + $0xc] sm:$0xf]
    %v4158 = vld [vmem:[#allocation8 + $0x10] sm:$0xf]
    %v4159 = vld [vmem:[#allocation8 + $0x14] sm:$0xf]
    %v4160 = vld [vmem:[#allocation8 + $0x18] sm:$0xf]
    %v4161 = vld [vmem:[#allocation8 + $0x1c] sm:$0xf]
    %v4162 = vld [vmem:[#allocation8 + $0x20] sm:$0xf]
    %v4163 = vld [vmem:[#allocation8 + $0x24] sm:$0xf]
    %v4164 = vld [vmem:[#allocation8 + $0x28] sm:$0xf]
    %v4165 = vld [vmem:[#allocation8 + $0x2c] sm:$0xf]
    %v4166 = vld [vmem:[#allocation8 + $0x30] sm:$0xf]
    %v4167 = vld [vmem:[#allocation8 + $0x34] sm:$0xf]
    %v4168 = vld [vmem:[#allocation8 + $0x38] sm:$0xf]
    %v4169 = vld [vmem:[#allocation8 + $0x3c] sm:$0xf]
    %v4186 = vunpack.c.l.b16 %v4154
    %v4187 = vunpack.c.l.b16 %v4155
    %v4188 = vunpack.c.l.b16 %v4156
    %v4189 = vunpack.c.l.b16 %v4157
    %v4190 = vunpack.c.l.b16 %v4158
    %v4191 = vunpack.c.l.b16 %v4159
    %v4192 = vunpack.c.l.b16 %v4160
    %v4193 = vunpack.c.l.b16 %v4161
    %v4194 = vunpack.c.l.b16 %v4162
    %v4195 = vunpack.c.l.b16 %v4163
    %v4196 = vunpack.c.l.b16 %v4164
    %v4197 = vunpack.c.l.b16 %v4165
    %v4198 = vunpack.c.l.b16 %v4166
    %v4199 = vunpack.c.l.b16 %v4167
    %v4200 = vunpack.c.l.b16 %v4168
    %v4201 = vunpack.c.l.b16 %v4169
    %v4202 = vpack.c.b16 %v4187, %v4186
    %v4203 = vpack.c.b16 %v4189, %v4188
    %v4204 = vpack.c.b16 %v4191, %v4190
    %v4205 = vpack.c.b16 %v4193, %v4192
    %v4206 = vpack.c.b16 %v4195, %v4194
    %v4207 = vpack.c.b16 %v4197, %v4196
    %v4208 = vpack.c.b16 %v4199, %v4198
    %v4209 = vpack.c.b16 %v4201, %v4200
    %4218 = vmatprep.subr.bf16.mxu0 0
    %4219 = vmatpush1.bf16.msra.mxu0 %v4202
    %4220 = vmatprep.subr.bf16.mxu0 0
    %4221 = vmatpush1.bf16.msra.mxu0 %v4203
    %4222 = vmatprep.subr.bf16.mxu0 0
    %4223 = vmatpush1.bf16.msra.mxu0 %v4204
    %4224 = vmatprep.subr.bf16.mxu0 0
    %4225 = vmatpush1.bf16.msra.mxu0 %v4205
    %4226 = vmatprep.subr.bf16.mxu0 0
    %4227 = vmatpush1.bf16.msra.mxu0 %v4206
    %4228 = vmatprep.subr.bf16.mxu0 0
    %4229 = vmatpush1.bf16.msra.mxu0 %v4207
    %4230 = vmatprep.subr.bf16.mxu0 0
    %4231 = vmatpush1.bf16.msra.mxu0 %v4208
    %4232 = vmatprep.subr.bf16.mxu0 0
    %4233 = vmatpush1.bf16.msra.mxu0 %v4209
    %4234 = vmatprep.subr.bf16.mxu0 0
    %4235 = vmatpush1.bf16.msra.mxu0 0
    %4236 = vmatprep.subr.bf16.mxu0 0
    %4237 = vmatpush1.bf16.msra.mxu0 0
    %4238 = vmatprep.subr.bf16.mxu0 0
    %4239 = vmatpush1.bf16.msra.mxu0 0
    %4240 = vmatprep.subr.bf16.mxu0 0
    %4241 = vmatpush1.bf16.msra.mxu0 0
    %4242 = vmatprep.subr.bf16.mxu0 0
    %4243 = vmatpush1.bf16.msra.mxu0 0
    %4244 = vmatprep.subr.bf16.mxu0 0
    %4245 = vmatpush1.bf16.msra.mxu0 0
    %4246 = vmatprep.subr.bf16.mxu0 0
    %4247 = vmatpush1.bf16.msra.mxu0 0
    %4248 = vmatprep.subr.bf16.mxu0 0
    %4249 = vmatpush1.bf16.msra.mxu0 0
    %4250 = vmatprep.mubr.bf16.mxu0 0
    %4251 = vmatmul.mubr.bf16.gmra.mrb[0].mxu0 %v4146
    %v4252 = vpop.f32.mrb[0].mxu0
    %v4253 = vadd.f32 0.0, %v4252
    %v4254 = vpop.f32.mrb[0].mxu0
    %v4255 = vpop.f32.mrb[0].mxu0
    %v4256 = vadd.f32 0.0, %v4255
    %v4257 = vpop.f32.mrb[0].mxu0
    %4258 = vmatprep.mubr.bf16.mxu0 0
    %4259 = vmatmul.mubr.bf16.gmra.mrb[0].mxu0 %v4147
    %v4260 = vpop.f32.mrb[0].mxu0
    %v4261 = vadd.f32 0.0, %v4260
    %v4262 = vpop.f32.mrb[0].mxu0
    %v4263 = vpop.f32.mrb[0].mxu0
    %v4264 = vadd.f32 0.0, %v4263
    %v4265 = vpop.f32.mrb[0].mxu0
    %4266 = vmatprep.mubr.bf16.mxu0 0
    %4267 = vmatmul.mubr.bf16.gmra.mrb[0].mxu0 %v4148
    %v4268 = vpop.f32.mrb[0].mxu0
    %v4269 = vadd.f32 0.0, %v4268
    %v4270 = vpop.f32.mrb[0].mxu0
    %v4271 = vpop.f32.mrb[0].mxu0
    %v4272 = vadd.f32 0.0, %v4271
    %v4273 = vpop.f32.mrb[0].mxu0
    %4274 = vmatprep.mubr.bf16.mxu0 0
    %4275 = vmatmul.mubr.bf16.gmra.mrb[0].mxu0 %v4149
    %v4276 = vpop.f32.mrb[0].mxu0
    %v4277 = vadd.f32 0.0, %v4276
    %v4278 = vpop.f32.mrb[0].mxu0
    %v4279 = vpop.f32.mrb[0].mxu0
    %v4280 = vadd.f32 0.0, %v4279
    %v4281 = vpop.f32.mrb[0].mxu0
    %4282 = vmatprep.mubr.bf16.mxu0 0
    %4283 = vmatmul.mubr.bf16.gmra.mrb[0].mxu0 %v4150
    %v4284 = vpop.f32.mrb[0].mxu0
    %v4285 = vadd.f32 0.0, %v4284
    %v4286 = vpop.f32.mrb[0].mxu0
    %v4287 = vpop.f32.mrb[0].mxu0
    %v4288 = vadd.f32 0.0, %v4287
    %v4289 = vpop.f32.mrb[0].mxu0
    %4290 = vmatprep.mubr.bf16.mxu0 0
    %4291 = vmatmul.mubr.bf16.gmra.mrb[0].mxu0 %v4151
    %v4292 = vpop.f32.mrb[0].mxu0
    %v4293 = vadd.f32 0.0, %v4292
    %v4294 = vpop.f32.mrb[0].mxu0
    %v4295 = vpop.f32.mrb[0].mxu0
    %v4296 = vadd.f32 0.0, %v4295
    %v4297 = vpop.f32.mrb[0].mxu0
    %4298 = vmatprep.mubr.bf16.mxu0 0
    %4299 = vmatmul.mubr.bf16.gmra.mrb[0].mxu0 %v4152
    %v4300 = vpop.f32.mrb[0].mxu0
    %v4301 = vadd.f32 0.0, %v4300
    %v4302 = vpop.f32.mrb[0].mxu0
    %v4303 = vpop.f32.mrb[0].mxu0
    %v4304 = vadd.f32 0.0, %v4303
    %v4305 = vpop.f32.mrb[0].mxu0
    %4306 = vmatprep.mubr.bf16.mxu0 0
    %4307 = vmatmul.mubr.bf16.gmra.mrb[0].mxu0 %v4153
    %v4308 = vpop.f32.mrb[0].mxu0
    %v4309 = vadd.f32 0.0, %v4308
    %v4310 = vpop.f32.mrb[0].mxu0
    %v4311 = vpop.f32.mrb[0].mxu0
    %v4312 = vadd.f32 0.0, %v4311
    %v4313 = vpop.f32.mrb[0].mxu0
    %4314 = vdwg.mxu0
    %v4315 = vmax.f32 %v4253, 0.0
    %v4316 = vmax.f32 %v4256, 0.0
    %v4317 = vmax.f32 %v4261, 0.0
    %v4318 = vmax.f32 %v4264, 0.0
    %v4319 = vmax.f32 %v4269, 0.0
    %v4320 = vmax.f32 %v4272, 0.0
    %v4321 = vmax.f32 %v4277, 0.0
    %v4322 = vmax.f32 %v4280, 0.0
    %v4323 = vmax.f32 %v4285, 0.0
    %v4324 = vmax.f32 %v4288, 0.0
    %v4325 = vmax.f32 %v4293, 0.0
    %v4326 = vmax.f32 %v4296, 0.0
    %v4327 = vmax.f32 %v4301, 0.0
    %v4328 = vmax.f32 %v4304, 0.0
    %v4329 = vmax.f32 %v4309, 0.0
    %v4330 = vmax.f32 %v4312, 0.0
    %v4331 = vpack.c.bf16 %v4316, %v4315
    %v4332 = vpack.c.bf16 %v4318, %v4317
    %v4333 = vpack.c.bf16 %v4320, %v4319
    %v4334 = vpack.c.bf16 %v4322, %v4321
    %v4335 = vpack.c.bf16 %v4324, %v4323
    %v4336 = vpack.c.bf16 %v4326, %v4325
    %v4337 = vpack.c.bf16 %v4328, %v4327
    %v4338 = vpack.c.bf16 %v4330, %v4329
    %v4339 = vld [vmem:[#allocation10] sm:$0xf]
    %v4340 = vld [vmem:[#allocation10 + $0x4] sm:$0xf]
    %v4341 = vld [vmem:[#allocation10 + $0x8] sm:$0xf]
    %v4342 = vld [vmem:[#allocation10 + $0xc] sm:$0xf]
    %v4343 = vld [vmem:[#allocation10 + $0x10] sm:$0xf]
    %v4344 = vld [vmem:[#allocation10 + $0x14] sm:$0xf]
    %v4345 = vld [vmem:[#allocation10 + $0x18] sm:$0xf]
    %v4346 = vld [vmem:[#allocation10 + $0x1c] sm:$0xf]
    %v4347 = vld [vmem:[#allocation10 + $0x20] sm:$0xf]
    %v4348 = vld [vmem:[#allocation10 + $0x24] sm:$0xf]
    %v4349 = vld [vmem:[#allocation10 + $0x28] sm:$0xf]
    %v4350 = vld [vmem:[#allocation10 + $0x2c] sm:$0xf]
    %v4351 = vld [vmem:[#allocation10 + $0x30] sm:$0xf]
    %v4352 = vld [vmem:[#allocation10 + $0x34] sm:$0xf]
    %v4353 = vld [vmem:[#allocation10 + $0x38] sm:$0xf]
    %v4354 = vld [vmem:[#allocation10 + $0x3c] sm:$0xf]
    %v4371 = vunpack.c.l.b16 %v4339
    %v4372 = vunpack.c.l.b16 %v4340
    %v4373 = vunpack.c.l.b16 %v4341
    %v4374 = vunpack.c.l.b16 %v4342
    %v4375 = vunpack.c.l.b16 %v4343
    %v4376 = vunpack.c.l.b16 %v4344
    %v4377 = vunpack.c.l.b16 %v4345
    %v4378 = vunpack.c.l.b16 %v4346
    %v4379 = vunpack.c.l.b16 %v4347
    %v4380 = vunpack.c.l.b16 %v4348
    %v4381 = vunpack.c.l.b16 %v4349
    %v4382 = vunpack.c.l.b16 %v4350
    %v4383 = vunpack.c.l.b16 %v4351
    %v4384 = vunpack.c.l.b16 %v4352
    %v4385 = vunpack.c.l.b16 %v4353
    %v4386 = vunpack.c.l.b16 %v4354
    %v4387 = vpack.c.b16 %v4372, %v4371
    %v4388 = vpack.c.b16 %v4374, %v4373
    %v4389 = vpack.c.b16 %v4376, %v4375
    %v4390 = vpack.c.b16 %v4378, %v4377
    %v4391 = vpack.c.b16 %v4380, %v4379
    %v4392 = vpack.c.b16 %v4382, %v4381
    %v4393 = vpack.c.b16 %v4384, %v4383
    %v4394 = vpack.c.b16 %v4386, %v4385
    %4403 = vmatprep.subr.bf16.mxu0 0
    %4404 = vmatpush1.bf16.msra.mxu0 %v4387
    %4405 = vmatprep.subr.bf16.mxu0 0
    %4406 = vmatpush1.bf16.msra.mxu0 %v4388
    %4407 = vmatprep.subr.bf16.mxu0 0
    %4408 = vmatpush1.bf16.msra.mxu0 %v4389
    %4409 = vmatprep.subr.bf16.mxu0 0
    %4410 = vmatpush1.bf16.msra.mxu0 %v4390
    %4411 = vmatprep.subr.bf16.mxu0 0
    %4412 = vmatpush1.bf16.msra.mxu0 %v4391
    %4413 = vmatprep.subr.bf16.mxu0 0
    %4414 = vmatpush1.bf16.msra.mxu0 %v4392
    %4415 = vmatprep.subr.bf16.mxu0 0
    %4416 = vmatpush1.bf16.msra.mxu0 %v4393
    %4417 = vmatprep.subr.bf16.mxu0 0
    %4418 = vmatpush1.bf16.msra.mxu0 %v4394
    %4419 = vmatprep.subr.bf16.mxu0 0
    %4420 = vmatpush1.bf16.msra.mxu0 0
    %4421 = vmatprep.subr.bf16.mxu0 0
    %4422 = vmatpush1.bf16.msra.mxu0 0
    %4423 = vmatprep.subr.bf16.mxu0 0
    %4424 = vmatpush1.bf16.msra.mxu0 0
    %4425 = vmatprep.subr.bf16.mxu0 0
    %4426 = vmatpush1.bf16.msra.mxu0 0
    %4427 = vmatprep.subr.bf16.mxu0 0
    %4428 = vmatpush1.bf16.msra.mxu0 0
    %4429 = vmatprep.subr.bf16.mxu0 0
    %4430 = vmatpush1.bf16.msra.mxu0 0
    %4431 = vmatprep.subr.bf16.mxu0 0
    %4432 = vmatpush1.bf16.msra.mxu0 0
    %4433 = vmatprep.subr.bf16.mxu0 0
    %4434 = vmatpush1.bf16.msra.mxu0 0
    %4435 = vmatprep.mubr.bf16.mxu0 0
    %4436 = vmatmul.mubr.bf16.gmra.mrb[0].mxu0 %v4331
    %v4437 = vpop.f32.mrb[0].mxu0
    %v4438 = vadd.f32 0.0, %v4437
    %v4439 = vpop.f32.mrb[0].mxu0
    %v4440 = vpop.f32.mrb[0].mxu0
    %v4441 = vadd.f32 0.0, %v4440
    %v4442 = vpop.f32.mrb[0].mxu0
    %4443 = vmatprep.mubr.bf16.mxu0 0
    %4444 = vmatmul.mubr.bf16.gmra.mrb[0].mxu0 %v4332
    %v4445 = vpop.f32.mrb[0].mxu0
    %v4446 = vadd.f32 0.0, %v4445
    %v4447 = vpop.f32.mrb[0].mxu0
    %v4448 = vpop.f32.mrb[0].mxu0
    %v4449 = vadd.f32 0.0, %v4448
    %v4450 = vpop.f32.mrb[0].mxu0
    %4451 = vmatprep.mubr.bf16.mxu0 0
    %4452 = vmatmul.mubr.bf16.gmra.mrb[0].mxu0 %v4333
    %v4453 = vpop.f32.mrb[0].mxu0
    %v4454 = vadd.f32 0.0, %v4453
    %v4455 = vpop.f32.mrb[0].mxu0
    %v4456 = vpop.f32.mrb[0].mxu0
    %v4457 = vadd.f32 0.0, %v4456
    %v4458 = vpop.f32.mrb[0].mxu0
    %4459 = vmatprep.mubr.bf16.mxu0 0
    %4460 = vmatmul.mubr.bf16.gmra.mrb[0].mxu0 %v4334
    %v4461 = vpop.f32.mrb[0].mxu0
    %v4462 = vadd.f32 0.0, %v4461
    %v4463 = vpop.f32.mrb[0].mxu0
    %v4464 = vpop.f32.mrb[0].mxu0
    %v4465 = vadd.f32 0.0, %v4464
    %v4466 = vpop.f32.mrb[0].mxu0
    %4467 = vmatprep.mubr.bf16.mxu0 0
    %4468 = vmatmul.mubr.bf16.gmra.mrb[0].mxu0 %v4335
    %v4469 = vpop.f32.mrb[0].mxu0
    %v4470 = vadd.f32 0.0, %v4469
    %v4471 = vpop.f32.mrb[0].mxu0
    %v4472 = vpop.f32.mrb[0].mxu0
    %v4473 = vadd.f32 0.0, %v4472
    %v4474 = vpop.f32.mrb[0].mxu0
    %4475 = vmatprep.mubr.bf16.mxu0 0
    %4476 = vmatmul.mubr.bf16.gmra.mrb[0].mxu0 %v4336
    %v4477 = vpop.f32.mrb[0].mxu0
    %v4478 = vadd.f32 0.0, %v4477
    %v4479 = vpop.f32.mrb[0].mxu0
    %v4480 = vpop.f32.mrb[0].mxu0
    %v4481 = vadd.f32 0.0, %v4480
    %v4482 = vpop.f32.mrb[0].mxu0
    %4483 = vmatprep.mubr.bf16.mxu0 0
    %4484 = vmatmul.mubr.bf16.gmra.mrb[0].mxu0 %v4337
    %v4485 = vpop.f32.mrb[0].mxu0
    %v4486 = vadd.f32 0.0, %v4485
    %v4487 = vpop.f32.mrb[0].mxu0
    %v4488 = vpop.f32.mrb[0].mxu0
    %v4489 = vadd.f32 0.0, %v4488
    %v4490 = vpop.f32.mrb[0].mxu0
    %4491 = vmatprep.mubr.bf16.mxu0 0
    %4492 = vmatmul.mubr.bf16.gmra.mrb[0].mxu0 %v4338
    %v4493 = vpop.f32.mrb[0].mxu0
    %v4494 = vadd.f32 0.0, %v4493
    %v4495 = vpop.f32.mrb[0].mxu0
    %v4496 = vpop.f32.mrb[0].mxu0
    %v4497 = vadd.f32 0.0, %v4496
    %v4498 = vpop.f32.mrb[0].mxu0
    %4499 = vdwg.mxu0
    %v4500 = vmax.f32 %v4438, 0.0
    %v4501 = vmax.f32 %v4441, 0.0
    %v4502 = vmax.f32 %v4446, 0.0
    %v4503 = vmax.f32 %v4449, 0.0
    %v4504 = vmax.f32 %v4454, 0.0
    %v4505 = vmax.f32 %v4457, 0.0
    %v4506 = vmax.f32 %v4462, 0.0
    %v4507 = vmax.f32 %v4465, 0.0
    %v4508 = vmax.f32 %v4470, 0.0
    %v4509 = vmax.f32 %v4473, 0.0
    %v4510 = vmax.f32 %v4478, 0.0
    %v4511 = vmax.f32 %v4481, 0.0
    %v4512 = vmax.f32 %v4486, 0.0
    %v4513 = vmax.f32 %v4489, 0.0
    %v4514 = vmax.f32 %v4494, 0.0
    %v4515 = vmax.f32 %v4497, 0.0
    %v4516 = vld [vmem:[%s5] sm:$0x1]
    %v4517 = vunpack.c.l.bf16 %v4516
    %v4518 = vlaneseq
    %v4519 = vshrl.u32 %v4518, 7
    %v4520 = vsub.s32 0, %v4519
    %v4521 = vrot.slane %v4517, %v4520
    %v4522 = vmul.f32 %v4500, %v4521
    %v4523 = vmul.f32 %v4501, %v4521
    %v4524 = vmul.f32 %v4502, %v4521
    %v4525 = vmul.f32 %v4503, %v4521
    %v4526 = vmul.f32 %v4504, %v4521
    %v4527 = vmul.f32 %v4505, %v4521
    %v4528 = vmul.f32 %v4506, %v4521
    %v4529 = vmul.f32 %v4507, %v4521
    %v4530 = vmul.f32 %v4508, %v4521
    %v4531 = vmul.f32 %v4509, %v4521
    %v4532 = vmul.f32 %v4510, %v4521
    %v4533 = vmul.f32 %v4511, %v4521
    %v4534 = vmul.f32 %v4512, %v4521
    %v4535 = vmul.f32 %v4513, %v4521
    %v4536 = vmul.f32 %v4514, %v4521
    %v4537 = vmul.f32 %v4515, %v4521
    %4538 = vadd.xlane.f32.xlu0 %v4522
    %v4539 = vpop.xlane.xlu0 %4538
    %4540 = vadd.xlane.f32.xlu0 %v4523
    %v4541 = vpop.xlane.xlu0 %4540
    %4542 = vadd.xlane.f32.xlu0 %v4524
    %v4543 = vpop.xlane.xlu0 %4542
    %4544 = vadd.xlane.f32.xlu0 %v4525
    %v4545 = vpop.xlane.xlu0 %4544
    %4546 = vadd.xlane.f32.xlu0 %v4526
    %v4547 = vpop.xlane.xlu0 %4546
    %4548 = vadd.xlane.f32.xlu0 %v4527
    %v4549 = vpop.xlane.xlu0 %4548
    %4550 = vadd.xlane.f32.xlu0 %v4528
    %v4551 = vpop.xlane.xlu0 %4550
    %4552 = vadd.xlane.f32.xlu0 %v4529
    %v4553 = vpop.xlane.xlu0 %4552
    %4554 = vadd.xlane.f32.xlu0 %v4530
    %v4555 = vpop.xlane.xlu0 %4554
    %4556 = vadd.xlane.f32.xlu0 %v4531
    %v4557 = vpop.xlane.xlu0 %4556
    %4558 = vadd.xlane.f32.xlu0 %v4532
    %v4559 = vpop.xlane.xlu0 %4558
    %4560 = vadd.xlane.f32.xlu0 %v4533
    %v4561 = vpop.xlane.xlu0 %4560
    %4562 = vadd.xlane.f32.xlu0 %v4534
    %v4563 = vpop.xlane.xlu0 %4562
    %4564 = vadd.xlane.f32.xlu0 %v4535
    %v4565 = vpop.xlane.xlu0 %4564
    %4566 = vadd.xlane.f32.xlu0 %v4536
    %v4567 = vpop.xlane.xlu0 %4566
    %4568 = vadd.xlane.f32.xlu0 %v4537
    %v4569 = vpop.xlane.xlu0 %4568
    %v4586 = vlaneseq
    %v4587 = vand.u32 %v4586, 127
    %v4588 = vlaneseq
    %v4589 = vshrl.u32 %v4588, 7
    %v4590 = vsub.s32 %v4587, %v4589
    %v4591 = vrot.slane %v4539, %v4590
    %v4592 = vadd.s32 %v4587, 4294967288
    %v4593 = vlaneseq
    %v4594 = vshrl.u32 %v4593, 7
    %v4595 = vsub.s32 %v4592, %v4594
    %v4596 = vrot.slane %v4541, %v4595
    %vm4597 = vcmask 130112
    %v4598 = vsel %vm4597, %v4596, %v4591
    %v4599 = vadd.s32 %v4587, 4294967280
    %v4600 = vlaneseq
    %v4601 = vshrl.u32 %v4600, 7
    %v4602 = vsub.s32 %v4599, %v4601
    %v4603 = vrot.slane %v4543, %v4602
    %vm4604 = vcmask 195712
    %v4605 = vsel %vm4604, %v4603, %v4598
    %v4606 = vadd.s32 %v4587, 4294967272
    %v4607 = vlaneseq
    %v4608 = vshrl.u32 %v4607, 7
    %v4609 = vsub.s32 %v4606, %v4608
    %v4610 = vrot.slane %v4545, %v4609
    %vm4611 = vcmask 261312
    %v4612 = vsel %vm4611, %v4610, %v4605
    %v4613 = vadd.s32 %v4587, 4294967264
    %v4614 = vlaneseq
    %v4615 = vshrl.u32 %v4614, 7
    %v4616 = vsub.s32 %v4613, %v4615
    %v4617 = vrot.slane %v4547, %v4616
    %vm4618 = vcmask 326912
    %v4619 = vsel %vm4618, %v4617, %v4612
    %v4620 = vadd.s32 %v4587, 4294967256
    %v4621 = vlaneseq
    %v4622 = vshrl.u32 %v4621, 7
    %v4623 = vsub.s32 %v4620, %v4622
    %v4624 = vrot.slane %v4549, %v4623
    %vm4625 = vcmask 392512
    %v4626 = vsel %vm4625, %v4624, %v4619
    %v4627 = vadd.s32 %v4587, 4294967248
    %v4628 = vlaneseq
    %v4629 = vshrl.u32 %v4628, 7
    %v4630 = vsub.s32 %v4627, %v4629
    %v4631 = vrot.slane %v4551, %v4630
    %vm4632 = vcmask 458112
    %v4633 = vsel %vm4632, %v4631, %v4626
    %v4634 = vadd.s32 %v4587, 4294967240
    %v4635 = vlaneseq
    %v4636 = vshrl.u32 %v4635, 7
    %v4637 = vsub.s32 %v4634, %v4636
    %v4638 = vrot.slane %v4553, %v4637
    %vm4639 = vcmask 523712
    %v4640 = vsel %vm4639, %v4638, %v4633
    %v4641 = vadd.s32 %v4587, 4294967232
    %v4642 = vlaneseq
    %v4643 = vshrl.u32 %v4642, 7
    %v4644 = vsub.s32 %v4641, %v4643
    %v4645 = vrot.slane %v4555, %v4644
    %vm4646 = vcmask 589312
    %v4647 = vsel %vm4646, %v4645, %v4640
    %v4648 = vadd.s32 %v4587, 4294967224
    %v4649 = vlaneseq
    %v4650 = vshrl.u32 %v4649, 7
    %v4651 = vsub.s32 %v4648, %v4650
    %v4652 = vrot.slane %v4557, %v4651
    %vm4653 = vcmask 654912
    %v4654 = vsel %vm4653, %v4652, %v4647
    %v4655 = vadd.s32 %v4587, 4294967216
    %v4656 = vlaneseq
    %v4657 = vshrl.u32 %v4656, 7
    %v4658 = vsub.s32 %v4655, %v4657
    %v4659 = vrot.slane %v4559, %v4658
    %vm4660 = vcmask 720512
    %v4661 = vsel %vm4660, %v4659, %v4654
    %v4662 = vadd.s32 %v4587, 4294967208
    %v4663 = vlaneseq
    %v4664 = vshrl.u32 %v4663, 7
    %v4665 = vsub.s32 %v4662, %v4664
    %v4666 = vrot.slane %v4561, %v4665
    %vm4667 = vcmask 786112
    %v4668 = vsel %vm4667, %v4666, %v4661
    %v4669 = vadd.s32 %v4587, 4294967200
    %v4670 = vlaneseq
    %v4671 = vshrl.u32 %v4670, 7
    %v4672 = vsub.s32 %v4669, %v4671
    %v4673 = vrot.slane %v4563, %v4672
    %vm4674 = vcmask 851712
    %v4675 = vsel %vm4674, %v4673, %v4668
    %v4676 = vadd.s32 %v4587, 4294967192
    %v4677 = vlaneseq
    %v4678 = vshrl.u32 %v4677, 7
    %v4679 = vsub.s32 %v4676, %v4678
    %v4680 = vrot.slane %v4565, %v4679
    %vm4681 = vcmask 917312
    %v4682 = vsel %vm4681, %v4680, %v4675
    %v4683 = vadd.s32 %v4587, 4294967184
    %v4684 = vlaneseq
    %v4685 = vshrl.u32 %v4684, 7
    %v4686 = vsub.s32 %v4683, %v4685
    %v4687 = vrot.slane %v4567, %v4686
    %vm4688 = vcmask 982912
    %v4689 = vsel %vm4688, %v4687, %v4682
    %v4690 = vadd.s32 %v4587, 4294967176
    %v4691 = vlaneseq
    %v4692 = vshrl.u32 %v4691, 7
    %v4693 = vsub.s32 %v4690, %v4692
    %v4694 = vrot.slane %v4569, %v4693
    %vm4695 = vcmask 1048512
    %v4696 = vsel %vm4695, %v4694, %v4689
    %4698 = vst [vmem:[#allocation11] sm:$0x1] %v4696
    // Predicated region
    $region46: #{tpu_custom_call.1} parent=1 // pred_check
      _
    $region47: #{tpu_custom_call.1} parent=1 // pred_check_branch
      %4700 = sbr.rel (0) target = $region49
    $region48: #{tpu_custom_call.1} parent=1 // pred_region
      %s4702 = ssub.s32 16, 16
      %4703 = vsyncadd [#allocation4], %s4702
      %s4705 = sshll.u32 [#allocation11], 4
      %s4706 = int_to_ptr.vmem [resolvable:$true] %s4705
      %4708 = dma.vmem_to_hbm [thread:$0]  %s4706, 16, %s6, [#allocation4]
    $region49: #{tpu_custom_call.1} parent=1 // pred_fallthru
      _
    // Predicated region
    $region50: #{tpu_custom_call.1} parent=1 // pred_check
      _
    $region51: #{tpu_custom_call.1} parent=1 // pred_check_branch
      %4710 = sbr.rel (0) target = $region53
    $region52: #{tpu_custom_call.1} parent=1 // pred_region
      %4711 = dma.done [#allocation4], 16
    $region53: #{tpu_custom_call.1} parent=1 // pred_fallthru
      _
    %4712 = vsyncpa [#allocation3], 1
    %4713 = vsyncpa [#allocation6], 1
    %4714 = vsyncpa [#allocation9], 1
    %4715 = vsyncpa [#allocation4], 1

</llo_original>
